<compile_context>
chip_gen: v5e
topology: v5e:2x2
jax: 0.10.0
libtpu: 0.0.40
codegen_flags: <defaults>
</compile_context>

<pallas_src>
import functools

import jax
import jax.numpy as jnp
import numpy as np
from jax import lax
from jax.experimental import pallas as pl
from jax.experimental.pallas import tpu as pltpu


# -----------------------------------------------------------------------------
# Kernel
# -----------------------------------------------------------------------------
def bottleneck_kernel(x_ref, xt_ref, xb_ref, w1_ref, w2_ref, w3_ref, b_ref,
                      o_ref, *, W, HB, Cp, Pp):
    """One (image, row-band) grid step.  Channel dims are padded to multiples of
    128 so every matmul / store is lane-dense; BN scales are folded into the
    conv weights, only per-channel biases + ReLU stay in-kernel."""
    band = pl.program_id(1)
    nbands = pl.num_programs(1)

    b1 = b_ref[0:1, :Pp]
    b2 = b_ref[1:2, :Pp]
    b3 = b_ref[2:3, :Cp]
    w1 = w1_ref[...]

    # ---- conv1 (1x1, BN1 folded) + bias + ReLU --------------------------------
    h_mid = jnp.dot(x_ref[0].reshape(HB * W, Cp).astype(jnp.bfloat16), w1,
                    preferred_element_type=jnp.float32)
    h_mid = jnp.maximum(h_mid + b1, 0.0).reshape(HB, W, Pp).astype(jnp.bfloat16)

    # 1-row halos (edge rows are clamped duplicates).  conv2's padding=1 zero-pads
    # *h1*, so out-of-image halo rows are zeroed AFTER conv1 + bias + ReLU.
    h_top = jnp.dot(xt_ref[0, 0].astype(jnp.bfloat16), w1,
                    preferred_element_type=jnp.float32)
    h_top = jnp.where(band > 0, jnp.maximum(h_top + b1, 0.0), 0.0)
    h_bot = jnp.dot(xb_ref[0, 0].astype(jnp.bfloat16), w1,
                    preferred_element_type=jnp.float32)
    h_bot = jnp.where(band < nbands - 1, jnp.maximum(h_bot + b1, 0.0), 0.0)

    h1 = jnp.concatenate(
        [h_top.astype(jnp.bfloat16)[None], h_mid, h_bot.astype(jnp.bfloat16)[None]],
        axis=0)                                                  # (HB+2, W, Pp)

    # ---- conv2 (3x3, stride=1, pad=1, BN2 folded) -----------------------------
    # Nine accumulated (HB*W, Pp) x (Pp, Pp) matmuls.  Only the two column-shifted
    # variants of h1 are materialized; the row (dy) shifts are leading-dim slices
    # and the MXU has slack, so splitting K costs nothing.
    zcol = jnp.zeros((HB + 2, 1, Pp), jnp.bfloat16)
    cols = (
        jnp.concatenate([zcol, h1[:, :W - 1, :]], axis=1),       # dx = 0
        h1,                                                      # dx = 1
        jnp.concatenate([h1[:, 1:, :], zcol], axis=1),           # dx = 2
    )
    h2 = jnp.zeros((HB * W, Pp), jnp.float32)
    for dy in range(3):
        for dx in range(3):
            k = dy * 3 + dx
            lhs = cols[dx][dy:dy + HB].reshape(HB * W, Pp)
            h2 = h2 + jnp.dot(lhs, w2_ref[k * Pp:(k + 1) * Pp, :],
                              preferred_element_type=jnp.float32)
    h2 = jnp.maximum(h2 + b2, 0.0)

    # ---- conv3 (1x1, BN3 folded) + bias, residual add + ReLU ------------------
    h3 = jnp.dot(h2.astype(jnp.bfloat16), w3_ref[...],
                 preferred_element_type=jnp.float32) + b3
    res = x_ref[0].reshape(HB * W, Cp)                           # re-read late
    out = jnp.maximum(h3 + res, 0.0)
    o_ref[0] = out.reshape(HB, W, Cp).astype(o_ref.dtype)


# -----------------------------------------------------------------------------
# Host-side preparation / wrappers
# -----------------------------------------------------------------------------
def fold_bn(gamma, beta, mean, var, eps=1e-5):
    scale = gamma / jnp.sqrt(var + eps)
    bias = beta - mean * scale
    return scale.reshape(1, -1), bias.reshape(1, -1)


def _round_up(x, m):
    return (x + m - 1) // m * m


def _pick_band_rows(H, W, Cp):
    """Rows per grid step: big enough to amortize per-step overhead (>= ~512
    matmul rows when possible) but small enough that a double-buffered f32 band
    stays a small fraction of VMEM."""
    budget = 4 << 20
    divs = [d for d in range(1, H + 1) if H % d == 0]
    fits = [d for d in divs if d * W * Cp * 4 <= budget] or [divs[0]]
    enough = [d for d in fits if d * W >= 512]
    return enough[0] if enough else fits[-1]


def prepare_bottleneck(params, inplanes):
    """Fold BN into the conv weights (f32, exact), pad channels to lane multiples
    and cast MXU operands to bf16.  Do this once; reuse across calls."""
    w1, bn1, w2, bn2, w3, bn3 = params
    P = w1.shape[1]
    Cout = w3.shape[1]
    assert Cout == inplanes, "identity residual requires inplanes == planes * 4"

    s1, b1 = fold_bn(*bn1)
    s2, b2 = fold_bn(*bn2)
    s3, b3 = fold_bn(*bn3)
    w1f = w1 * s1                          # (Cin, P)
    w2f = w2 * s2                          # (3, 3, P, P) HWIO, scale along O
    w3f = w3 * s3                          # (P, Cout)

    Pp = _round_up(P, 128)
    Cp = _round_up(inplanes, 128)
    Cmax = max(Pp, Cp)

    w1p = jnp.zeros((Cp, Pp), jnp.float32).at[:inplanes, :P].set(w1f).astype(jnp.bfloat16)
    w2p = jnp.zeros((3, 3, Pp, Pp), jnp.float32).at[:, :, :P, :P].set(w2f)
    w2p = w2p.reshape(9 * Pp, Pp).astype(jnp.bfloat16)          # tap-major (dy, dx, i)
    w3p = jnp.zeros((Pp, Cp), jnp.float32).at[:P, :Cout].set(w3f).astype(jnp.bfloat16)
    bias = jnp.zeros((3, Cmax), jnp.float32)
    bias = bias.at[0, :P].set(b1[0]).at[1, :P].set(b2[0]).at[2, :Cout].set(b3[0])
    return dict(w1=w1p, w2=w2p, w3=w3p, bias=bias,
                Pp=Pp, Cp=Cp, Cmax=Cmax, Cin=inplanes, Cout=Cout)


def bottleneck_forward_nhwc(xp, prep, *, out_dtype=jnp.float32):
    """xp: (N, H, W, Cp) NHWC, channel-padded.  Returns the same padded layout so
    chained Bottleneck blocks can skip the NCHW<->NHWC and pad/slice HBM passes."""
    N, H, W, Cp = xp.shape
    Pp, Cmax = prep["Pp"], prep["Cmax"]
    assert Cp == prep["Cp"]
    # TODO(synk): W not a multiple of 8 (7x7 stage) is correct but sublane-masked.

    HB = _pick_band_rows(H, W, Cp)
    NB = H // HB

    kernel = functools.partial(bottleneck_kernel, W=W, HB=HB, Cp=Cp, Pp=Pp)

    def vmem_limit_bytes(single_buffered_weights):
        band = HB * W * Cp * 4
        halos = 2 * W * Cp * 4
        w_bytes = (Cp * Pp + 9 * Pp * Pp + Pp * Cp) * 2 + 3 * Cmax * 4
        temps = ((HB + 2) * W * Pp * 2 * 8        # h1 + shifted columns (bf16)
                 + HB * W * Pp * 4 * 4            # conv2/conv3 f32 temporaries
                 + HB * W * Cp * 4 * 2)           # residual + output staging
        need = (2 * (2 * band + halos)
                + (1 if single_buffered_weights else 2) * w_bytes
                + temps + (4 << 20))
        try:
            cap = int(pltpu.get_tpu_info().vmem_capacity_bytes)
        except Exception:
            cap = 64 << 20                        # conservative (v7x physical VMEM)
        cap_limit = min(cap - (16 << 20), 100 << 20)
        return int(min(max(need, 16 << 20), cap_limit))

    band_spec = pl.BlockSpec((1, HB, W, Cp), lambda n, b: (n, b, 0, 0))
    top_spec = pl.BlockSpec((1, 1, W, Cp),
                            lambda n, b: (n, jnp.maximum(b * HB - 1, 0), 0, 0))
    bot_spec = pl.BlockSpec((1, 1, W, Cp),
                            lambda n, b: (n, jnp.minimum((b + 1) * HB, H - 1), 0, 0))
    out_spec = pl.BlockSpec((1, HB, W, Cp), lambda n, b: (n, b, 0, 0))

    def const_spec(shape, single):
        r = len(shape)
        def idx(n, b):
            return (0,) * r
        if single:
            # Grid-invariant operand: single buffer (double-buffering buys nothing).
            return pl.BlockSpec(shape, idx, pipeline_mode=pl.Buffered(1))
        return pl.BlockSpec(shape, idx)

    def run(single):
        w_specs = [const_spec((Cp, Pp), single),
                   const_spec((9 * Pp, Pp), single),
                   const_spec((Pp, Cp), single),
                   const_spec((3, Cmax), single)]
        return pl.pallas_call(
            kernel,
            out_shape=jax.ShapeDtypeStruct((N, H, W, Cp), out_dtype),
            grid_spec=pltpu.PrefetchScalarGridSpec(
                num_scalar_prefetch=0,
                grid=(N, NB),
                in_specs=[band_spec, top_spec, bot_spec] + w_specs,
                out_specs=out_spec,
            ),
            compiler_params=pltpu.CompilerParams(
                dimension_semantics=("parallel", "parallel"),
                vmem_limit_bytes=vmem_limit_bytes(single),
            ),
        )(xp, xp, xp, prep["w1"], prep["w2"], prep["w3"], prep["bias"])

    try:
        return run(True)        # single-buffer the grid-invariant weights
    except Exception:
        return run(False)       # fallback if pl.Buffered(1)/pipeline_mode unsupported


def bottleneck_forward(x_nchw, params):
    """External PyTorch-style contract: (N, Cin, H, W) f32 -> (N, Cout, H, W) f32."""
    N, Cin, H, W = x_nchw.shape
    prep = prepare_bottleneck(params, Cin)
    Cp, Cout = prep["Cp"], prep["Cout"]
    xp = jnp.pad(jnp.transpose(x_nchw, (0, 2, 3, 1)),
                 ((0, 0), (0, 0), (0, 0), (0, Cp - Cin)))
    out = bottleneck_forward_nhwc(xp, prep)
    return jnp.transpose(out[..., :Cout], (0, 3, 1, 2))


# -----------------------------------------------------------------------------
# Pure-JAX reference (mirrors the kernel's numerics: BN folded in f32, bf16 MXU
# operands, f32 accumulation / bias / ReLU / residual).
# -----------------------------------------------------------------------------
def reference_forward(x_nchw, params):
    w1, bn1, w2, bn2, w3, bn3 = params
    s1, b1 = fold_bn(*bn1)
    s2, b2 = fold_bn(*bn2)
    s3, b3 = fold_bn(*bn3)
    w1f = (w1 * s1).astype(jnp.bfloat16)
    w2f = (w2 * s2).astype(jnp.bfloat16)
    w3f = (w3 * s3).astype(jnp.bfloat16)
    dn = ('NHWC', 'HWIO', 'NHWC')
    x = jnp.transpose(x_nchw, (0, 2, 3, 1))
    h = lax.conv_general_dilated(x.astype(jnp.bfloat16), w1f[None, None], (1, 1), 'VALID',
                                 dimension_numbers=dn, preferred_element_type=jnp.float32)
    h = jnp.maximum(h + b1[0], 0.0)
    h = lax.conv_general_dilated(h.astype(jnp.bfloat16), w2f, (1, 1), ((1, 1), (1, 1)),
                                 dimension_numbers=dn, preferred_element_type=jnp.float32)
    h = jnp.maximum(h + b2[0], 0.0)
    h = lax.conv_general_dilated(h.astype(jnp.bfloat16), w3f[None, None], (1, 1), 'VALID',
                                 dimension_numbers=dn, preferred_element_type=jnp.float32)
    h = h + b3[0]
    out = jnp.maximum(h + x, 0.0)
    return jnp.transpose(out, (0, 3, 1, 2))


def make_params(key, inplanes, planes):
    expansion = 4
    cout = planes * expansion
    ks = jax.random.split(key, 9)
    w1 = 0.1 * jax.random.normal(ks[0], (inplanes, planes), jnp.float32)       # conv1x1
    w2 = 0.1 * jax.random.normal(ks[1], (3, 3, planes, planes), jnp.float32)   # conv3x3 (HWIO)
    w3 = 0.1 * jax.random.normal(ks[2], (planes, cout), jnp.float32)           # conv1x1

    def bn(kg, kb, km, c):
        gamma = 1.0 + 0.1 * jax.random.normal(kg, (c,), jnp.float32)
        beta = 0.1 * jax.random.normal(kb, (c,), jnp.float32)
        mean = 0.1 * jax.random.normal(km, (c,), jnp.float32)
        var = jnp.ones((c,), jnp.float32) * 0.9 + 0.2 * jax.random.uniform(km, (c,))
        return (gamma, beta, mean, var)

    bn1 = bn(ks[3], ks[4], ks[5], planes)
    bn2 = bn(ks[4], ks[5], ks[6], planes)
    bn3 = bn(ks[6], ks[7], ks[8], cout)
    return (w1, bn1, w2, bn2, w3, bn3)


if __name__ == "__main__":
    key = jax.random.PRNGKey(0)
    kx, kp = jax.random.split(key)

    # Small shapes consistent with Bottleneck(inplanes=16, planes=4, stride=1, downsample=None)
    N, inplanes, planes, H, W = 2, 16, 4, 16, 16
    x = jax.random.normal(kx, (N, inplanes, H, W), jnp.float32)
    params = make_params(kp, inplanes, planes)

    out = bottleneck_forward(x, params)
    out = jax.block_until_ready(out)

    ref = reference_forward(x, params)
    np.testing.assert_allclose(np.asarray(out), np.asarray(ref), rtol=1e-3, atol=1e-3)

    print("KERNEL_OK")
</pallas_src>

<mosaic_0001>
module attributes {stable_mosaic.version = 11 : i64} {
  func.func @bottleneck_kernel(%arg0: i32, %arg1: i32, %arg2: memref<1x16x16x128xf32, #tpu.memory_space<vmem>>, %arg3: memref<1x1x16x128xf32, #tpu.memory_space<vmem>>, %arg4: memref<1x1x16x128xf32, #tpu.memory_space<vmem>>, %arg5: memref<128x128xbf16, #tpu.memory_space<vmem>>, %arg6: memref<1152x128xbf16, #tpu.memory_space<vmem>>, %arg7: memref<128x128xbf16, #tpu.memory_space<vmem>>, %arg8: memref<3x128xf32, #tpu.memory_space<vmem>>, %arg9: memref<1x16x16x128xf32, #tpu.memory_space<vmem>>) attributes {dimension_semantics = [#tpu.dimension_semantics<parallel>, #tpu.dimension_semantics<parallel>], iteration_bounds = array<i64: 2, 1>, scalar_prefetch = 0 : i64, scratch_operands = 0 : i64, tpu.core_type = #tpu.core_type<tc>, window_params = [{transform_indices = @transform_0, window_bounds = array<i64: 1, 16, 16, 128>}, {transform_indices = @transform_1, window_bounds = array<i64: 1, 1, 16, 128>}, {transform_indices = @transform_2, window_bounds = array<i64: 1, 1, 16, 128>}, {pipeline_mode = #tpu.pipeline_mode<synchronous>, transform_indices = @transform_3, window_bounds = array<i64: 128, 128>}, {pipeline_mode = #tpu.pipeline_mode<synchronous>, transform_indices = @transform_4, window_bounds = array<i64: 1152, 128>}, {pipeline_mode = #tpu.pipeline_mode<synchronous>, transform_indices = @transform_5, window_bounds = array<i64: 128, 128>}, {pipeline_mode = #tpu.pipeline_mode<synchronous>, transform_indices = @transform_6, window_bounds = array<i64: 3, 128>}, {transform_indices = @transform_7, window_bounds = array<i64: 1, 16, 16, 128>}]} {
    %c0 = arith.constant 0 : index
    %c0_0 = arith.constant 0 : index
    %0 = vector.load %arg8[%c0, %c0_0] : memref<3x128xf32, #tpu.memory_space<vmem>>, vector<1x128xf32>
    %c1 = arith.constant 1 : index
    %c0_1 = arith.constant 0 : index
    %1 = vector.load %arg8[%c1, %c0_1] : memref<3x128xf32, #tpu.memory_space<vmem>>, vector<1x128xf32>
    %c2 = arith.constant 2 : index
    %c0_2 = arith.constant 0 : index
    %2 = vector.load %arg8[%c2, %c0_2] : memref<3x128xf32, #tpu.memory_space<vmem>>, vector<1x128xf32>
    %c0_3 = arith.constant 0 : index
    %c0_4 = arith.constant 0 : index
    %3 = vector.load %arg5[%c0_3, %c0_4] : memref<128x128xbf16, #tpu.memory_space<vmem>>, vector<128x128xbf16>
    %c0_5 = arith.constant 0 : index
    %c0_6 = arith.constant 0 : index
    %c0_7 = arith.constant 0 : index
    %c0_8 = arith.constant 0 : index
    %4 = vector.load %arg2[%c0_5, %c0_6, %c0_7, %c0_8] : memref<1x16x16x128xf32, #tpu.memory_space<vmem>>, vector<1x16x16x128xf32>
    %5 = vector.shape_cast %4 : vector<1x16x16x128xf32> to vector<16x16x128xf32>
    %6 = vector.shape_cast %5 : vector<16x16x128xf32> to vector<256x128xf32>
    %7 = arith.truncf %6 : vector<256x128xf32> to vector<256x128xbf16>
    %cst = arith.constant dense<0.000000e+00> : vector<256x128xf32>
    %8 = tpu.matmul %7, %3, %cst {dimension_numbers = #tpu.dot_dimension_numbers<[1], [0], [0], [1], [0, 0, 1, 1], [], []>} : vector<256x128xbf16>, vector<128x128xbf16>, vector<256x128xf32> -> vector<256x128xf32>
    %9 = vector.broadcast %0 : vector<1x128xf32> to vector<256x128xf32>
    %10 = arith.addf %8, %9 : vector<256x128xf32>
    %cst_9 = arith.constant 0.000000e+00 : f32
    %11 = vector.broadcast %cst_9 : f32 to vector<256x128xf32>
    %12 = arith.maximumf %10, %11 : vector<256x128xf32>
    %13 = vector.shape_cast %12 : vector<256x128xf32> to vector<16x16x128xf32>
    %14 = arith.truncf %13 : vector<16x16x128xf32> to vector<16x16x128xbf16>
    %c0_10 = arith.constant 0 : index
    %c0_11 = arith.constant 0 : index
    %c0_12 = arith.constant 0 : index
    %c0_13 = arith.constant 0 : index
    %15 = vector.load %arg3[%c0_10, %c0_11, %c0_12, %c0_13] : memref<1x1x16x128xf32, #tpu.memory_space<vmem>>, vector<1x1x16x128xf32>
    %16 = vector.shape_cast %15 : vector<1x1x16x128xf32> to vector<16x128xf32>
    %17 = arith.truncf %16 : vector<16x128xf32> to vector<16x128xbf16>
    %cst_14 = arith.constant dense<0.000000e+00> : vector<16x128xf32>
    %18 = tpu.matmul %17, %3, %cst_14 {dimension_numbers = #tpu.dot_dimension_numbers<[1], [0], [0], [1], [0, 0, 1, 1], [], []>} : vector<16x128xbf16>, vector<128x128xbf16>, vector<16x128xf32> -> vector<16x128xf32>
    %c0_i32 = arith.constant 0 : i32
    %19 = arith.cmpi sgt, %arg1, %c0_i32 : i32
    %20 = vector.broadcast %0 : vector<1x128xf32> to vector<16x128xf32>
    %21 = arith.addf %18, %20 : vector<16x128xf32>
    %cst_15 = arith.constant 0.000000e+00 : f32
    %22 = vector.broadcast %cst_15 : f32 to vector<16x128xf32>
    %23 = arith.maximumf %21, %22 : vector<16x128xf32>
    %cst_16 = arith.constant 0.000000e+00 : f32
    %24 = vector.broadcast %cst_16 : f32 to vector<16x128xf32>
    %25 = arith.select %19, %23, %24 : vector<16x128xf32>
    %c0_17 = arith.constant 0 : index
    %c0_18 = arith.constant 0 : index
    %c0_19 = arith.constant 0 : index
    %c0_20 = arith.constant 0 : index
    %26 = vector.load %arg4[%c0_17, %c0_18, %c0_19, %c0_20] : memref<1x1x16x128xf32, #tpu.memory_space<vmem>>, vector<1x1x16x128xf32>
    %27 = vector.shape_cast %26 : vector<1x1x16x128xf32> to vector<16x128xf32>
    %28 = arith.truncf %27 : vector<16x128xf32> to vector<16x128xbf16>
    %cst_21 = arith.constant dense<0.000000e+00> : vector<16x128xf32>
    %29 = tpu.matmul %28, %3, %cst_21 {dimension_numbers = #tpu.dot_dimension_numbers<[1], [0], [0], [1], [0, 0, 1, 1], [], []>} : vector<16x128xbf16>, vector<128x128xbf16>, vector<16x128xf32> -> vector<16x128xf32>
    %c0_i32_22 = arith.constant 0 : i32
    %30 = arith.cmpi slt, %arg1, %c0_i32_22 : i32
    %31 = vector.broadcast %0 : vector<1x128xf32> to vector<16x128xf32>
    %32 = arith.addf %29, %31 : vector<16x128xf32>
    %cst_23 = arith.constant 0.000000e+00 : f32
    %33 = vector.broadcast %cst_23 : f32 to vector<16x128xf32>
    %34 = arith.maximumf %32, %33 : vector<16x128xf32>
    %cst_24 = arith.constant 0.000000e+00 : f32
    %35 = vector.broadcast %cst_24 : f32 to vector<16x128xf32>
    %36 = arith.select %30, %34, %35 : vector<16x128xf32>
    %37 = arith.truncf %25 : vector<16x128xf32> to vector<16x128xbf16>
    %38 = vector.shape_cast %37 : vector<16x128xbf16> to vector<1x16x128xbf16>
    %39 = arith.truncf %36 : vector<16x128xf32> to vector<16x128xbf16>
    %40 = vector.shape_cast %39 : vector<16x128xbf16> to vector<1x16x128xbf16>
    %41 = tpu.concatenate %38, %14, %40 in 0 : vector<1x16x128xbf16>, vector<16x16x128xbf16>, vector<1x16x128xbf16> -> vector<18x16x128xbf16>
    %cst_25 = arith.constant 0.000000e+00 : bf16
    %42 = vector.broadcast %cst_25 : bf16 to vector<18x1x128xbf16>
    %43 = vector.extract_strided_slice %41 {offsets = [0, 0, 0], sizes = [18, 15, 128], strides = [1, 1, 1]} : vector<18x16x128xbf16> to vector<18x15x128xbf16>
    %44 = tpu.concatenate %42, %43 in 1 : vector<18x1x128xbf16>, vector<18x15x128xbf16> -> vector<18x16x128xbf16>
    %45 = vector.extract_strided_slice %41 {offsets = [0, 1, 0], sizes = [18, 15, 128], strides = [1, 1, 1]} : vector<18x16x128xbf16> to vector<18x15x128xbf16>
    %46 = tpu.concatenate %45, %42 in 1 : vector<18x15x128xbf16>, vector<18x1x128xbf16> -> vector<18x16x128xbf16>
    %cst_26 = arith.constant 0.000000e+00 : f32
    %47 = vector.broadcast %cst_26 : f32 to vector<256x128xf32>
    %48 = vector.extract_strided_slice %44 {offsets = [0, 0, 0], sizes = [16, 16, 128], strides = [1, 1, 1]} : vector<18x16x128xbf16> to vector<16x16x128xbf16>
    %49 = vector.shape_cast %48 : vector<16x16x128xbf16> to vector<256x128xbf16>
    %c0_27 = arith.constant 0 : index
    %c0_28 = arith.constant 0 : index
    %50 = vector.load %arg6[%c0_27, %c0_28] : memref<1152x128xbf16, #tpu.memory_space<vmem>>, vector<128x128xbf16>
    %cst_29 = arith.constant dense<0.000000e+00> : vector<256x128xf32>
    %51 = tpu.matmul %49, %50, %cst_29 {dimension_numbers = #tpu.dot_dimension_numbers<[1], [0], [0], [1], [0, 0, 1, 1], [], []>} : vector<256x128xbf16>, vector<128x128xbf16>, vector<256x128xf32> -> vector<256x128xf32>
    %52 = arith.addf %47, %51 : vector<256x128xf32>
    %53 = vector.extract_strided_slice %41 {offsets = [0, 0, 0], sizes = [16, 16, 128], strides = [1, 1, 1]} : vector<18x16x128xbf16> to vector<16x16x128xbf16>
    %54 = vector.shape_cast %53 : vector<16x16x128xbf16> to vector<256x128xbf16>
    %c128 = arith.constant 128 : index
    %c0_30 = arith.constant 0 : index
    %55 = vector.load %arg6[%c128, %c0_30] : memref<1152x128xbf16, #tpu.memory_space<vmem>>, vector<128x128xbf16>
    %cst_31 = arith.constant dense<0.000000e+00> : vector<256x128xf32>
    %56 = tpu.matmul %54, %55, %cst_31 {dimension_numbers = #tpu.dot_dimension_numbers<[1], [0], [0], [1], [0, 0, 1, 1], [], []>} : vector<256x128xbf16>, vector<128x128xbf16>, vector<256x128xf32> -> vector<256x128xf32>
    %57 = arith.addf %52, %56 : vector<256x128xf32>
    %58 = vector.extract_strided_slice %46 {offsets = [0, 0, 0], sizes = [16, 16, 128], strides = [1, 1, 1]} : vector<18x16x128xbf16> to vector<16x16x128xbf16>
    %59 = vector.shape_cast %58 : vector<16x16x128xbf16> to vector<256x128xbf16>
    %c256 = arith.constant 256 : index
    %c0_32 = arith.constant 0 : index
    %60 = vector.load %arg6[%c256, %c0_32] : memref<1152x128xbf16, #tpu.memory_space<vmem>>, vector<128x128xbf16>
    %cst_33 = arith.constant dense<0.000000e+00> : vector<256x128xf32>
    %61 = tpu.matmul %59, %60, %cst_33 {dimension_numbers = #tpu.dot_dimension_numbers<[1], [0], [0], [1], [0, 0, 1, 1], [], []>} : vector<256x128xbf16>, vector<128x128xbf16>, vector<256x128xf32> -> vector<256x128xf32>
    %62 = arith.addf %57, %61 : vector<256x128xf32>
    %63 = vector.extract_strided_slice %44 {offsets = [1, 0, 0], sizes = [16, 16, 128], strides = [1, 1, 1]} : vector<18x16x128xbf16> to vector<16x16x128xbf16>
    %64 = vector.shape_cast %63 : vector<16x16x128xbf16> to vector<256x128xbf16>
    %c384 = arith.constant 384 : index
    %c0_34 = arith.constant 0 : index
    %65 = vector.load %arg6[%c384, %c0_34] : memref<1152x128xbf16, #tpu.memory_space<vmem>>, vector<128x128xbf16>
    %cst_35 = arith.constant dense<0.000000e+00> : vector<256x128xf32>
    %66 = tpu.matmul %64, %65, %cst_35 {dimension_numbers = #tpu.dot_dimension_numbers<[1], [0], [0], [1], [0, 0, 1, 1], [], []>} : vector<256x128xbf16>, vector<128x128xbf16>, vector<256x128xf32> -> vector<256x128xf32>
    %67 = arith.addf %62, %66 : vector<256x128xf32>
    %68 = vector.extract_strided_slice %41 {offsets = [1, 0, 0], sizes = [16, 16, 128], strides = [1, 1, 1]} : vector<18x16x128xbf16> to vector<16x16x128xbf16>
    %69 = vector.shape_cast %68 : vector<16x16x128xbf16> to vector<256x128xbf16>
    %c512 = arith.constant 512 : index
    %c0_36 = arith.constant 0 : index
    %70 = vector.load %arg6[%c512, %c0_36] : memref<1152x128xbf16, #tpu.memory_space<vmem>>, vector<128x128xbf16>
    %cst_37 = arith.constant dense<0.000000e+00> : vector<256x128xf32>
    %71 = tpu.matmul %69, %70, %cst_37 {dimension_numbers = #tpu.dot_dimension_numbers<[1], [0], [0], [1], [0, 0, 1, 1], [], []>} : vector<256x128xbf16>, vector<128x128xbf16>, vector<256x128xf32> -> vector<256x128xf32>
    %72 = arith.addf %67, %71 : vector<256x128xf32>
    %73 = vector.extract_strided_slice %46 {offsets = [1, 0, 0], sizes = [16, 16, 128], strides = [1, 1, 1]} : vector<18x16x128xbf16> to vector<16x16x128xbf16>
    %74 = vector.shape_cast %73 : vector<16x16x128xbf16> to vector<256x128xbf16>
    %c640 = arith.constant 640 : index
    %c0_38 = arith.constant 0 : index
    %75 = vector.load %arg6[%c640, %c0_38] : memref<1152x128xbf16, #tpu.memory_space<vmem>>, vector<128x128xbf16>
    %cst_39 = arith.constant dense<0.000000e+00> : vector<256x128xf32>
    %76 = tpu.matmul %74, %75, %cst_39 {dimension_numbers = #tpu.dot_dimension_numbers<[1], [0], [0], [1], [0, 0, 1, 1], [], []>} : vector<256x128xbf16>, vector<128x128xbf16>, vector<256x128xf32> -> vector<256x128xf32>
    %77 = arith.addf %72, %76 : vector<256x128xf32>
    %78 = vector.extract_strided_slice %44 {offsets = [2, 0, 0], sizes = [16, 16, 128], strides = [1, 1, 1]} : vector<18x16x128xbf16> to vector<16x16x128xbf16>
    %79 = vector.shape_cast %78 : vector<16x16x128xbf16> to vector<256x128xbf16>
    %c768 = arith.constant 768 : index
    %c0_40 = arith.constant 0 : index
    %80 = vector.load %arg6[%c768, %c0_40] : memref<1152x128xbf16, #tpu.memory_space<vmem>>, vector<128x128xbf16>
    %cst_41 = arith.constant dense<0.000000e+00> : vector<256x128xf32>
    %81 = tpu.matmul %79, %80, %cst_41 {dimension_numbers = #tpu.dot_dimension_numbers<[1], [0], [0], [1], [0, 0, 1, 1], [], []>} : vector<256x128xbf16>, vector<128x128xbf16>, vector<256x128xf32> -> vector<256x128xf32>
    %82 = arith.addf %77, %81 : vector<256x128xf32>
    %83 = vector.extract_strided_slice %41 {offsets = [2, 0, 0], sizes = [16, 16, 128], strides = [1, 1, 1]} : vector<18x16x128xbf16> to vector<16x16x128xbf16>
    %84 = vector.shape_cast %83 : vector<16x16x128xbf16> to vector<256x128xbf16>
    %c896 = arith.constant 896 : index
    %c0_42 = arith.constant 0 : index
    %85 = vector.load %arg6[%c896, %c0_42] : memref<1152x128xbf16, #tpu.memory_space<vmem>>, vector<128x128xbf16>
    %cst_43 = arith.constant dense<0.000000e+00> : vector<256x128xf32>
    %86 = tpu.matmul %84, %85, %cst_43 {dimension_numbers = #tpu.dot_dimension_numbers<[1], [0], [0], [1], [0, 0, 1, 1], [], []>} : vector<256x128xbf16>, vector<128x128xbf16>, vector<256x128xf32> -> vector<256x128xf32>
    %87 = arith.addf %82, %86 : vector<256x128xf32>
    %88 = vector.extract_strided_slice %46 {offsets = [2, 0, 0], sizes = [16, 16, 128], strides = [1, 1, 1]} : vector<18x16x128xbf16> to vector<16x16x128xbf16>
    %89 = vector.shape_cast %88 : vector<16x16x128xbf16> to vector<256x128xbf16>
    %c1024 = arith.constant 1024 : index
    %c0_44 = arith.constant 0 : index
    %90 = vector.load %arg6[%c1024, %c0_44] : memref<1152x128xbf16, #tpu.memory_space<vmem>>, vector<128x128xbf16>
    %cst_45 = arith.constant dense<0.000000e+00> : vector<256x128xf32>
    %91 = tpu.matmul %89, %90, %cst_45 {dimension_numbers = #tpu.dot_dimension_numbers<[1], [0], [0], [1], [0, 0, 1, 1], [], []>} : vector<256x128xbf16>, vector<128x128xbf16>, vector<256x128xf32> -> vector<256x128xf32>
    %92 = arith.addf %87, %91 : vector<256x128xf32>
    %93 = vector.broadcast %1 : vector<1x128xf32> to vector<256x128xf32>
    %94 = arith.addf %92, %93 : vector<256x128xf32>
    %cst_46 = arith.constant 0.000000e+00 : f32
    %95 = vector.broadcast %cst_46 : f32 to vector<256x128xf32>
    %96 = arith.maximumf %94, %95 : vector<256x128xf32>
    %97 = arith.truncf %96 : vector<256x128xf32> to vector<256x128xbf16>
    %c0_47 = arith.constant 0 : index
    %c0_48 = arith.constant 0 : index
    %98 = vector.load %arg7[%c0_47, %c0_48] : memref<128x128xbf16, #tpu.memory_space<vmem>>, vector<128x128xbf16>
    %cst_49 = arith.constant dense<0.000000e+00> : vector<256x128xf32>
    %99 = tpu.matmul %97, %98, %cst_49 {dimension_numbers = #tpu.dot_dimension_numbers<[1], [0], [0], [1], [0, 0, 1, 1], [], []>} : vector<256x128xbf16>, vector<128x128xbf16>, vector<256x128xf32> -> vector<256x128xf32>
    %100 = vector.broadcast %2 : vector<1x128xf32> to vector<256x128xf32>
    %101 = arith.addf %99, %100 : vector<256x128xf32>
    %c0_50 = arith.constant 0 : index
    %c0_51 = arith.constant 0 : index
    %c0_52 = arith.constant 0 : index
    %c0_53 = arith.constant 0 : index
    %102 = vector.load %arg2[%c0_50, %c0_51, %c0_52, %c0_53] : memref<1x16x16x128xf32, #tpu.memory_space<vmem>>, vector<1x16x16x128xf32>
    %103 = vector.shape_cast %102 : vector<1x16x16x128xf32> to vector<16x16x128xf32>
    %104 = vector.shape_cast %103 : vector<16x16x128xf32> to vector<256x128xf32>
    %105 = arith.addf %101, %104 : vector<256x128xf32>
    %cst_54 = arith.constant 0.000000e+00 : f32
    %106 = vector.broadcast %cst_54 : f32 to vector<256x128xf32>
    %107 = arith.maximumf %105, %106 : vector<256x128xf32>
    %108 = vector.shape_cast %107 : vector<256x128xf32> to vector<16x16x128xf32>
    %c0_55 = arith.constant 0 : index
    %c0_56 = arith.constant 0 : index
    %c0_57 = arith.constant 0 : index
    %c0_58 = arith.constant 0 : index
    %109 = vector.load %arg9[%c0_55, %c0_56, %c0_57, %c0_58] : memref<1x16x16x128xf32, #tpu.memory_space<vmem>>, vector<1x16x16x128xf32>
    %110 = vector.shape_cast %109 : vector<1x16x16x128xf32> to vector<16x16x128xf32>
    %111 = vector.shape_cast %108 : vector<16x16x128xf32> to vector<1x16x16x128xf32>
    tpu.vector_store %arg9[%c0_55, %c0_56, %c0_57, %c0_58], %111 {strides = array<i32>} : memref<1x16x16x128xf32, #tpu.memory_space<vmem>>, vector<1x16x16x128xf32>,
    return
  }
  func.func @transform_0(%arg0: i32, %arg1: i32) -> (i32, i32, i32, i32) {
    %c0_i32 = arith.constant 0 : i32
    %c0_i32_0 = arith.constant 0 : i32
    %c0_i32_1 = arith.constant 0 : i32
    return %arg0, %arg1, %c0_i32, %c0_i32_0 : i32, i32, i32, i32
  }
  func.func @transform_1(%arg0: i32, %arg1: i32) -> (i32, i32, i32, i32) {
    %c16_i32 = arith.constant 16 : i32
    %0 = arith.muli %arg1, %c16_i32 : i32
    %c1_i32 = arith.constant 1 : i32
    %1 = arith.subi %0, %c1_i32 : i32
    %c0_i32 = arith.constant 0 : i32
    %2 = arith.maxsi %1, %c0_i32 : i32
    %c0_i32_0 = arith.constant 0 : i32
    %c0_i32_1 = arith.constant 0 : i32
    %c0_i32_2 = arith.constant 0 : i32
    return %arg0, %2, %c0_i32_0, %c0_i32_1 : i32, i32, i32, i32
  }
  func.func @transform_2(%arg0: i32, %arg1: i32) -> (i32, i32, i32, i32) {
    %c1_i32 = arith.constant 1 : i32
    %0 = arith.addi %arg1, %c1_i32 : i32
    %c16_i32 = arith.constant 16 : i32
    %1 = arith.muli %0, %c16_i32 : i32
    %c15_i32 = arith.constant 15 : i32
    %2 = arith.minsi %1, %c15_i32 : i32
    %c0_i32 = arith.constant 0 : i32
    %c0_i32_0 = arith.constant 0 : i32
    %c0_i32_1 = arith.constant 0 : i32
    return %arg0, %2, %c0_i32, %c0_i32_0 : i32, i32, i32, i32
  }
  func.func @transform_3(%arg0: i32, %arg1: i32) -> (i32, i32) {
    %c0_i32 = arith.constant 0 : i32
    %c0_i32_0 = arith.constant 0 : i32
    %c0_i32_1 = arith.constant 0 : i32
    return %c0_i32, %c0_i32_0 : i32, i32
  }
  func.func @transform_4(%arg0: i32, %arg1: i32) -> (i32, i32) {
    %c0_i32 = arith.constant 0 : i32
    %c0_i32_0 = arith.constant 0 : i32
    %c0_i32_1 = arith.constant 0 : i32
    return %c0_i32, %c0_i32_0 : i32, i32
  }
  func.func @transform_5(%arg0: i32, %arg1: i32) -> (i32, i32) {
    %c0_i32 = arith.constant 0 : i32
    %c0_i32_0 = arith.constant 0 : i32
    %c0_i32_1 = arith.constant 0 : i32
    return %c0_i32, %c0_i32_0 : i32, i32
  }
  func.func @transform_6(%arg0: i32, %arg1: i32) -> (i32, i32) {
    %c0_i32 = arith.constant 0 : i32
    %c0_i32_0 = arith.constant 0 : i32
    %c0_i32_1 = arith.constant 0 : i32
    return %c0_i32, %c0_i32_0 : i32, i32
  }
  func.func @transform_7(%arg0: i32, %arg1: i32) -> (i32, i32, i32, i32) {
    %c0_i32 = arith.constant 0 : i32
    %c0_i32_0 = arith.constant 0 : i32
    %c0_i32_1 = arith.constant 0 : i32
    return %arg0, %arg1, %c0_i32, %c0_i32_0 : i32, i32, i32, i32
  }
}

module attributes {stable_mosaic.version = 11 : i64} {
  func.func @bottleneck_kernel(%arg0: i32, %arg1: i32, %arg2: memref<1x16x16x128xf32, #tpu.memory_space<vmem>>, %arg3: memref<1x1x16x128xf32, #tpu.memory_space<vmem>>, %arg4: memref<1x1x16x128xf32, #tpu.memory_space<vmem>>, %arg5: memref<128x128xbf16, #tpu.memory_space<vmem>>, %arg6: memref<1152x128xbf16, #tpu.memory_space<vmem>>, %arg7: memref<128x128xbf16, #tpu.memory_space<vmem>>, %arg8: memref<3x128xf32, #tpu.memory_space<vmem>>, %arg9: memref<1x16x16x128xf32, #tpu.memory_space<vmem>>) attributes {dimension_semantics = [#tpu.dimension_semantics<parallel>, #tpu.dimension_semantics<parallel>], iteration_bounds = array<i64: 2, 1>, scalar_prefetch = 0 : i64, scratch_operands = 0 : i64, tpu.core_type = #tpu.core_type<tc>, window_params = [{transform_indices = @transform_0, window_bounds = array<i64: 1, 16, 16, 128>}, {transform_indices = @transform_1, window_bounds = array<i64: 1, 1, 16, 128>}, {transform_indices = @transform_2, window_bounds = array<i64: 1, 1, 16, 128>}, {pipeline_mode = #tpu.pipeline_mode<synchronous>, transform_indices = @transform_3, window_bounds = array<i64: 128, 128>}, {pipeline_mode = #tpu.pipeline_mode<synchronous>, transform_indices = @transform_4, window_bounds = array<i64: 1152, 128>}, {pipeline_mode = #tpu.pipeline_mode<synchronous>, transform_indices = @transform_5, window_bounds = array<i64: 128, 128>}, {pipeline_mode = #tpu.pipeline_mode<synchronous>, transform_indices = @transform_6, window_bounds = array<i64: 3, 128>}, {transform_indices = @transform_7, window_bounds = array<i64: 1, 16, 16, 128>}]} {
    %c0 = arith.constant 0 : index
    %c0_0 = arith.constant 0 : index
    %0 = vector.load %arg8[%c0, %c0_0] : memref<3x128xf32, #tpu.memory_space<vmem>>, vector<1x128xf32>
    %c1 = arith.constant 1 : index
    %c0_1 = arith.constant 0 : index
    %1 = vector.load %arg8[%c1, %c0_1] : memref<3x128xf32, #tpu.memory_space<vmem>>, vector<1x128xf32>
    %c2 = arith.constant 2 : index
    %c0_2 = arith.constant 0 : index
    %2 = vector.load %arg8[%c2, %c0_2] : memref<3x128xf32, #tpu.memory_space<vmem>>, vector<1x128xf32>
    %c0_3 = arith.constant 0 : index
    %c0_4 = arith.constant 0 : index
    %3 = vector.load %arg5[%c0_3, %c0_4] : memref<128x128xbf16, #tpu.memory_space<vmem>>, vector<128x128xbf16>
    %c0_5 = arith.constant 0 : index
    %c0_6 = arith.constant 0 : index
    %c0_7 = arith.constant 0 : index
    %c0_8 = arith.constant 0 : index
    %4 = vector.load %arg2[%c0_5, %c0_6, %c0_7, %c0_8] : memref<1x16x16x128xf32, #tpu.memory_space<vmem>>, vector<1x16x16x128xf32>
    %5 = vector.shape_cast %4 : vector<1x16x16x128xf32> to vector<16x16x128xf32>
    %6 = vector.shape_cast %5 : vector<16x16x128xf32> to vector<256x128xf32>
    %7 = arith.truncf %6 : vector<256x128xf32> to vector<256x128xbf16>
    %cst = arith.constant dense<0.000000e+00> : vector<256x128xf32>
    %8 = tpu.matmul %7, %3, %cst {dimension_numbers = #tpu.dot_dimension_numbers<[1], [0], [0], [1], [0, 0, 1, 1], [], []>} : vector<256x128xbf16>, vector<128x128xbf16>, vector<256x128xf32> -> vector<256x128xf32>
    %9 = vector.broadcast %0 : vector<1x128xf32> to vector<256x128xf32>
    %10 = arith.addf %8, %9 : vector<256x128xf32>
    %cst_9 = arith.constant 0.000000e+00 : f32
    %11 = vector.broadcast %cst_9 : f32 to vector<256x128xf32>
    %12 = arith.maximumf %10, %11 : vector<256x128xf32>
    %13 = vector.shape_cast %12 : vector<256x128xf32> to vector<16x16x128xf32>
    %14 = arith.truncf %13 : vector<16x16x128xf32> to vector<16x16x128xbf16>
    %c0_10 = arith.constant 0 : index
    %c0_11 = arith.constant 0 : index
    %c0_12 = arith.constant 0 : index
    %c0_13 = arith.constant 0 : index
    %15 = vector.load %arg3[%c0_10, %c0_11, %c0_12, %c0_13] : memref<1x1x16x128xf32, #tpu.memory_space<vmem>>, vector<1x1x16x128xf32>
    %16 = vector.shape_cast %15 : vector<1x1x16x128xf32> to vector<16x128xf32>
    %17 = arith.truncf %16 : vector<16x128xf32> to vector<16x128xbf16>
    %cst_14 = arith.constant dense<0.000000e+00> : vector<16x128xf32>
    %18 = tpu.matmul %17, %3, %cst_14 {dimension_numbers = #tpu.dot_dimension_numbers<[1], [0], [0], [1], [0, 0, 1, 1], [], []>} : vector<16x128xbf16>, vector<128x128xbf16>, vector<16x128xf32> -> vector<16x128xf32>
    %c0_i32 = arith.constant 0 : i32
    %19 = arith.cmpi sgt, %arg1, %c0_i32 : i32
    %20 = vector.broadcast %0 : vector<1x128xf32> to vector<16x128xf32>
    %21 = arith.addf %18, %20 : vector<16x128xf32>
    %cst_15 = arith.constant 0.000000e+00 : f32
    %22 = vector.broadcast %cst_15 : f32 to vector<16x128xf32>
    %23 = arith.maximumf %21, %22 : vector<16x128xf32>
    %cst_16 = arith.constant 0.000000e+00 : f32
    %24 = vector.broadcast %cst_16 : f32 to vector<16x128xf32>
    %25 = arith.select %19, %23, %24 : vector<16x128xf32>
    %c0_17 = arith.constant 0 : index
    %c0_18 = arith.constant 0 : index
    %c0_19 = arith.constant 0 : index
    %c0_20 = arith.constant 0 : index
    %26 = vector.load %arg4[%c0_17, %c0_18, %c0_19, %c0_20] : memref<1x1x16x128xf32, #tpu.memory_space<vmem>>, vector<1x1x16x128xf32>
    %27 = vector.shape_cast %26 : vector<1x1x16x128xf32> to vector<16x128xf32>
    %28 = arith.truncf %27 : vector<16x128xf32> to vector<16x128xbf16>
    %cst_21 = arith.constant dense<0.000000e+00> : vector<16x128xf32>
    %29 = tpu.matmul %28, %3, %cst_21 {dimension_numbers = #tpu.dot_dimension_numbers<[1], [0], [0], [1], [0, 0, 1, 1], [], []>} : vector<16x128xbf16>, vector<128x128xbf16>, vector<16x128xf32> -> vector<16x128xf32>
    %c0_i32_22 = arith.constant 0 : i32
    %30 = arith.cmpi slt, %arg1, %c0_i32_22 : i32
    %31 = vector.broadcast %0 : vector<1x128xf32> to vector<16x128xf32>
    %32 = arith.addf %29, %31 : vector<16x128xf32>
    %cst_23 = arith.constant 0.000000e+00 : f32
    %33 = vector.broadcast %cst_23 : f32 to vector<16x128xf32>
    %34 = arith.maximumf %32, %33 : vector<16x128xf32>
    %cst_24 = arith.constant 0.000000e+00 : f32
    %35 = vector.broadcast %cst_24 : f32 to vector<16x128xf32>
    %36 = arith.select %30, %34, %35 : vector<16x128xf32>
    %37 = arith.truncf %25 : vector<16x128xf32> to vector<16x128xbf16>
    %38 = vector.shape_cast %37 : vector<16x128xbf16> to vector<1x16x128xbf16>
    %39 = arith.truncf %36 : vector<16x128xf32> to vector<16x128xbf16>
    %40 = vector.shape_cast %39 : vector<16x128xbf16> to vector<1x16x128xbf16>
    %41 = tpu.concatenate %38, %14, %40 in 0 : vector<1x16x128xbf16>, vector<16x16x128xbf16>, vector<1x16x128xbf16> -> vector<18x16x128xbf16>
    %cst_25 = arith.constant 0.000000e+00 : bf16
    %42 = vector.broadcast %cst_25 : bf16 to vector<18x1x128xbf16>
    %43 = vector.extract_strided_slice %41 {offsets = [0, 0, 0], sizes = [18, 15, 128], strides = [1, 1, 1]} : vector<18x16x128xbf16> to vector<18x15x128xbf16>
    %44 = tpu.concatenate %42, %43 in 1 : vector<18x1x128xbf16>, vector<18x15x128xbf16> -> vector<18x16x128xbf16>
    %45 = vector.extract_strided_slice %41 {offsets = [0, 1, 0], sizes = [18, 15, 128], strides = [1, 1, 1]} : vector<18x16x128xbf16> to vector<18x15x128xbf16>
    %46 = tpu.concatenate %45, %42 in 1 : vector<18x15x128xbf16>, vector<18x1x128xbf16> -> vector<18x16x128xbf16>
    %cst_26 = arith.constant 0.000000e+00 : f32
    %47 = vector.broadcast %cst_26 : f32 to vector<256x128xf32>
    %48 = vector.extract_strided_slice %44 {offsets = [0, 0, 0], sizes = [16, 16, 128], strides = [1, 1, 1]} : vector<18x16x128xbf16> to vector<16x16x128xbf16>
    %49 = vector.shape_cast %48 : vector<16x16x128xbf16> to vector<256x128xbf16>
    %c0_27 = arith.constant 0 : index
    %c0_28 = arith.constant 0 : index
    %50 = vector.load %arg6[%c0_27, %c0_28] : memref<1152x128xbf16, #tpu.memory_space<vmem>>, vector<128x128xbf16>
    %cst_29 = arith.constant dense<0.000000e+00> : vector<256x128xf32>
    %51 = tpu.matmul %49, %50, %cst_29 {dimension_numbers = #tpu.dot_dimension_numbers<[1], [0], [0], [1], [0, 0, 1, 1], [], []>} : vector<256x128xbf16>, vector<128x128xbf16>, vector<256x128xf32> -> vector<256x128xf32>
    %52 = arith.addf %47, %51 : vector<256x128xf32>
    %53 = vector.extract_strided_slice %41 {offsets = [0, 0, 0], sizes = [16, 16, 128], strides = [1, 1, 1]} : vector<18x16x128xbf16> to vector<16x16x128xbf16>
    %54 = vector.shape_cast %53 : vector<16x16x128xbf16> to vector<256x128xbf16>
    %c128 = arith.constant 128 : index
    %c0_30 = arith.constant 0 : index
    %55 = vector.load %arg6[%c128, %c0_30] : memref<1152x128xbf16, #tpu.memory_space<vmem>>, vector<128x128xbf16>
    %cst_31 = arith.constant dense<0.000000e+00> : vector<256x128xf32>
    %56 = tpu.matmul %54, %55, %cst_31 {dimension_numbers = #tpu.dot_dimension_numbers<[1], [0], [0], [1], [0, 0, 1, 1], [], []>} : vector<256x128xbf16>, vector<128x128xbf16>, vector<256x128xf32> -> vector<256x128xf32>
    %57 = arith.addf %52, %56 : vector<256x128xf32>
    %58 = vector.extract_strided_slice %46 {offsets = [0, 0, 0], sizes = [16, 16, 128], strides = [1, 1, 1]} : vector<18x16x128xbf16> to vector<16x16x128xbf16>
    %59 = vector.shape_cast %58 : vector<16x16x128xbf16> to vector<256x128xbf16>
    %c256 = arith.constant 256 : index
    %c0_32 = arith.constant 0 : index
    %60 = vector.load %arg6[%c256, %c0_32] : memref<1152x128xbf16, #tpu.memory_space<vmem>>, vector<128x128xbf16>
    %cst_33 = arith.constant dense<0.000000e+00> : vector<256x128xf32>
    %61 = tpu.matmul %59, %60, %cst_33 {dimension_numbers = #tpu.dot_dimension_numbers<[1], [0], [0], [1], [0, 0, 1, 1], [], []>} : vector<256x128xbf16>, vector<128x128xbf16>, vector<256x128xf32> -> vector<256x128xf32>
    %62 = arith.addf %57, %61 : vector<256x128xf32>
    %63 = vector.extract_strided_slice %44 {offsets = [1, 0, 0], sizes = [16, 16, 128], strides = [1, 1, 1]} : vector<18x16x128xbf16> to vector<16x16x128xbf16>
    %64 = vector.shape_cast %63 : vector<16x16x128xbf16> to vector<256x128xbf16>
    %c384 = arith.constant 384 : index
    %c0_34 = arith.constant 0 : index
    %65 = vector.load %arg6[%c384, %c0_34] : memref<1152x128xbf16, #tpu.memory_space<vmem>>, vector<128x128xbf16>
    %cst_35 = arith.constant dense<0.000000e+00> : vector<256x128xf32>
    %66 = tpu.matmul %64, %65, %cst_35 {dimension_numbers = #tpu.dot_dimension_numbers<[1], [0], [0], [1], [0, 0, 1, 1], [], []>} : vector<256x128xbf16>, vector<128x128xbf16>, vector<256x128xf32> -> vector<256x128xf32>
    %67 = arith.addf %62, %66 : vector<256x128xf32>
    %68 = vector.extract_strided_slice %41 {offsets = [1, 0, 0], sizes = [16, 16, 128], strides = [1, 1, 1]} : vector<18x16x128xbf16> to vector<16x16x128xbf16>
    %69 = vector.shape_cast %68 : vector<16x16x128xbf16> to vector<256x128xbf16>
    %c512 = arith.constant 512 : index
    %c0_36 = arith.constant 0 : index
    %70 = vector.load %arg6[%c512, %c0_36] : memref<1152x128xbf16, #tpu.memory_space<vmem>>, vector<128x128xbf16>
    %cst_37 = arith.constant dense<0.000000e+00> : vector<256x128xf32>
    %71 = tpu.matmul %69, %70, %cst_37 {dimension_numbers = #tpu.dot_dimension_numbers<[1], [0], [0], [1], [0, 0, 1, 1], [], []>} : vector<256x128xbf16>, vector<128x128xbf16>, vector<256x128xf32> -> vector<256x128xf32>
    %72 = arith.addf %67, %71 : vector<256x128xf32>
    %73 = vector.extract_strided_slice %46 {offsets = [1, 0, 0], sizes = [16, 16, 128], strides = [1, 1, 1]} : vector<18x16x128xbf16> to vector<16x16x128xbf16>
    %74 = vector.shape_cast %73 : vector<16x16x128xbf16> to vector<256x128xbf16>
    %c640 = arith.constant 640 : index
    %c0_38 = arith.constant 0 : index
    %75 = vector.load %arg6[%c640, %c0_38] : memref<1152x128xbf16, #tpu.memory_space<vmem>>, vector<128x128xbf16>
    %cst_39 = arith.constant dense<0.000000e+00> : vector<256x128xf32>
    %76 = tpu.matmul %74, %75, %cst_39 {dimension_numbers = #tpu.dot_dimension_numbers<[1], [0], [0], [1], [0, 0, 1, 1], [], []>} : vector<256x128xbf16>, vector<128x128xbf16>, vector<256x128xf32> -> vector<256x128xf32>
    %77 = arith.addf %72, %76 : vector<256x128xf32>
    %78 = vector.extract_strided_slice %44 {offsets = [2, 0, 0], sizes = [16, 16, 128], strides = [1, 1, 1]} : vector<18x16x128xbf16> to vector<16x16x128xbf16>
    %79 = vector.shape_cast %78 : vector<16x16x128xbf16> to vector<256x128xbf16>
    %c768 = arith.constant 768 : index
    %c0_40 = arith.constant 0 : index
    %80 = vector.load %arg6[%c768, %c0_40] : memref<1152x128xbf16, #tpu.memory_space<vmem>>, vector<128x128xbf16>
    %cst_41 = arith.constant dense<0.000000e+00> : vector<256x128xf32>
    %81 = tpu.matmul %79, %80, %cst_41 {dimension_numbers = #tpu.dot_dimension_numbers<[1], [0], [0], [1], [0, 0, 1, 1], [], []>} : vector<256x128xbf16>, vector<128x128xbf16>, vector<256x128xf32> -> vector<256x128xf32>
    %82 = arith.addf %77, %81 : vector<256x128xf32>
    %83 = vector.extract_strided_slice %41 {offsets = [2, 0, 0], sizes = [16, 16, 128], strides = [1, 1, 1]} : vector<18x16x128xbf16> to vector<16x16x128xbf16>
    %84 = vector.shape_cast %83 : vector<16x16x128xbf16> to vector<256x128xbf16>
    %c896 = arith.constant 896 : index
    %c0_42 = arith.constant 0 : index
    %85 = vector.load %arg6[%c896, %c0_42] : memref<1152x128xbf16, #tpu.memory_space<vmem>>, vector<128x128xbf16>
    %cst_43 = arith.constant dense<0.000000e+00> : vector<256x128xf32>
    %86 = tpu.matmul %84, %85, %cst_43 {dimension_numbers = #tpu.dot_dimension_numbers<[1], [0], [0], [1], [0, 0, 1, 1], [], []>} : vector<256x128xbf16>, vector<128x128xbf16>, vector<256x128xf32> -> vector<256x128xf32>
    %87 = arith.addf %82, %86 : vector<256x128xf32>
    %88 = vector.extract_strided_slice %46 {offsets = [2, 0, 0], sizes = [16, 16, 128], strides = [1, 1, 1]} : vector<18x16x128xbf16> to vector<16x16x128xbf16>
    %89 = vector.shape_cast %88 : vector<16x16x128xbf16> to vector<256x128xbf16>
    %c1024 = arith.constant 1024 : index
    %c0_44 = arith.constant 0 : index
    %90 = vector.load %arg6[%c1024, %c0_44] : memref<1152x128xbf16, #tpu.memory_space<vmem>>, vector<128x128xbf16>
    %cst_45 = arith.constant dense<0.000000e+00> : vector<256x128xf32>
    %91 = tpu.matmul %89, %90, %cst_45 {dimension_numbers = #tpu.dot_dimension_numbers<[1], [0], [0], [1], [0, 0, 1, 1], [], []>} : vector<256x128xbf16>, vector<128x128xbf16>, vector<256x128xf32> -> vector<256x128xf32>
    %92 = arith.addf %87, %91 : vector<256x128xf32>
    %93 = vector.broadcast %1 : vector<1x128xf32> to vector<256x128xf32>
    %94 = arith.addf %92, %93 : vector<256x128xf32>
    %cst_46 = arith.constant 0.000000e+00 : f32
    %95 = vector.broadcast %cst_46 : f32 to vector<256x128xf32>
    %96 = arith.maximumf %94, %95 : vector<256x128xf32>
    %97 = arith.truncf %96 : vector<256x128xf32> to vector<256x128xbf16>
    %c0_47 = arith.constant 0 : index
    %c0_48 = arith.constant 0 : index
    %98 = vector.load %arg7[%c0_47, %c0_48] : memref<128x128xbf16, #tpu.memory_space<vmem>>, vector<128x128xbf16>
    %cst_49 = arith.constant dense<0.000000e+00> : vector<256x128xf32>
    %99 = tpu.matmul %97, %98, %cst_49 {dimension_numbers = #tpu.dot_dimension_numbers<[1], [0], [0], [1], [0, 0, 1, 1], [], []>} : vector<256x128xbf16>, vector<128x128xbf16>, vector<256x128xf32> -> vector<256x128xf32>
    %100 = vector.broadcast %2 : vector<1x128xf32> to vector<256x128xf32>
    %101 = arith.addf %99, %100 : vector<256x128xf32>
    %c0_50 = arith.constant 0 : index
    %c0_51 = arith.constant 0 : index
    %c0_52 = arith.constant 0 : index
    %c0_53 = arith.constant 0 : index
    %102 = vector.load %arg2[%c0_50, %c0_51, %c0_52, %c0_53] : memref<1x16x16x128xf32, #tpu.memory_space<vmem>>, vector<1x16x16x128xf32>
    %103 = vector.shape_cast %102 : vector<1x16x16x128xf32> to vector<16x16x128xf32>
    %104 = vector.shape_cast %103 : vector<16x16x128xf32> to vector<256x128xf32>
    %105 = arith.addf %101, %104 : vector<256x128xf32>
    %cst_54 = arith.constant 0.000000e+00 : f32
    %106 = vector.broadcast %cst_54 : f32 to vector<256x128xf32>
    %107 = arith.maximumf %105, %106 : vector<256x128xf32>
    %108 = vector.shape_cast %107 : vector<256x128xf32> to vector<16x16x128xf32>
    %c0_55 = arith.constant 0 : index
    %c0_56 = arith.constant 0 : index
    %c0_57 = arith.constant 0 : index
    %c0_58 = arith.constant 0 : index
    %109 = vector.load %arg9[%c0_55, %c0_56, %c0_57, %c0_58] : memref<1x16x16x128xf32, #tpu.memory_space<vmem>>, vector<1x16x16x128xf32>
    %110 = vector.shape_cast %109 : vector<1x16x16x128xf32> to vector<16x16x128xf32>
    %111 = vector.shape_cast %108 : vector<16x16x128xf32> to vector<1x16x16x128xf32>
    tpu.vector_store %arg9[%c0_55, %c0_56, %c0_57, %c0_58], %111 {strides = array<i32>} : memref<1x16x16x128xf32, #tpu.memory_space<vmem>>, vector<1x16x16x128xf32>,
    return
  }
  func.func @transform_0(%arg0: i32, %arg1: i32) -> (i32, i32, i32, i32) {
    %c0_i32 = arith.constant 0 : i32
    %c0_i32_0 = arith.constant 0 : i32
    %c0_i32_1 = arith.constant 0 : i32
    return %arg0, %arg1, %c0_i32, %c0_i32_0 : i32, i32, i32, i32
  }
  func.func @transform_1(%arg0: i32, %arg1: i32) -> (i32, i32, i32, i32) {
    %c16_i32 = arith.constant 16 : i32
    %0 = arith.muli %arg1, %c16_i32 : i32
    %c1_i32 = arith.constant 1 : i32
    %1 = arith.subi %0, %c1_i32 : i32
    %c0_i32 = arith.constant 0 : i32
    %2 = arith.maxsi %1, %c0_i32 : i32
    %c0_i32_0 = arith.constant 0 : i32
    %c0_i32_1 = arith.constant 0 : i32
    %c0_i32_2 = arith.constant 0 : i32
    return %arg0, %2, %c0_i32_0, %c0_i32_1 : i32, i32, i32, i32
  }
  func.func @transform_2(%arg0: i32, %arg1: i32) -> (i32, i32, i32, i32) {
    %c1_i32 = arith.constant 1 : i32
    %0 = arith.addi %arg1, %c1_i32 : i32
    %c16_i32 = arith.constant 16 : i32
    %1 = arith.muli %0, %c16_i32 : i32
    %c15_i32 = arith.constant 15 : i32
    %2 = arith.minsi %1, %c15_i32 : i32
    %c0_i32 = arith.constant 0 : i32
    %c0_i32_0 = arith.constant 0 : i32
    %c0_i32_1 = arith.constant 0 : i32
    return %arg0, %2, %c0_i32, %c0_i32_0 : i32, i32, i32, i32
  }
  func.func @transform_3(%arg0: i32, %arg1: i32) -> (i32, i32) {
    %c0_i32 = arith.constant 0 : i32
    %c0_i32_0 = arith.constant 0 : i32
    %c0_i32_1 = arith.constant 0 : i32
    return %c0_i32, %c0_i32_0 : i32, i32
  }
  func.func @transform_4(%arg0: i32, %arg1: i32) -> (i32, i32) {
    %c0_i32 = arith.constant 0 : i32
    %c0_i32_0 = arith.constant 0 : i32
    %c0_i32_1 = arith.constant 0 : i32
    return %c0_i32, %c0_i32_0 : i32, i32
  }
  func.func @transform_5(%arg0: i32, %arg1: i32) -> (i32, i32) {
    %c0_i32 = arith.constant 0 : i32
    %c0_i32_0 = arith.constant 0 : i32
    %c0_i32_1 = arith.constant 0 : i32
    return %c0_i32, %c0_i32_0 : i32, i32
  }
  func.func @transform_6(%arg0: i32, %arg1: i32) -> (i32, i32) {
    %c0_i32 = arith.constant 0 : i32
    %c0_i32_0 = arith.constant 0 : i32
    %c0_i32_1 = arith.constant 0 : i32
    return %c0_i32, %c0_i32_0 : i32, i32
  }
  func.func @transform_7(%arg0: i32, %arg1: i32) -> (i32, i32, i32, i32) {
    %c0_i32 = arith.constant 0 : i32
    %c0_i32_0 = arith.constant 0 : i32
    %c0_i32_1 = arith.constant 0 : i32
    return %arg0, %arg1, %c0_i32, %c0_i32_0 : i32, i32, i32, i32
  }
}

</mosaic_0001>

<llo_original>
// kernel: tpu_custom_call.1
$region0: #{tpu_custom_call.1}
  #allocation0 [shape = 'u32[]', space=smem, size = 0x4, offset = 0x4, fixed_abs, tag = 'smem constant byte address 0x4 - core index']
  #allocation1 [shape = 'u32[72,128]{1,0:T(1,128)}', space=vmem, size = 0x9000, scoped, tag = 'internal scratch']
  %s0 = inlined_call_operand.hbm [shape: f32[2,16,16,128], index: 0, kind: input, shape index: {}]
  %s1 = inlined_call_operand.hbm [shape: f32[2,16,16,128], index: 1, kind: input, shape index: {}]
  %s2 = inlined_call_operand.hbm [shape: f32[2,16,16,128], index: 2, kind: input, shape index: {}]
  %s3 = inlined_call_operand.hbm [shape: bf16[128,128], index: 3, kind: input, shape index: {}]
  %s4 = inlined_call_operand.hbm [shape: bf16[1152,128], index: 4, kind: input, shape index: {}]
  %s5 = inlined_call_operand.hbm [shape: bf16[128,128], index: 5, kind: input, shape index: {}]
  %s6 = inlined_call_operand.vmem [shape: f32[3,128], index: 6, kind: input, shape index: {}]
  %s7 = inlined_call_operand.hbm [shape: f32[2,16,16,128], index: 7, kind: output, shape index: {}]
  %s8 = sld [smem:[#allocation0]]
  $region85: #{tpu_custom_call.1} parent=0
    _
  %s10 = ssub.s32 1, %s8
  %s11 = scalar_select 0, %s10, %s8
  $region1: #{tpu_custom_call.1} parent=0
    #allocation2 [shape = 'u8[262144]{0}', space=vmem, size = 0x40000, scoped, tag = 'input window, operand 0']
    #allocation3 [shape = 's32[2]{0}', space=sflag, size = 0x8, scoped, tag = 'scoped memory for tpu_custom_call.1']
    #allocation4 [shape = 's32[2]{0}', space=sflag, size = 0x8, scoped, tag = 'scoped memory for tpu_custom_call.1']
    #allocation5 [shape = 'u8[16384]{0}', space=vmem, size = 0x4000, scoped, tag = 'input window, operand 1']
    #allocation6 [shape = 's32[2]{0}', space=sflag, size = 0x8, scoped, tag = 'scoped memory for tpu_custom_call.1']
    #allocation7 [shape = 'u8[16384]{0}', space=vmem, size = 0x4000, scoped, tag = 'input window, operand 2']
    #allocation8 [shape = 'u8[32768]{0}', space=vmem, size = 0x8000, scoped, tag = 'input window, operand 3, single buffered']
    #allocation9 [shape = 's32[1]{0}', space=sflag, size = 0x4, scoped, tag = 'scoped memory for tpu_custom_call.1']
    #allocation10 [shape = 'u8[294912]{0}', space=vmem, size = 0x48000, scoped, tag = 'input window, operand 4, single buffered']
    #allocation11 [shape = 'u8[32768]{0}', space=vmem, size = 0x8000, scoped, tag = 'input window, operand 5, single buffered']
    #allocation12 [shape = 's32[1]{0}', space=sflag, size = 0x4, scoped, tag = 'scoped memory for tpu_custom_call.1']
    #allocation13 [shape = 'u8[262144]{0}', space=vmem, size = 0x40000, scoped, tag = 'output window, operand 0']
    %12 = vsyncpa [#allocation3], 0
    %s13 = scalar_lea.sflag [#allocation3], 1
    %14 = vsyncpa %s13, 0
    %15 = vsyncpa [#allocation6], 0
    %s16 = scalar_lea.sflag [#allocation6], 1
    %17 = vsyncpa %s16, 0
    %18 = vsyncpa [#allocation9], 0
    %19 = vsyncpa [#allocation12], 0
    %20 = vsyncpa [#allocation4], 0
    %s21 = scalar_lea.sflag [#allocation4], 1
    %22 = vsyncpa %s21, 0
    loop: start=0, step=1, limit=4
    $region2: #{tpu_custom_call.1} parent=1 // loop_pre_header
      _
    $region3: #{tpu_custom_call.1} parent=1 // loop_header
      %s24 = sphi 0, %s28
      %p25 = scmp.ge.s32.totalorder %s24, 4
      %s31 = sphi 0, %s43
      %s32 = sphi 0, %s39
      %s33 = sphi 0, %s31
      %s34 = sphi 0, %s32
      %s35 = sphi 0, %s33
      %s36 = sphi 0, %s34
      %s48 = sphi 0, %s50
      %s51 = sphi 0, %s48
      %s52 = sphi 0, %s51
      %s68 = sphi 0, %s52
      %s84 = sphi 0, %s86
      %s87 = sphi 0, %s84
      %s88 = sphi 0, %s87
      %s104 = sphi 0, %s88
      %s120 = sphi 0, %s122
      %s123 = sphi 0, %s120
      %s124 = sphi 0, %s123
      %s140 = sphi 0, %s124
      %s144 = sphi 0, %s144
      %s146 = sphi 0, %s144
      %s147 = sphi 0, %s146
      %s161 = sphi 0, %s147
      %s165 = sphi 0, %s165
      %s167 = sphi 0, %s165
      %s168 = sphi 0, %s167
      %s182 = sphi 0, %s168
      %s186 = sphi 0, %s186
      %s188 = sphi 0, %s186
      %s189 = sphi 0, %s188
      %s203 = sphi 0, %s189
      %s207 = sphi 0, %s207
      %s209 = sphi 0, %s207
      %s210 = sphi 0, %s209
      %s224 = sphi 0, %s210
      %s232 = sphi 0, %s234
      %s235 = sphi 0, %s232
      %s236 = sphi 0, %s235
      %s252 = sphi 0, %s236
    $region4: #{tpu_custom_call.1} parent=1 // loop_header_branch
      %27 = sbr.rel (%p25) target = $region8
    $region5: #{tpu_custom_call.1} parent=1 // loop_body
      %s29 = ssub.s32 %s24, 1
      %s30 = ssub.s32 %s24, 2
      %s37 = sadd.s32 1, %s32
      %p38 = scmp.ge.s32.totalorder %s37, 1
      %s39 = scalar_select %p38, 0, %s37
      %s40 = sadd.s32 1, %s31
      %s41 = scalar_select %p38, %s40, %s31
      %p42 = scmp.ge.s32.totalorder %s41, 2
      %s43 = scalar_select %p42, 0, %s41
      %s44 = ssub.s32 %s31, %s43
      %s45 = ssub.s32 %s32, %s39
      %s46 = sor.u32 %s44, %s45
      %p47 = scmp.eq.s32.totalorder %s46, 0
      %s49 = sadd.s32 %s48, 1
      %s50 = scalar_select %p47, %s48, %s49
      %p53 = pneg %p47
      %p54 = scmp.eq.s32.totalorder %s24, 1
      %p55 = por %p53, %p54
      %p56 = scmp.ne.s32.totalorder %s48, %s51
      %p57 = scmp.eq.s32.totalorder %s24, 0
      %p58 = por %p56, %p57
      %p59 = scmp.ne.s32.totalorder %s48, %s51
      %p60 = scmp.eq.s32.totalorder %s29, 1
      %p61 = por %p59, %p60
      %p62 = scmp.ne.s32.totalorder %s51, %s52
      %p63 = scmp.eq.s32.totalorder %s29, 0
      %p64 = por %p62, %p63
      %p65 = scmp.ne.s32.totalorder %s51, %s52
      %p66 = scmp.eq.s32.totalorder %s30, 1
      %p67 = por %p65, %p66
      %p69 = scmp.ne.s32.totalorder %s52, %s68
      %p70 = scmp.eq.s32.totalorder %s30, 0
      %p71 = por %p69, %p70
      %s72 = smul.u32 %s32, 16
      %s73 = ssub.s32 %s72, 1
      %p74 = scmp.gt.s32.totalorder %s73, 0
      %s75 = scalar_select %p74, %s73, 0
      %s76 = smul.u32 %s39, 16
      %s77 = ssub.s32 %s76, 1
      %p78 = scmp.gt.s32.totalorder %s77, 0
      %s79 = scalar_select %p78, %s77, 0
      %s80 = ssub.s32 %s31, %s43
      %s81 = ssub.s32 %s75, %s79
      %s82 = sor.u32 %s80, %s81
      %p83 = scmp.eq.s32.totalorder %s82, 0
      %s85 = sadd.s32 %s84, 1
      %s86 = scalar_select %p83, %s84, %s85
      %p89 = pneg %p83
      %p90 = scmp.eq.s32.totalorder %s24, 1
      %p91 = por %p89, %p90
      %p92 = scmp.ne.s32.totalorder %s84, %s87
      %p93 = scmp.eq.s32.totalorder %s24, 0
      %p94 = por %p92, %p93
      %p95 = scmp.ne.s32.totalorder %s84, %s87
      %p96 = scmp.eq.s32.totalorder %s29, 1
      %p97 = por %p95, %p96
      %p98 = scmp.ne.s32.totalorder %s87, %s88
      %p99 = scmp.eq.s32.totalorder %s29, 0
      %p100 = por %p98, %p99
      %p101 = scmp.ne.s32.totalorder %s87, %s88
      %p102 = scmp.eq.s32.totalorder %s30, 1
      %p103 = por %p101, %p102
      %p105 = scmp.ne.s32.totalorder %s88, %s104
      %p106 = scmp.eq.s32.totalorder %s30, 0
      %p107 = por %p105, %p106
      %s108 = sadd.s32 %s32, 1
      %s109 = smul.u32 %s108, 16
      %p110 = scmp.lt.s32.totalorder %s109, 15
      %s111 = scalar_select %p110, %s109, 15
      %s112 = sadd.s32 %s39, 1
      %s113 = smul.u32 %s112, 16
      %p114 = scmp.lt.s32.totalorder %s113, 15
      %s115 = scalar_select %p114, %s113, 15
      %s116 = ssub.s32 %s31, %s43
      %s117 = ssub.s32 %s111, %s115
      %s118 = sor.u32 %s116, %s117
      %p119 = scmp.eq.s32.totalorder %s118, 0
      %s121 = sadd.s32 %s120, 1
      %s122 = scalar_select %p119, %s120, %s121
      %p125 = pneg %p119
      %p126 = scmp.eq.s32.totalorder %s24, 1
      %p127 = por %p125, %p126
      %p128 = scmp.ne.s32.totalorder %s120, %s123
      %p129 = scmp.eq.s32.totalorder %s24, 0
      %p130 = por %p128, %p129
      %p131 = scmp.ne.s32.totalorder %s120, %s123
      %p132 = scmp.eq.s32.totalorder %s29, 1
      %p133 = por %p131, %p132
      %p134 = scmp.ne.s32.totalorder %s123, %s124
      %p135 = scmp.eq.s32.totalorder %s29, 0
      %p136 = por %p134, %p135
      %p137 = scmp.ne.s32.totalorder %s123, %s124
      %p138 = scmp.eq.s32.totalorder %s30, 1
      %p139 = por %p137, %p138
      %p141 = scmp.ne.s32.totalorder %s124, %s140
      %p142 = scmp.eq.s32.totalorder %s30, 0
      %p143 = por %p141, %p142
      %s145 = sadd.s32 %s144, 1
      %p148 = scmp.eq.s32.totalorder %s24, 1
      %p149 = scmp.ne.s32.totalorder %s144, %s146
      %p150 = scmp.eq.s32.totalorder %s24, 0
      %p151 = por %p149, %p150
      %p152 = scmp.ne.s32.totalorder %s144, %s146
      %p153 = scmp.eq.s32.totalorder %s29, 1
      %p154 = por %p152, %p153
      %p155 = scmp.ne.s32.totalorder %s146, %s147
      %p156 = scmp.eq.s32.totalorder %s29, 0
      %p157 = por %p155, %p156
      %p158 = scmp.ne.s32.totalorder %s146, %s147
      %p159 = scmp.eq.s32.totalorder %s30, 1
      %p160 = por %p158, %p159
      %p162 = scmp.ne.s32.totalorder %s147, %s161
      %p163 = scmp.eq.s32.totalorder %s30, 0
      %p164 = por %p162, %p163
      %s166 = sadd.s32 %s165, 1
      %p169 = scmp.eq.s32.totalorder %s24, 1
      %p170 = scmp.ne.s32.totalorder %s165, %s167
      %p171 = scmp.eq.s32.totalorder %s24, 0
      %p172 = por %p170, %p171
      %p173 = scmp.ne.s32.totalorder %s165, %s167
      %p174 = scmp.eq.s32.totalorder %s29, 1
      %p175 = por %p173, %p174
      %p176 = scmp.ne.s32.totalorder %s167, %s168
      %p177 = scmp.eq.s32.totalorder %s29, 0
      %p178 = por %p176, %p177
      %p179 = scmp.ne.s32.totalorder %s167, %s168
      %p180 = scmp.eq.s32.totalorder %s30, 1
      %p181 = por %p179, %p180
      %p183 = scmp.ne.s32.totalorder %s168, %s182
      %p184 = scmp.eq.s32.totalorder %s30, 0
      %p185 = por %p183, %p184
      %s187 = sadd.s32 %s186, 1
      %p190 = scmp.eq.s32.totalorder %s24, 1
      %p191 = scmp.ne.s32.totalorder %s186, %s188
      %p192 = scmp.eq.s32.totalorder %s24, 0
      %p193 = por %p191, %p192
      %p194 = scmp.ne.s32.totalorder %s186, %s188
      %p195 = scmp.eq.s32.totalorder %s29, 1
      %p196 = por %p194, %p195
      %p197 = scmp.ne.s32.totalorder %s188, %s189
      %p198 = scmp.eq.s32.totalorder %s29, 0
      %p199 = por %p197, %p198
      %p200 = scmp.ne.s32.totalorder %s188, %s189
      %p201 = scmp.eq.s32.totalorder %s30, 1
      %p202 = por %p200, %p201
      %p204 = scmp.ne.s32.totalorder %s189, %s203
      %p205 = scmp.eq.s32.totalorder %s30, 0
      %p206 = por %p204, %p205
      %s208 = sadd.s32 %s207, 1
      %p211 = scmp.eq.s32.totalorder %s24, 1
      %p212 = scmp.ne.s32.totalorder %s207, %s209
      %p213 = scmp.eq.s32.totalorder %s24, 0
      %p214 = por %p212, %p213
      %p215 = scmp.ne.s32.totalorder %s207, %s209
      %p216 = scmp.eq.s32.totalorder %s29, 1
      %p217 = por %p215, %p216
      %p218 = scmp.ne.s32.totalorder %s209, %s210
      %p219 = scmp.eq.s32.totalorder %s29, 0
      %p220 = por %p218, %p219
      %p221 = scmp.ne.s32.totalorder %s209, %s210
      %p222 = scmp.eq.s32.totalorder %s30, 1
      %p223 = por %p221, %p222
      %p225 = scmp.ne.s32.totalorder %s210, %s224
      %p226 = scmp.eq.s32.totalorder %s30, 0
      %p227 = por %p225, %p226
      %s228 = ssub.s32 %s31, %s43
      %s229 = ssub.s32 %s32, %s39
      %s230 = sor.u32 %s228, %s229
      %p231 = scmp.eq.s32.totalorder %s230, 0
      %s233 = sadd.s32 %s232, 1
      %s234 = scalar_select %p231, %s232, %s233
      %p237 = pneg %p231
      %p238 = scmp.eq.s32.totalorder %s24, 1
      %p239 = por %p237, %p238
      %p240 = scmp.ne.s32.totalorder %s232, %s235
      %p241 = scmp.eq.s32.totalorder %s24, 0
      %p242 = por %p240, %p241
      %p243 = scmp.ne.s32.totalorder %s232, %s235
      %p244 = scmp.eq.s32.totalorder %s29, 1
      %p245 = por %p243, %p244
      %p246 = scmp.ne.s32.totalorder %s235, %s236
      %p247 = scmp.eq.s32.totalorder %s29, 0
      %p248 = por %p246, %p247
      %p249 = scmp.ne.s32.totalorder %s235, %s236
      %p250 = scmp.eq.s32.totalorder %s30, 1
      %p251 = por %p249, %p250
      %p253 = scmp.ne.s32.totalorder %s236, %s252
      %p254 = scmp.eq.s32.totalorder %s30, 0
      %p255 = por %p253, %p254
      %p256 = scmp.le.s32.totalorder 1, %s24
      %p257 = scmp.lt.s32.totalorder %s24, 3
      %p258 = pnand %p256, %p257
      %p259 = pneg %p258
      // Predicated region
      $region9: #{tpu_custom_call.1} parent=5 // pred_check
        _
      $region10: #{tpu_custom_call.1} parent=5 // pred_check_branch
        %261 = sbr.rel (%p258) target = $region12
      $region11: #{tpu_custom_call.1} parent=5 // pred_region
        %s262 = ssub.s32 %s24, 1
        // Predicated region
        $region13: #{tpu_custom_call.1} parent=11 // pred_check
          %p263 = pneg %p157
        $region14: #{tpu_custom_call.1} parent=11 // pred_check_branch
          %265 = sbr.rel (%p263) target = $region16
        $region15: #{tpu_custom_call.1} parent=11 // pred_region
          %267 = vsyncadd [#allocation9], 0
          %s268 = sshll.u32 %s3, 4
          %s269 = int_to_ptr.hbm [resolvable:$true] %s268
          %s270 = sshll.u32 [#allocation8], 4
          %s271 = int_to_ptr.vmem [resolvable:$true] %s270
          %276 = dma.hbm_to_vmem [thread:$0]  %s269, 1024, %s271, [#allocation9], 64, 64, 4
        $region16: #{tpu_custom_call.1} parent=11 // pred_fallthru
          _
        // Predicated region
        $region17: #{tpu_custom_call.1} parent=11 // pred_check
          %p277 = pneg %p178
        $region18: #{tpu_custom_call.1} parent=11 // pred_check_branch
          %279 = sbr.rel (%p277) target = $region20
        $region19: #{tpu_custom_call.1} parent=11 // pred_region
          %281 = vsyncadd [#allocation9], 0
          %s282 = sshll.u32 %s4, 4
          %s283 = int_to_ptr.hbm [resolvable:$true] %s282
          %s284 = sshll.u32 [#allocation10], 4
          %s285 = int_to_ptr.vmem [resolvable:$true] %s284
          %290 = dma.hbm_to_vmem [thread:$0]  %s283, 9216, %s285, [#allocation9], 64, 64, 4
        $region20: #{tpu_custom_call.1} parent=11 // pred_fallthru
          _
        // Predicated region
        $region21: #{tpu_custom_call.1} parent=11 // pred_check
          %p291 = pneg %p199
        $region22: #{tpu_custom_call.1} parent=11 // pred_check_branch
          %293 = sbr.rel (%p291) target = $region24
        $region23: #{tpu_custom_call.1} parent=11 // pred_region
          %295 = vsyncadd [#allocation12], 0
          %s296 = sshll.u32 %s5, 4
          %s297 = int_to_ptr.hbm [resolvable:$true] %s296
          %s298 = sshll.u32 [#allocation11], 4
          %s299 = int_to_ptr.vmem [resolvable:$true] %s298
          %304 = dma.hbm_to_vmem [thread:$0]  %s297, 1024, %s299, [#allocation12], 64, 64, 4
        $region24: #{tpu_custom_call.1} parent=11 // pred_fallthru
          _
        // Predicated region
        $region25: #{tpu_custom_call.1} parent=11 // pred_check
          %p305 = pneg %p220
        $region26: #{tpu_custom_call.1} parent=11 // pred_check_branch
          %307 = sbr.rel (%p305) target = $region28
        $region27: #{tpu_custom_call.1} parent=11 // pred_region
          _
        $region28: #{tpu_custom_call.1} parent=11 // pred_fallthru
          _
      $region12: #{tpu_custom_call.1} parent=5 // pred_fallthru
        _
      %p308 = scmp.lt.s32.totalorder %s24, 2
      // Predicated region
      $region29: #{tpu_custom_call.1} parent=5 // pred_check
        %p309 = pneg %p308
      $region30: #{tpu_custom_call.1} parent=5 // pred_check_branch
        %311 = sbr.rel (%p309) target = $region32
      $region31: #{tpu_custom_call.1} parent=5 // pred_region
        // Predicated region
        $region33: #{tpu_custom_call.1} parent=31 // pred_check
          %p312 = pneg %p58
        $region34: #{tpu_custom_call.1} parent=31 // pred_check_branch
          %314 = sbr.rel (%p312) target = $region36
        $region35: #{tpu_custom_call.1} parent=31 // pred_region
          %s315 = sand.u32 %s48, 1
          %s316 = scalar_lea.sflag [#allocation3], %s315
          %s317 = sand.u32 %s48, 1
          %s318 = smul.addr %s317, 256
          %s319 = scalar_lea.vmem [#allocation2], %s318
          %s320 = smul.u32 16, %s32
          %322 = vsyncadd %s316, 0
          %s323 = smul.addr %s320, 2
          %s324 = smul.addr %s31, 32
          %s325 = sadd.s32 %s323, %s324
          %s326 = smul.addr %s325, 8
          %s327 = scalar_lea.hbm %s0, %s326
          %s328 = sshll.u32 %s327, 4
          %s329 = int_to_ptr.hbm [resolvable:$true] %s328
          %s330 = sshll.u32 %s319, 4
          %s331 = int_to_ptr.vmem [resolvable:$true] %s330
          %336 = dma.hbm_to_vmem [thread:$0]  %s329, 4096, %s331, %s316, 128, 128, 8
        $region36: #{tpu_custom_call.1} parent=31 // pred_fallthru
          _
        // Predicated region
        $region37: #{tpu_custom_call.1} parent=31 // pred_check
          %p337 = pneg %p94
        $region38: #{tpu_custom_call.1} parent=31 // pred_check_branch
          %339 = sbr.rel (%p337) target = $region40
        $region39: #{tpu_custom_call.1} parent=31 // pred_region
          %s340 = sand.u32 %s24, 1
          %s341 = scalar_lea.sflag [#allocation6], %s340
          %s342 = sand.u32 %s84, 1
          %s343 = smul.addr %s342, 16
          %s344 = scalar_lea.vmem [#allocation5], %s343
          %s345 = smul.u32 %s32, 16
          %s346 = ssub.s32 %s345, 1
          %p347 = scmp.gt.s32.totalorder %s346, 0
          %s348 = scalar_select %p347, %s346, 0
          %350 = vsyncadd %s341, 0
          %s351 = smul.addr %s348, 2
          %s352 = smul.addr %s31, 32
          %s353 = sadd.s32 %s351, %s352
          %s354 = smul.addr %s353, 8
          %s355 = scalar_lea.hbm %s1, %s354
          %s356 = sshll.u32 %s355, 4
          %s357 = int_to_ptr.hbm [resolvable:$true] %s356
          %s358 = sshll.u32 %s344, 4
          %s359 = int_to_ptr.vmem [resolvable:$true] %s358
          %364 = dma.hbm_to_vmem [thread:$0]  %s357, 256, %s359, %s341, 128, 128, 8
        $region40: #{tpu_custom_call.1} parent=31 // pred_fallthru
          _
        // Predicated region
        $region41: #{tpu_custom_call.1} parent=31 // pred_check
          %p365 = pneg %p130
        $region42: #{tpu_custom_call.1} parent=31 // pred_check_branch
          %367 = sbr.rel (%p365) target = $region44
        $region43: #{tpu_custom_call.1} parent=31 // pred_region
          %s368 = sand.u32 %s24, 1
          %s369 = scalar_lea.sflag [#allocation6], %s368
          %s370 = sand.u32 %s120, 1
          %s371 = smul.addr %s370, 16
          %s372 = scalar_lea.vmem [#allocation7], %s371
          %s373 = sadd.s32 %s32, 1
          %s374 = smul.u32 %s373, 16
          %p375 = scmp.lt.s32.totalorder %s374, 15
          %s376 = scalar_select %p375, %s374, 15
          %378 = vsyncadd %s369, 0
          %s379 = smul.addr %s376, 2
          %s380 = smul.addr %s31, 32
          %s381 = sadd.s32 %s379, %s380
          %s382 = smul.addr %s381, 8
          %s383 = scalar_lea.hbm %s2, %s382
          %s384 = sshll.u32 %s383, 4
          %s385 = int_to_ptr.hbm [resolvable:$true] %s384
          %s386 = sshll.u32 %s372, 4
          %s387 = int_to_ptr.vmem [resolvable:$true] %s386
          %392 = dma.hbm_to_vmem [thread:$0]  %s385, 256, %s387, %s369, 128, 128, 8
        $region44: #{tpu_custom_call.1} parent=31 // pred_fallthru
          _
      $region32: #{tpu_custom_call.1} parent=5 // pred_fallthru
        _
      %p393 = scmp.le.s32.totalorder 1, %s24
      %p394 = scmp.lt.s32.totalorder %s24, 3
      %p395 = pnand %p393, %p394
      %p396 = pneg %p395
      // Predicated region
      $region45: #{tpu_custom_call.1} parent=5 // pred_check
        _
      $region46: #{tpu_custom_call.1} parent=5 // pred_check_branch
        %398 = sbr.rel (%p395) target = $region48
      $region47: #{tpu_custom_call.1} parent=5 // pred_region
        %s399 = ssub.s32 %s24, 1
        %s400 = sand.u32 %s51, 1
        %s401 = scalar_lea.sflag [#allocation3], %s400
        %s402 = sand.u32 %s51, 1
        %s403 = smul.addr %s402, 256
        %s404 = scalar_lea.vmem [#allocation2], %s403
        // Predicated region
        $region49: #{tpu_custom_call.1} parent=47 // pred_check
          %p405 = pneg %p64
        $region50: #{tpu_custom_call.1} parent=47 // pred_check_branch
          %407 = sbr.rel (%p405) target = $region52
        $region51: #{tpu_custom_call.1} parent=47 // pred_region
          %409 = dma.done %s401, 4096
        $region52: #{tpu_custom_call.1} parent=47 // pred_fallthru
          _
        %s410 = sand.u32 %s29, 1
        %s411 = scalar_lea.sflag [#allocation6], %s410
        %s412 = sand.u32 %s87, 1
        %s413 = smul.addr %s412, 16
        %s414 = scalar_lea.vmem [#allocation5], %s413
        // Predicated region
        $region53: #{tpu_custom_call.1} parent=47 // pred_check
          %p415 = pneg %p100
        $region54: #{tpu_custom_call.1} parent=47 // pred_check_branch
          %417 = sbr.rel (%p415) target = $region56
        $region55: #{tpu_custom_call.1} parent=47 // pred_region
          %419 = dma.done %s411, 256
        $region56: #{tpu_custom_call.1} parent=47 // pred_fallthru
          _
        %s420 = sand.u32 %s29, 1
        %s421 = scalar_lea.sflag [#allocation6], %s420
        %s422 = sand.u32 %s123, 1
        %s423 = smul.addr %s422, 16
        %s424 = scalar_lea.vmem [#allocation7], %s423
        // Predicated region
        $region57: #{tpu_custom_call.1} parent=47 // pred_check
          %p425 = pneg %p136
        $region58: #{tpu_custom_call.1} parent=47 // pred_check_branch
          %427 = sbr.rel (%p425) target = $region60
        $region59: #{tpu_custom_call.1} parent=47 // pred_region
          %429 = dma.done %s421, 256
        $region60: #{tpu_custom_call.1} parent=47 // pred_fallthru
          _
        // Predicated region
        $region61: #{tpu_custom_call.1} parent=47 // pred_check
          %p430 = pneg %p157
        $region62: #{tpu_custom_call.1} parent=47 // pred_check_branch
          %432 = sbr.rel (%p430) target = $region64
        $region63: #{tpu_custom_call.1} parent=47 // pred_region
          %434 = dma.done [#allocation9], 1024
        $region64: #{tpu_custom_call.1} parent=47 // pred_fallthru
          _
        // Predicated region
        $region65: #{tpu_custom_call.1} parent=47 // pred_check
          %p435 = pneg %p178
        $region66: #{tpu_custom_call.1} parent=47 // pred_check_branch
          %437 = sbr.rel (%p435) target = $region68
        $region67: #{tpu_custom_call.1} parent=47 // pred_region
          %439 = dma.done [#allocation9], 9216
        $region68: #{tpu_custom_call.1} parent=47 // pred_fallthru
          _
        // Predicated region
        $region69: #{tpu_custom_call.1} parent=47 // pred_check
          %p440 = pneg %p199
        $region70: #{tpu_custom_call.1} parent=47 // pred_check_branch
          %442 = sbr.rel (%p440) target = $region72
        $region71: #{tpu_custom_call.1} parent=47 // pred_region
          %444 = dma.done [#allocation12], 1024
        $region72: #{tpu_custom_call.1} parent=47 // pred_fallthru
          _
        %s445 = sand.u32 %s51, 1
        %s446 = scalar_lea.sflag [#allocation3], %s445
        %s447 = sand.u32 %s51, 1
        %s448 = smul.addr %s447, 256
        %s449 = scalar_lea.vmem [#allocation2], %s448
        %p450 = pneg %p64
        %p451 = pneg %p61
        %s452 = sand.u32 %s29, 1
        %s453 = scalar_lea.sflag [#allocation6], %s452
        %s454 = sand.u32 %s87, 1
        %s455 = smul.addr %s454, 16
        %s456 = scalar_lea.vmem [#allocation5], %s455
        %p457 = pneg %p100
        %p458 = pneg %p97
        %s459 = sand.u32 %s29, 1
        %s460 = scalar_lea.sflag [#allocation6], %s459
        %s461 = sand.u32 %s123, 1
        %s462 = smul.addr %s461, 16
        %s463 = scalar_lea.vmem [#allocation7], %s462
        %p464 = pneg %p136
        %p465 = pneg %p133
        %p466 = pneg %p157
        %p467 = pneg %p154
        %p468 = pneg %p178
        %p469 = pneg %p175
        %p470 = pneg %p199
        %p471 = pneg %p196
        %p472 = pneg %p220
        %p473 = pneg %p217
        %p474 = pneg %p248
        %p475 = pneg %p245
        %s476 = sand.u32 %s235, 1
        %s477 = scalar_lea.sflag [#allocation4], %s476
        %s478 = sand.u32 %s235, 1
        %s479 = smul.addr %s478, 256
        %s480 = scalar_lea.vmem [#allocation13], %s479
        %s481 = smul.u32 16, %s34
        %s482 = smul.u32 %s34, 16
        %s483 = ssub.s32 %s482, 1
        %p484 = scmp.gt.s32.totalorder %s483, 0
        %s485 = scalar_select %p484, %s483, 0
        %s486 = sadd.s32 %s34, 1
        %s487 = smul.u32 %s486, 16
        %p488 = scmp.lt.s32.totalorder %s487, 15
        %s489 = scalar_select %p488, %s487, 15
        %s490 = smul.u32 16, %s34
        %v492 = vld [vmem:[%s6] sm:$0x1]
        %v493 = vld [vmem:[%s6 + $0x1] sm:$0x1]
        %v494 = vld [vmem:[%s6 + $0x2] sm:$0x1]
        %v495 = vld [vmem:[#allocation8] sm:$0xf]
        %v496 = vld [vmem:[#allocation8 + $0x4] sm:$0xf]
        %v497 = vld [vmem:[#allocation8 + $0x8] sm:$0xf]
        %v498 = vld [vmem:[#allocation8 + $0xc] sm:$0xf]
        %v499 = vld [vmem:[#allocation8 + $0x10] sm:$0xf]
        %v500 = vld [vmem:[#allocation8 + $0x14] sm:$0xf]
        %v501 = vld [vmem:[#allocation8 + $0x18] sm:$0xf]
        %v502 = vld [vmem:[#allocation8 + $0x1c] sm:$0xf]
        %v503 = vld [vmem:[#allocation8 + $0x20] sm:$0xf]
        %v504 = vld [vmem:[#allocation8 + $0x24] sm:$0xf]
        %v505 = vld [vmem:[#allocation8 + $0x28] sm:$0xf]
        %v506 = vld [vmem:[#allocation8 + $0x2c] sm:$0xf]
        %v507 = vld [vmem:[#allocation8 + $0x30] sm:$0xf]
        %v508 = vld [vmem:[#allocation8 + $0x34] sm:$0xf]
        %v509 = vld [vmem:[#allocation8 + $0x38] sm:$0xf]
        %v510 = vld [vmem:[#allocation8 + $0x3c] sm:$0xf]
        %v511 = vld [vmem:[%s404] sm:$0xff]
        %v512 = vld [vmem:[%s404 + $0x8] sm:$0xff]
        %v513 = vld [vmem:[%s404 + $0x10] sm:$0xff]
        %v514 = vld [vmem:[%s404 + $0x18] sm:$0xff]
        %v515 = vld [vmem:[%s404 + $0x20] sm:$0xff]
        %v516 = vld [vmem:[%s404 + $0x28] sm:$0xff]
        %v517 = vld [vmem:[%s404 + $0x30] sm:$0xff]
        %v518 = vld [vmem:[%s404 + $0x38] sm:$0xff]
        %v519 = vld [vmem:[%s404 + $0x40] sm:$0xff]
        %v520 = vld [vmem:[%s404 + $0x48] sm:$0xff]
        %v521 = vld [vmem:[%s404 + $0x50] sm:$0xff]
        %v522 = vld [vmem:[%s404 + $0x58] sm:$0xff]
        %v523 = vld [vmem:[%s404 + $0x60] sm:$0xff]
        %v524 = vld [vmem:[%s404 + $0x68] sm:$0xff]
        %v525 = vld [vmem:[%s404 + $0x70] sm:$0xff]
        %v526 = vld [vmem:[%s404 + $0x78] sm:$0xff]
        %v527 = vld [vmem:[%s404 + $0x80] sm:$0xff]
        %v528 = vld [vmem:[%s404 + $0x88] sm:$0xff]
        %v529 = vld [vmem:[%s404 + $0x90] sm:$0xff]
        %v530 = vld [vmem:[%s404 + $0x98] sm:$0xff]
        %v531 = vld [vmem:[%s404 + $0xa0] sm:$0xff]
        %v532 = vld [vmem:[%s404 + $0xa8] sm:$0xff]
        %v533 = vld [vmem:[%s404 + $0xb0] sm:$0xff]
        %v534 = vld [vmem:[%s404 + $0xb8] sm:$0xff]
        %v535 = vld [vmem:[%s404 + $0xc0] sm:$0xff]
        %v536 = vld [vmem:[%s404 + $0xc8] sm:$0xff]
        %v537 = vld [vmem:[%s404 + $0xd0] sm:$0xff]
        %v538 = vld [vmem:[%s404 + $0xd8] sm:$0xff]
        %v539 = vld [vmem:[%s404 + $0xe0] sm:$0xff]
        %v540 = vld [vmem:[%s404 + $0xe8] sm:$0xff]
        %v541 = vld [vmem:[%s404 + $0xf0] sm:$0xff]
        %v542 = vld [vmem:[%s404 + $0xf8] sm:$0xff]
        %v543 = vpack.c.bf16 %v512, %v511
        %v544 = vpack.c.bf16 %v514, %v513
        %v545 = vpack.c.bf16 %v516, %v515
        %v546 = vpack.c.bf16 %v518, %v517
        %v547 = vpack.c.bf16 %v520, %v519
        %v548 = vpack.c.bf16 %v522, %v521
        %v549 = vpack.c.bf16 %v524, %v523
        %v550 = vpack.c.bf16 %v526, %v525
        %v551 = vpack.c.bf16 %v528, %v527
        %v552 = vpack.c.bf16 %v530, %v529
        %v553 = vpack.c.bf16 %v532, %v531
        %v554 = vpack.c.bf16 %v534, %v533
        %v555 = vpack.c.bf16 %v536, %v535
        %v556 = vpack.c.bf16 %v538, %v537
        %v557 = vpack.c.bf16 %v540, %v539
        %v558 = vpack.c.bf16 %v542, %v541
        %v559 = vperm.slane %v492, 0
        %v576 = vunpack.c.l.b16 %v495
        %v577 = vunpack.c.l.b16 %v496
        %v578 = vunpack.c.l.b16 %v497
        %v579 = vunpack.c.l.b16 %v498
        %v580 = vunpack.c.l.b16 %v499
        %v581 = vunpack.c.l.b16 %v500
        %v582 = vunpack.c.l.b16 %v501
        %v583 = vunpack.c.l.b16 %v502
        %v584 = vunpack.c.l.b16 %v503
        %v585 = vunpack.c.l.b16 %v504
        %v586 = vunpack.c.l.b16 %v505
        %v587 = vunpack.c.l.b16 %v506
        %v588 = vunpack.c.l.b16 %v507
        %v589 = vunpack.c.l.b16 %v508
        %v590 = vunpack.c.l.b16 %v509
        %v591 = vunpack.c.l.b16 %v510
        %v592 = vpack.c.b16 %v577, %v576
        %v593 = vpack.c.b16 %v579, %v578
        %v594 = vpack.c.b16 %v581, %v580
        %v595 = vpack.c.b16 %v583, %v582
        %v596 = vpack.c.b16 %v585, %v584
        %v597 = vpack.c.b16 %v587, %v586
        %v598 = vpack.c.b16 %v589, %v588
        %v599 = vpack.c.b16 %v591, %v590
        %608 = vmatpush.bf16.msra.mxu0 %v599
        %609 = vmatpush.bf16.msra.mxu0 %v598
        %610 = vmatpush.bf16.msra.mxu0 %v597
        %611 = vmatpush.bf16.msra.mxu0 %v596
        %612 = vmatpush.bf16.msra.mxu0 %v595
        %613 = vmatpush.bf16.msra.mxu0 %v594
        %614 = vmatpush.bf16.msra.mxu0 %v593
        %615 = vmatpush.bf16.msra.mxu0 %v592
        %616 = vmatmul.bf16.gmra.mxu0 %v543
        %v617 = vpop.f32.mrf.mxu0
        %v618 = vadd.f32 %v559, %v617
        %v619 = vpop.f32.mrf.mxu0
        %v620 = vadd.f32 %v559, %v619
        %621 = vmatmul.bf16.gmra.mxu0 %v544
        %v622 = vpop.f32.mrf.mxu0
        %v623 = vadd.f32 %v559, %v622
        %v624 = vpop.f32.mrf.mxu0
        %v625 = vadd.f32 %v559, %v624
        %626 = vmatmul.bf16.gmra.mxu0 %v545
        %v627 = vpop.f32.mrf.mxu0
        %v628 = vadd.f32 %v559, %v627
        %v629 = vpop.f32.mrf.mxu0
        %v630 = vadd.f32 %v559, %v629
        %631 = vmatmul.bf16.gmra.mxu0 %v546
        %v632 = vpop.f32.mrf.mxu0
        %v633 = vadd.f32 %v559, %v632
        %v634 = vpop.f32.mrf.mxu0
        %v635 = vadd.f32 %v559, %v634
        %636 = vmatmul.bf16.gmra.mxu0 %v547
        %v637 = vpop.f32.mrf.mxu0
        %v638 = vadd.f32 %v559, %v637
        %v639 = vpop.f32.mrf.mxu0
        %v640 = vadd.f32 %v559, %v639
        %641 = vmatmul.bf16.gmra.mxu0 %v548
        %v642 = vpop.f32.mrf.mxu0
        %v643 = vadd.f32 %v559, %v642
        %v644 = vpop.f32.mrf.mxu0
        %v645 = vadd.f32 %v559, %v644
        %646 = vmatmul.bf16.gmra.mxu0 %v549
        %v647 = vpop.f32.mrf.mxu0
        %v648 = vadd.f32 %v559, %v647
        %v649 = vpop.f32.mrf.mxu0
        %v650 = vadd.f32 %v559, %v649
        %651 = vmatmul.bf16.gmra.mxu0 %v550
        %v652 = vpop.f32.mrf.mxu0
        %v653 = vadd.f32 %v559, %v652
        %v654 = vpop.f32.mrf.mxu0
        %v655 = vadd.f32 %v559, %v654
        %656 = vmatmul.bf16.gmra.mxu0 %v551
        %v657 = vpop.f32.mrf.mxu0
        %v658 = vadd.f32 %v559, %v657
        %v659 = vpop.f32.mrf.mxu0
        %v660 = vadd.f32 %v559, %v659
        %661 = vmatmul.bf16.gmra.mxu0 %v552
        %v662 = vpop.f32.mrf.mxu0
        %v663 = vadd.f32 %v559, %v662
        %v664 = vpop.f32.mrf.mxu0
        %v665 = vadd.f32 %v559, %v664
        %666 = vmatmul.bf16.gmra.mxu0 %v553
        %v667 = vpop.f32.mrf.mxu0
        %v668 = vadd.f32 %v559, %v667
        %v669 = vpop.f32.mrf.mxu0
        %v670 = vadd.f32 %v559, %v669
        %671 = vmatmul.bf16.gmra.mxu0 %v554
        %v672 = vpop.f32.mrf.mxu0
        %v673 = vadd.f32 %v559, %v672
        %v674 = vpop.f32.mrf.mxu0
        %v675 = vadd.f32 %v559, %v674
        %676 = vmatmul.bf16.gmra.mxu0 %v555
        %v677 = vpop.f32.mrf.mxu0
        %v678 = vadd.f32 %v559, %v677
        %v679 = vpop.f32.mrf.mxu0
        %v680 = vadd.f32 %v559, %v679
        %681 = vmatmul.bf16.gmra.mxu0 %v556
        %v682 = vpop.f32.mrf.mxu0
        %v683 = vadd.f32 %v559, %v682
        %v684 = vpop.f32.mrf.mxu0
        %v685 = vadd.f32 %v559, %v684
        %686 = vmatmul.bf16.gmra.mxu0 %v557
        %v687 = vpop.f32.mrf.mxu0
        %v688 = vadd.f32 %v559, %v687
        %v689 = vpop.f32.mrf.mxu0
        %v690 = vadd.f32 %v559, %v689
        %691 = vmatmul.bf16.gmra.mxu0 %v558
        %v692 = vpop.f32.mrf.mxu0
        %v693 = vadd.f32 %v559, %v692
        %v694 = vpop.f32.mrf.mxu0
        %v695 = vadd.f32 %v559, %v694
        %696 = vdwg.mxu0
        %v697 = vmax.f32 %v618, 0.0
        %v698 = vmax.f32 %v620, 0.0
        %v699 = vmax.f32 %v623, 0.0
        %v700 = vmax.f32 %v625, 0.0
        %v701 = vmax.f32 %v628, 0.0
        %v702 = vmax.f32 %v630, 0.0
        %v703 = vmax.f32 %v633, 0.0
        %v704 = vmax.f32 %v635, 0.0
        %v705 = vmax.f32 %v638, 0.0
        %v706 = vmax.f32 %v640, 0.0
        %v707 = vmax.f32 %v643, 0.0
        %v708 = vmax.f32 %v645, 0.0
        %v709 = vmax.f32 %v648, 0.0
        %v710 = vmax.f32 %v650, 0.0
        %v711 = vmax.f32 %v653, 0.0
        %v712 = vmax.f32 %v655, 0.0
        %v713 = vmax.f32 %v658, 0.0
        %v714 = vmax.f32 %v660, 0.0
        %v715 = vmax.f32 %v663, 0.0
        %v716 = vmax.f32 %v665, 0.0
        %v717 = vmax.f32 %v668, 0.0
        %v718 = vmax.f32 %v670, 0.0
        %v719 = vmax.f32 %v673, 0.0
        %v720 = vmax.f32 %v675, 0.0
        %v721 = vmax.f32 %v678, 0.0
        %v722 = vmax.f32 %v680, 0.0
        %v723 = vmax.f32 %v683, 0.0
        %v724 = vmax.f32 %v685, 0.0
        %v725 = vmax.f32 %v688, 0.0
        %v726 = vmax.f32 %v690, 0.0
        %v727 = vmax.f32 %v693, 0.0
        %v728 = vmax.f32 %v695, 0.0
        %v729 = vpack.c.bf16 %v697, %v697
        %v730 = vpack.c.bf16 %v698, %v698
        %v731 = vpack.c.bf16 %v699, %v699
        %v732 = vpack.c.bf16 %v700, %v700
        %v733 = vpack.c.bf16 %v701, %v701
        %v734 = vpack.c.bf16 %v702, %v702
        %v735 = vpack.c.bf16 %v703, %v703
        %v736 = vpack.c.bf16 %v704, %v704
        %v737 = vpack.c.bf16 %v705, %v705
        %v738 = vpack.c.bf16 %v706, %v706
        %v739 = vpack.c.bf16 %v707, %v707
        %v740 = vpack.c.bf16 %v708, %v708
        %v741 = vpack.c.bf16 %v709, %v709
        %v742 = vpack.c.bf16 %v710, %v710
        %v743 = vpack.c.bf16 %v711, %v711
        %v744 = vpack.c.bf16 %v712, %v712
        %v745 = vpack.c.bf16 %v713, %v713
        %v746 = vpack.c.bf16 %v714, %v714
        %v747 = vpack.c.bf16 %v715, %v715
        %v748 = vpack.c.bf16 %v716, %v716
        %v749 = vpack.c.bf16 %v717, %v717
        %v750 = vpack.c.bf16 %v718, %v718
        %v751 = vpack.c.bf16 %v719, %v719
        %v752 = vpack.c.bf16 %v720, %v720
        %v753 = vpack.c.bf16 %v721, %v721
        %v754 = vpack.c.bf16 %v722, %v722
        %v755 = vpack.c.bf16 %v723, %v723
        %v756 = vpack.c.bf16 %v724, %v724
        %v757 = vpack.c.bf16 %v725, %v725
        %v758 = vpack.c.bf16 %v726, %v726
        %v759 = vpack.c.bf16 %v727, %v727
        %v760 = vpack.c.bf16 %v728, %v728
        %v761 = vld [vmem:[%s414] sm:$0xff]
        %v762 = vld [vmem:[%s414 + $0x8] sm:$0xff]
        %v763 = vpack.c.bf16 %v762, %v761
        %p764 = scmp.gt.s32.totalorder %s34, 0
        %765 = vmatpush.bf16.msra.mxu0 %v599
        %766 = vmatpush.bf16.msra.mxu0 %v598
        %767 = vmatpush.bf16.msra.mxu0 %v597
        %768 = vmatpush.bf16.msra.mxu0 %v596
        %769 = vmatpush.bf16.msra.mxu0 %v595
        %770 = vmatpush.bf16.msra.mxu0 %v594
        %771 = vmatpush.bf16.msra.mxu0 %v593
        %772 = vmatpush.bf16.msra.mxu0 %v592
        %773 = vmatmul.bf16.gmra.mxu0 %v763
        %v774 = vpop.f32.mrf.mxu0
        %v775 = vadd.f32 %v559, %v774
        %v776 = vpop.f32.mrf.mxu0
        %v777 = vadd.f32 %v559, %v776
        %778 = vdwg.mxu0
        %v779 = vmax.f32 %v775, 0.0
        %v780 = vmax.f32 %v777, 0.0
        %s781 = scalar_select %p764, 1, 0
        %v782 = vstv %s781
        %vm783 = vcmp.eq.s32.totalorder %v782, 1
        %v784 = vsel %vm783, %v779, 0.0
        %v785 = vsel %vm783, %v780, 0.0
        %v786 = vld [vmem:[%s424] sm:$0xff]
        %v787 = vld [vmem:[%s424 + $0x8] sm:$0xff]
        %v788 = vpack.c.bf16 %v787, %v786
        %p789 = scmp.lt.s32.totalorder %s34, 0
        %790 = vmatpush.bf16.msra.mxu0 %v599
        %791 = vmatpush.bf16.msra.mxu0 %v598
        %792 = vmatpush.bf16.msra.mxu0 %v597
        %793 = vmatpush.bf16.msra.mxu0 %v596
        %794 = vmatpush.bf16.msra.mxu0 %v595
        %795 = vmatpush.bf16.msra.mxu0 %v594
        %796 = vmatpush.bf16.msra.mxu0 %v593
        %797 = vmatpush.bf16.msra.mxu0 %v592
        %798 = vmatmul.bf16.gmra.mxu0 %v788
        %v799 = vpop.f32.mrf.mxu0
        %v800 = vadd.f32 %v559, %v799
        %v801 = vpop.f32.mrf.mxu0
        %v802 = vadd.f32 %v559, %v801
        %803 = vdwg.mxu0
        %v804 = vmax.f32 %v800, 0.0
        %v805 = vmax.f32 %v802, 0.0
        %s806 = scalar_select %p789, 1, 0
        %v807 = vstv %s806
        %vm808 = vcmp.eq.s32.totalorder %v807, 1
        %v809 = vsel %vm808, %v804, 0.0
        %v810 = vsel %vm808, %v805, 0.0
        %v811 = vpack.c.bf16 %v784, %v784
        %v812 = vpack.c.bf16 %v785, %v785
        %v813 = vpack.c.bf16 %v809, %v809
        %v814 = vpack.c.bf16 %v810, %v810
        %v851 = vunpack.c.l.b16 %v811
        %v852 = vunpack.c.l.b16 %v812
        %v853 = vunpack.c.l.b16 %v729
        %v854 = vunpack.c.l.b16 %v730
        %v855 = vunpack.c.l.b16 %v731
        %v856 = vunpack.c.l.b16 %v732
        %v857 = vunpack.c.l.b16 %v733
        %v858 = vunpack.c.l.b16 %v734
        %v859 = vunpack.c.l.b16 %v735
        %v860 = vunpack.c.l.b16 %v736
        %v861 = vunpack.c.l.b16 %v737
        %v862 = vunpack.c.l.b16 %v738
        %v863 = vunpack.c.l.b16 %v739
        %v864 = vunpack.c.l.b16 %v740
        %v865 = vunpack.c.l.b16 %v741
        %v866 = vunpack.c.l.b16 %v742
        %v867 = vunpack.c.l.b16 %v743
        %v868 = vunpack.c.l.b16 %v744
        %v869 = vunpack.c.l.b16 %v745
        %v870 = vunpack.c.l.b16 %v746
        %v871 = vunpack.c.l.b16 %v747
        %v872 = vunpack.c.l.b16 %v748
        %v873 = vunpack.c.l.b16 %v749
        %v874 = vunpack.c.l.b16 %v750
        %v875 = vunpack.c.l.b16 %v751
        %v876 = vunpack.c.l.b16 %v752
        %v877 = vunpack.c.l.b16 %v753
        %v878 = vunpack.c.l.b16 %v754
        %v879 = vunpack.c.l.b16 %v755
        %v880 = vunpack.c.l.b16 %v756
        %v881 = vunpack.c.l.b16 %v757
        %v882 = vunpack.c.l.b16 %v758
        %v883 = vunpack.c.l.b16 %v759
        %v884 = vunpack.c.l.b16 %v760
        %v885 = vunpack.c.l.b16 %v813
        %v886 = vunpack.c.l.b16 %v814
        %v887 = vpack.c.b16 %v852, %v851
        %v888 = vpack.c.b16 %v854, %v853
        %v889 = vpack.c.b16 %v856, %v855
        %v890 = vpack.c.b16 %v858, %v857
        %v891 = vpack.c.b16 %v860, %v859
        %v892 = vpack.c.b16 %v862, %v861
        %v893 = vpack.c.b16 %v864, %v863
        %v894 = vpack.c.b16 %v866, %v865
        %v895 = vpack.c.b16 %v868, %v867
        %v896 = vpack.c.b16 %v870, %v869
        %v897 = vpack.c.b16 %v872, %v871
        %v898 = vpack.c.b16 %v874, %v873
        %v899 = vpack.c.b16 %v876, %v875
        %v900 = vpack.c.b16 %v878, %v877
        %v901 = vpack.c.b16 %v880, %v879
        %v902 = vpack.c.b16 %v882, %v881
        %v903 = vpack.c.b16 %v884, %v883
        %v904 = vpack.c.b16 %v886, %v885
        %v906 = vshrl.u32 %v887, 16
        %v908 = vrot.slane %v906, 7
        %v909 = vshll.u32 %v887, 16
        %v911 = vor.u32 %v908, %v909
        %v913 = vshrl.u32 %v888, 16
        %v915 = vrot.slane %v913, 7
        %v916 = vshll.u32 %v888, 16
        %v918 = vor.u32 %v915, %v916
        %v920 = vshrl.u32 %v889, 16
        %v922 = vrot.slane %v920, 7
        %v923 = vshll.u32 %v889, 16
        %v925 = vor.u32 %v922, %v923
        %v927 = vshrl.u32 %v890, 16
        %v929 = vrot.slane %v927, 7
        %v930 = vshll.u32 %v890, 16
        %v932 = vor.u32 %v929, %v930
        %v934 = vshrl.u32 %v891, 16
        %v936 = vrot.slane %v934, 7
        %v937 = vshll.u32 %v891, 16
        %v939 = vor.u32 %v936, %v937
        %v941 = vshrl.u32 %v892, 16
        %v943 = vrot.slane %v941, 7
        %v944 = vshll.u32 %v892, 16
        %v946 = vor.u32 %v943, %v944
        %v948 = vshrl.u32 %v893, 16
        %v950 = vrot.slane %v948, 7
        %v951 = vshll.u32 %v893, 16
        %v953 = vor.u32 %v950, %v951
        %v955 = vshrl.u32 %v894, 16
        %v957 = vrot.slane %v955, 7
        %v958 = vshll.u32 %v894, 16
        %v960 = vor.u32 %v957, %v958
        %v962 = vshrl.u32 %v895, 16
        %v964 = vrot.slane %v962, 7
        %v965 = vshll.u32 %v895, 16
        %v967 = vor.u32 %v964, %v965
        %v969 = vshrl.u32 %v896, 16
        %v971 = vrot.slane %v969, 7
        %v972 = vshll.u32 %v896, 16
        %v974 = vor.u32 %v971, %v972
        %v976 = vshrl.u32 %v897, 16
        %v978 = vrot.slane %v976, 7
        %v979 = vshll.u32 %v897, 16
        %v981 = vor.u32 %v978, %v979
        %v983 = vshrl.u32 %v898, 16
        %v985 = vrot.slane %v983, 7
        %v986 = vshll.u32 %v898, 16
        %v988 = vor.u32 %v985, %v986
        %v990 = vshrl.u32 %v899, 16
        %v992 = vrot.slane %v990, 7
        %v993 = vshll.u32 %v899, 16
        %v995 = vor.u32 %v992, %v993
        %v997 = vshrl.u32 %v900, 16
        %v999 = vrot.slane %v997, 7
        %v1000 = vshll.u32 %v900, 16
        %v1002 = vor.u32 %v999, %v1000
        %v1004 = vshrl.u32 %v901, 16
        %v1006 = vrot.slane %v1004, 7
        %v1007 = vshll.u32 %v901, 16
        %v1009 = vor.u32 %v1006, %v1007
        %v1011 = vshrl.u32 %v902, 16
        %v1013 = vrot.slane %v1011, 7
        %v1014 = vshll.u32 %v902, 16
        %v1016 = vor.u32 %v1013, %v1014
        %v1018 = vshrl.u32 %v903, 16
        %v1020 = vrot.slane %v1018, 7
        %v1021 = vshll.u32 %v903, 16
        %v1023 = vor.u32 %v1020, %v1021
        %v1025 = vshrl.u32 %v904, 16
        %v1027 = vrot.slane %v1025, 7
        %v1028 = vshll.u32 %v904, 16
        %v1030 = vor.u32 %v1027, %v1028
        %vm1049 = vcmask 1040384
        %vm1050 = vsmask.f32 256
        %vm1051 = vmand %vm1049, %vm1050
        %v1052 = vsel %vm1051, 0, %v911
        %v1053 = vsel %vm1051, 0, %v918
        %v1054 = vsel %vm1051, 0, %v925
        %v1055 = vsel %vm1051, 0, %v932
        %v1056 = vsel %vm1051, 0, %v939
        %v1057 = vsel %vm1051, 0, %v946
        %v1058 = vsel %vm1051, 0, %v953
        %v1059 = vsel %vm1051, 0, %v960
        %v1060 = vsel %vm1051, 0, %v967
        %v1061 = vsel %vm1051, 0, %v974
        %v1062 = vsel %vm1051, 0, %v981
        %v1063 = vsel %vm1051, 0, %v988
        %v1064 = vsel %vm1051, 0, %v995
        %v1065 = vsel %vm1051, 0, %v1002
        %v1066 = vsel %vm1051, 0, %v1009
        %v1067 = vsel %vm1051, 0, %v1016
        %v1068 = vsel %vm1051, 0, %v1023
        %v1069 = vsel %vm1051, 0, %v1030
        %v1070 = vrot.slane %v909, 1
        %v1071 = vor.u32 %v906, %v1070
        %v1072 = vrot.slane %v916, 1
        %v1073 = vor.u32 %v913, %v1072
        %v1074 = vrot.slane %v923, 1
        %v1075 = vor.u32 %v920, %v1074
        %v1076 = vrot.slane %v930, 1
        %v1077 = vor.u32 %v927, %v1076
        %v1078 = vrot.slane %v937, 1
        %v1079 = vor.u32 %v934, %v1078
        %v1080 = vrot.slane %v944, 1
        %v1081 = vor.u32 %v941, %v1080
        %v1082 = vrot.slane %v951, 1
        %v1083 = vor.u32 %v948, %v1082
        %v1084 = vrot.slane %v958, 1
        %v1085 = vor.u32 %v955, %v1084
        %v1086 = vrot.slane %v965, 1
        %v1087 = vor.u32 %v962, %v1086
        %v1088 = vrot.slane %v972, 1
        %v1089 = vor.u32 %v969, %v1088
        %v1090 = vrot.slane %v979, 1
        %v1091 = vor.u32 %v976, %v1090
        %v1092 = vrot.slane %v986, 1
        %v1093 = vor.u32 %v983, %v1092
        %v1094 = vrot.slane %v993, 1
        %v1095 = vor.u32 %v990, %v1094
        %v1096 = vrot.slane %v1000, 1
        %v1097 = vor.u32 %v997, %v1096
        %v1098 = vrot.slane %v1007, 1
        %v1099 = vor.u32 %v1004, %v1098
        %v1100 = vrot.slane %v1014, 1
        %v1101 = vor.u32 %v1011, %v1100
        %v1102 = vrot.slane %v1021, 1
        %v1103 = vor.u32 %v1018, %v1102
        %v1104 = vrot.slane %v1028, 1
        %v1105 = vor.u32 %v1025, %v1104
        %vm1124 = vcmask 1047552
        %vm1125 = vsmask.f32 7424
        %vm1126 = vmand %vm1124, %vm1125
        %v1127 = vsel %vm1126, %v1071, 0
        %v1128 = vsel %vm1126, %v1073, 0
        %v1129 = vsel %vm1126, %v1075, 0
        %v1130 = vsel %vm1126, %v1077, 0
        %v1131 = vsel %vm1126, %v1079, 0
        %v1132 = vsel %vm1126, %v1081, 0
        %v1133 = vsel %vm1126, %v1083, 0
        %v1134 = vsel %vm1126, %v1085, 0
        %v1135 = vsel %vm1126, %v1087, 0
        %v1136 = vsel %vm1126, %v1089, 0
        %v1137 = vsel %vm1126, %v1091, 0
        %v1138 = vsel %vm1126, %v1093, 0
        %v1139 = vsel %vm1126, %v1095, 0
        %v1140 = vsel %vm1126, %v1097, 0
        %v1141 = vsel %vm1126, %v1099, 0
        %v1142 = vsel %vm1126, %v1101, 0
        %v1143 = vsel %vm1126, %v1103, 0
        %v1144 = vsel %vm1126, %v1105, 0
        %v1145 = vld [vmem:[#allocation10] sm:$0xf]
        %v1146 = vld [vmem:[#allocation10 + $0x4] sm:$0xf]
        %v1147 = vld [vmem:[#allocation10 + $0x8] sm:$0xf]
        %v1148 = vld [vmem:[#allocation10 + $0xc] sm:$0xf]
        %v1149 = vld [vmem:[#allocation10 + $0x10] sm:$0xf]
        %v1150 = vld [vmem:[#allocation10 + $0x14] sm:$0xf]
        %v1151 = vld [vmem:[#allocation10 + $0x18] sm:$0xf]
        %v1152 = vld [vmem:[#allocation10 + $0x1c] sm:$0xf]
        %v1153 = vld [vmem:[#allocation10 + $0x20] sm:$0xf]
        %v1154 = vld [vmem:[#allocation10 + $0x24] sm:$0xf]
        %v1155 = vld [vmem:[#allocation10 + $0x28] sm:$0xf]
        %v1156 = vld [vmem:[#allocation10 + $0x2c] sm:$0xf]
        %v1157 = vld [vmem:[#allocation10 + $0x30] sm:$0xf]
        %v1158 = vld [vmem:[#allocation10 + $0x34] sm:$0xf]
        %v1159 = vld [vmem:[#allocation10 + $0x38] sm:$0xf]
        %v1160 = vld [vmem:[#allocation10 + $0x3c] sm:$0xf]
        %v1161 = vld [vmem:[#allocation10 + $0x40] sm:$0xf]
        %v1162 = vld [vmem:[#allocation10 + $0x44] sm:$0xf]
        %v1163 = vld [vmem:[#allocation10 + $0x48] sm:$0xf]
        %v1164 = vld [vmem:[#allocation10 + $0x4c] sm:$0xf]
        %v1165 = vld [vmem:[#allocation10 + $0x50] sm:$0xf]
        %v1166 = vld [vmem:[#allocation10 + $0x54] sm:$0xf]
        %v1167 = vld [vmem:[#allocation10 + $0x58] sm:$0xf]
        %v1168 = vld [vmem:[#allocation10 + $0x5c] sm:$0xf]
        %v1169 = vld [vmem:[#allocation10 + $0x60] sm:$0xf]
        %v1170 = vld [vmem:[#allocation10 + $0x64] sm:$0xf]
        %v1171 = vld [vmem:[#allocation10 + $0x68] sm:$0xf]
        %v1172 = vld [vmem:[#allocation10 + $0x6c] sm:$0xf]
        %v1173 = vld [vmem:[#allocation10 + $0x70] sm:$0xf]
        %v1174 = vld [vmem:[#allocation10 + $0x74] sm:$0xf]
        %v1175 = vld [vmem:[#allocation10 + $0x78] sm:$0xf]
        %v1176 = vld [vmem:[#allocation10 + $0x7c] sm:$0xf]
        %v1209 = vunpack.c.l.b16 %v1161
        %v1210 = vunpack.c.l.b16 %v1162
        %v1211 = vunpack.c.l.b16 %v1163
        %v1212 = vunpack.c.l.b16 %v1164
        %v1213 = vunpack.c.l.b16 %v1165
        %v1214 = vunpack.c.l.b16 %v1166
        %v1215 = vunpack.c.l.b16 %v1167
        %v1216 = vunpack.c.l.b16 %v1168
        %v1217 = vunpack.c.l.b16 %v1169
        %v1218 = vunpack.c.l.b16 %v1170
        %v1219 = vunpack.c.l.b16 %v1171
        %v1220 = vunpack.c.l.b16 %v1172
        %v1221 = vunpack.c.l.b16 %v1173
        %v1222 = vunpack.c.l.b16 %v1174
        %v1223 = vunpack.c.l.b16 %v1175
        %v1224 = vunpack.c.l.b16 %v1176
        %v1225 = vpack.c.b16 %v1210, %v1209
        %v1226 = vpack.c.b16 %v1212, %v1211
        %v1227 = vpack.c.b16 %v1214, %v1213
        %v1228 = vpack.c.b16 %v1216, %v1215
        %v1229 = vpack.c.b16 %v1218, %v1217
        %v1230 = vpack.c.b16 %v1220, %v1219
        %v1231 = vpack.c.b16 %v1222, %v1221
        %v1232 = vpack.c.b16 %v1224, %v1223
        %1241 = vmatpush.bf16.msra.mxu0 %v1232
        %1242 = vmatpush.bf16.msra.mxu0 %v1231
        %1243 = vmatpush.bf16.msra.mxu0 %v1230
        %1244 = vmatpush.bf16.msra.mxu0 %v1229
        %1245 = vmatpush.bf16.msra.mxu0 %v1228
        %1246 = vmatpush.bf16.msra.mxu0 %v1227
        %1247 = vmatpush.bf16.msra.mxu0 %v1226
        %1248 = vmatpush.bf16.msra.mxu0 %v1225
        %1249 = vmatmul.bf16.gmra.mxu0 %v887
        %v1250 = vpop.f32.mrf.mxu0
        %v1251 = vadd.f32 0.0, %v1250
        %v1252 = vpop.f32.mrf.mxu0
        %v1253 = vadd.f32 0.0, %v1252
        %1254 = vmatmul.bf16.gmra.mxu0 %v888
        %v1255 = vpop.f32.mrf.mxu0
        %v1256 = vadd.f32 0.0, %v1255
        %v1257 = vpop.f32.mrf.mxu0
        %v1258 = vadd.f32 0.0, %v1257
        %1259 = vmatmul.bf16.gmra.mxu0 %v889
        %v1260 = vpop.f32.mrf.mxu0
        %v1261 = vadd.f32 0.0, %v1260
        %v1262 = vpop.f32.mrf.mxu0
        %v1263 = vadd.f32 0.0, %v1262
        %1264 = vmatmul.bf16.gmra.mxu0 %v890
        %v1265 = vpop.f32.mrf.mxu0
        %v1266 = vadd.f32 0.0, %v1265
        %v1267 = vpop.f32.mrf.mxu0
        %v1268 = vadd.f32 0.0, %v1267
        %1269 = vmatmul.bf16.gmra.mxu0 %v891
        %v1270 = vpop.f32.mrf.mxu0
        %v1271 = vadd.f32 0.0, %v1270
        %v1272 = vpop.f32.mrf.mxu0
        %v1273 = vadd.f32 0.0, %v1272
        %1274 = vmatmul.bf16.gmra.mxu0 %v892
        %v1275 = vpop.f32.mrf.mxu0
        %v1276 = vadd.f32 0.0, %v1275
        %v1277 = vpop.f32.mrf.mxu0
        %v1278 = vadd.f32 0.0, %v1277
        %1279 = vmatmul.bf16.gmra.mxu0 %v893
        %v1280 = vpop.f32.mrf.mxu0
        %v1281 = vadd.f32 0.0, %v1280
        %v1282 = vpop.f32.mrf.mxu0
        %v1283 = vadd.f32 0.0, %v1282
        %1284 = vmatmul.bf16.gmra.mxu0 %v894
        %v1285 = vpop.f32.mrf.mxu0
        %v1286 = vadd.f32 0.0, %v1285
        %v1287 = vpop.f32.mrf.mxu0
        %v1288 = vadd.f32 0.0, %v1287
        %1289 = vmatmul.bf16.gmra.mxu0 %v895
        %v1290 = vpop.f32.mrf.mxu0
        %v1291 = vadd.f32 0.0, %v1290
        %v1292 = vpop.f32.mrf.mxu0
        %v1293 = vadd.f32 0.0, %v1292
        %1294 = vmatmul.bf16.gmra.mxu0 %v896
        %v1295 = vpop.f32.mrf.mxu0
        %v1296 = vadd.f32 0.0, %v1295
        %v1297 = vpop.f32.mrf.mxu0
        %v1298 = vadd.f32 0.0, %v1297
        %1299 = vmatmul.bf16.gmra.mxu0 %v897
        %v1300 = vpop.f32.mrf.mxu0
        %v1301 = vadd.f32 0.0, %v1300
        %v1302 = vpop.f32.mrf.mxu0
        %v1303 = vadd.f32 0.0, %v1302
        %1304 = vmatmul.bf16.gmra.mxu0 %v898
        %v1305 = vpop.f32.mrf.mxu0
        %v1306 = vadd.f32 0.0, %v1305
        %v1307 = vpop.f32.mrf.mxu0
        %v1308 = vadd.f32 0.0, %v1307
        %1309 = vmatmul.bf16.gmra.mxu0 %v899
        %v1310 = vpop.f32.mrf.mxu0
        %v1311 = vadd.f32 0.0, %v1310
        %v1312 = vpop.f32.mrf.mxu0
        %v1313 = vadd.f32 0.0, %v1312
        %1314 = vmatmul.bf16.gmra.mxu0 %v900
        %v1315 = vpop.f32.mrf.mxu0
        %v1316 = vadd.f32 0.0, %v1315
        %v1317 = vpop.f32.mrf.mxu0
        %v1318 = vadd.f32 0.0, %v1317
        %1319 = vmatmul.bf16.gmra.mxu0 %v901
        %v1320 = vpop.f32.mrf.mxu0
        %v1321 = vadd.f32 0.0, %v1320
        %v1322 = vpop.f32.mrf.mxu0
        %v1323 = vadd.f32 0.0, %v1322
        %1324 = vmatmul.bf16.gmra.mxu0 %v902
        %v1325 = vpop.f32.mrf.mxu0
        %v1326 = vadd.f32 0.0, %v1325
        %v1327 = vpop.f32.mrf.mxu0
        %v1328 = vadd.f32 0.0, %v1327
        %1329 = vdwg.mxu0
        %v1346 = vunpack.c.l.b16 %v1145
        %v1347 = vunpack.c.l.b16 %v1146
        %v1348 = vunpack.c.l.b16 %v1147
        %v1349 = vunpack.c.l.b16 %v1148
        %v1350 = vunpack.c.l.b16 %v1149
        %v1351 = vunpack.c.l.b16 %v1150
        %v1352 = vunpack.c.l.b16 %v1151
        %v1353 = vunpack.c.l.b16 %v1152
        %v1354 = vunpack.c.l.b16 %v1153
        %v1355 = vunpack.c.l.b16 %v1154
        %v1356 = vunpack.c.l.b16 %v1155
        %v1357 = vunpack.c.l.b16 %v1156
        %v1358 = vunpack.c.l.b16 %v1157
        %v1359 = vunpack.c.l.b16 %v1158
        %v1360 = vunpack.c.l.b16 %v1159
        %v1361 = vunpack.c.l.b16 %v1160
        %v1362 = vpack.c.b16 %v1347, %v1346
        %v1363 = vpack.c.b16 %v1349, %v1348
        %v1364 = vpack.c.b16 %v1351, %v1350
        %v1365 = vpack.c.b16 %v1353, %v1352
        %v1366 = vpack.c.b16 %v1355, %v1354
        %v1367 = vpack.c.b16 %v1357, %v1356
        %v1368 = vpack.c.b16 %v1359, %v1358
        %v1369 = vpack.c.b16 %v1361, %v1360
        %1378 = vmatpush.bf16.msra.mxu0 %v1369
        %1379 = vmatpush.bf16.msra.mxu0 %v1368
        %1380 = vmatpush.bf16.msra.mxu0 %v1367
        %1381 = vmatpush.bf16.msra.mxu0 %v1366
        %1382 = vmatpush.bf16.msra.mxu0 %v1365
        %1383 = vmatpush.bf16.msra.mxu0 %v1364
        %1384 = vmatpush.bf16.msra.mxu0 %v1363
        %1385 = vmatpush.bf16.msra.mxu0 %v1362
        %1386 = vmatmul.bf16.gmra.mxu0 %v1052
        %v1387 = vpop.f32.mrf.mxu0
        %v1388 = vadd.f32 %v1251, %v1387
        %v1389 = vpop.f32.mrf.mxu0
        %v1390 = vadd.f32 %v1253, %v1389
        %1391 = vmatmul.bf16.gmra.mxu0 %v1053
        %v1392 = vpop.f32.mrf.mxu0
        %v1393 = vadd.f32 %v1256, %v1392
        %v1394 = vpop.f32.mrf.mxu0
        %v1395 = vadd.f32 %v1258, %v1394
        %1396 = vmatmul.bf16.gmra.mxu0 %v1054
        %v1397 = vpop.f32.mrf.mxu0
        %v1398 = vadd.f32 %v1261, %v1397
        %v1399 = vpop.f32.mrf.mxu0
        %v1400 = vadd.f32 %v1263, %v1399
        %1401 = vmatmul.bf16.gmra.mxu0 %v1055
        %v1402 = vpop.f32.mrf.mxu0
        %v1403 = vadd.f32 %v1266, %v1402
        %v1404 = vpop.f32.mrf.mxu0
        %v1405 = vadd.f32 %v1268, %v1404
        %1406 = vmatmul.bf16.gmra.mxu0 %v1056
        %v1407 = vpop.f32.mrf.mxu0
        %v1408 = vadd.f32 %v1271, %v1407
        %v1409 = vpop.f32.mrf.mxu0
        %v1410 = vadd.f32 %v1273, %v1409
        %1411 = vmatmul.bf16.gmra.mxu0 %v1057
        %v1412 = vpop.f32.mrf.mxu0
        %v1413 = vadd.f32 %v1276, %v1412
        %v1414 = vpop.f32.mrf.mxu0
        %v1415 = vadd.f32 %v1278, %v1414
        %1416 = vmatmul.bf16.gmra.mxu0 %v1058
        %v1417 = vpop.f32.mrf.mxu0
        %v1418 = vadd.f32 %v1281, %v1417
        %v1419 = vpop.f32.mrf.mxu0
        %v1420 = vadd.f32 %v1283, %v1419
        %1421 = vmatmul.bf16.gmra.mxu0 %v1059
        %v1422 = vpop.f32.mrf.mxu0
        %v1423 = vadd.f32 %v1286, %v1422
        %v1424 = vpop.f32.mrf.mxu0
        %v1425 = vadd.f32 %v1288, %v1424
        %1426 = vmatmul.bf16.gmra.mxu0 %v1060
        %v1427 = vpop.f32.mrf.mxu0
        %v1428 = vadd.f32 %v1291, %v1427
        %v1429 = vpop.f32.mrf.mxu0
        %v1430 = vadd.f32 %v1293, %v1429
        %1431 = vmatmul.bf16.gmra.mxu0 %v1061
        %v1432 = vpop.f32.mrf.mxu0
        %v1433 = vadd.f32 %v1296, %v1432
        %v1434 = vpop.f32.mrf.mxu0
        %v1435 = vadd.f32 %v1298, %v1434
        %1436 = vmatmul.bf16.gmra.mxu0 %v1062
        %v1437 = vpop.f32.mrf.mxu0
        %v1438 = vadd.f32 %v1301, %v1437
        %v1439 = vpop.f32.mrf.mxu0
        %v1440 = vadd.f32 %v1303, %v1439
        %1441 = vmatmul.bf16.gmra.mxu0 %v1063
        %v1442 = vpop.f32.mrf.mxu0
        %v1443 = vadd.f32 %v1306, %v1442
        %v1444 = vpop.f32.mrf.mxu0
        %v1445 = vadd.f32 %v1308, %v1444
        %1446 = vmatmul.bf16.gmra.mxu0 %v1064
        %v1447 = vpop.f32.mrf.mxu0
        %v1448 = vadd.f32 %v1311, %v1447
        %v1449 = vpop.f32.mrf.mxu0
        %v1450 = vadd.f32 %v1313, %v1449
        %1451 = vmatmul.bf16.gmra.mxu0 %v1065
        %v1452 = vpop.f32.mrf.mxu0
        %v1453 = vadd.f32 %v1316, %v1452
        %v1454 = vpop.f32.mrf.mxu0
        %v1455 = vadd.f32 %v1318, %v1454
        %1456 = vmatmul.bf16.gmra.mxu0 %v1066
        %v1457 = vpop.f32.mrf.mxu0
        %v1458 = vadd.f32 %v1321, %v1457
        %v1459 = vpop.f32.mrf.mxu0
        %v1460 = vadd.f32 %v1323, %v1459
        %1461 = vmatmul.bf16.gmra.mxu0 %v1067
        %v1462 = vpop.f32.mrf.mxu0
        %v1463 = vadd.f32 %v1326, %v1462
        %v1464 = vpop.f32.mrf.mxu0
        %v1465 = vadd.f32 %v1328, %v1464
        %1466 = vdwg.mxu0
        %v1467 = vld [vmem:[#allocation10 + $0x80] sm:$0xf]
        %v1468 = vld [vmem:[#allocation10 + $0x84] sm:$0xf]
        %v1469 = vld [vmem:[#allocation10 + $0x88] sm:$0xf]
        %v1470 = vld [vmem:[#allocation10 + $0x8c] sm:$0xf]
        %v1471 = vld [vmem:[#allocation10 + $0x90] sm:$0xf]
        %v1472 = vld [vmem:[#allocation10 + $0x94] sm:$0xf]
        %v1473 = vld [vmem:[#allocation10 + $0x98] sm:$0xf]
        %v1474 = vld [vmem:[#allocation10 + $0x9c] sm:$0xf]
        %v1475 = vld [vmem:[#allocation10 + $0xa0] sm:$0xf]
        %v1476 = vld [vmem:[#allocation10 + $0xa4] sm:$0xf]
        %v1477 = vld [vmem:[#allocation10 + $0xa8] sm:$0xf]
        %v1478 = vld [vmem:[#allocation10 + $0xac] sm:$0xf]
        %v1479 = vld [vmem:[#allocation10 + $0xb0] sm:$0xf]
        %v1480 = vld [vmem:[#allocation10 + $0xb4] sm:$0xf]
        %v1481 = vld [vmem:[#allocation10 + $0xb8] sm:$0xf]
        %v1482 = vld [vmem:[#allocation10 + $0xbc] sm:$0xf]
        %v1499 = vunpack.c.l.b16 %v1467
        %v1500 = vunpack.c.l.b16 %v1468
        %v1501 = vunpack.c.l.b16 %v1469
        %v1502 = vunpack.c.l.b16 %v1470
        %v1503 = vunpack.c.l.b16 %v1471
        %v1504 = vunpack.c.l.b16 %v1472
        %v1505 = vunpack.c.l.b16 %v1473
        %v1506 = vunpack.c.l.b16 %v1474
        %v1507 = vunpack.c.l.b16 %v1475
        %v1508 = vunpack.c.l.b16 %v1476
        %v1509 = vunpack.c.l.b16 %v1477
        %v1510 = vunpack.c.l.b16 %v1478
        %v1511 = vunpack.c.l.b16 %v1479
        %v1512 = vunpack.c.l.b16 %v1480
        %v1513 = vunpack.c.l.b16 %v1481
        %v1514 = vunpack.c.l.b16 %v1482
        %v1515 = vpack.c.b16 %v1500, %v1499
        %v1516 = vpack.c.b16 %v1502, %v1501
        %v1517 = vpack.c.b16 %v1504, %v1503
        %v1518 = vpack.c.b16 %v1506, %v1505
        %v1519 = vpack.c.b16 %v1508, %v1507
        %v1520 = vpack.c.b16 %v1510, %v1509
        %v1521 = vpack.c.b16 %v1512, %v1511
        %v1522 = vpack.c.b16 %v1514, %v1513
        %1531 = vmatpush.bf16.msra.mxu0 %v1522
        %1532 = vmatpush.bf16.msra.mxu0 %v1521
        %1533 = vmatpush.bf16.msra.mxu0 %v1520
        %1534 = vmatpush.bf16.msra.mxu0 %v1519
        %1535 = vmatpush.bf16.msra.mxu0 %v1518
        %1536 = vmatpush.bf16.msra.mxu0 %v1517
        %1537 = vmatpush.bf16.msra.mxu0 %v1516
        %1538 = vmatpush.bf16.msra.mxu0 %v1515
        %1539 = vmatmul.bf16.gmra.mxu0 %v1127
        %v1540 = vpop.f32.mrf.mxu0
        %v1541 = vadd.f32 0.0, %v1540
        %v1542 = vpop.f32.mrf.mxu0
        %v1543 = vadd.f32 0.0, %v1542
        %1544 = vmatmul.bf16.gmra.mxu0 %v1128
        %v1545 = vpop.f32.mrf.mxu0
        %v1546 = vadd.f32 0.0, %v1545
        %v1547 = vpop.f32.mrf.mxu0
        %v1548 = vadd.f32 0.0, %v1547
        %1549 = vmatmul.bf16.gmra.mxu0 %v1129
        %v1550 = vpop.f32.mrf.mxu0
        %v1551 = vadd.f32 0.0, %v1550
        %v1552 = vpop.f32.mrf.mxu0
        %v1553 = vadd.f32 0.0, %v1552
        %1554 = vmatmul.bf16.gmra.mxu0 %v1130
        %v1555 = vpop.f32.mrf.mxu0
        %v1556 = vadd.f32 0.0, %v1555
        %v1557 = vpop.f32.mrf.mxu0
        %v1558 = vadd.f32 0.0, %v1557
        %1559 = vmatmul.bf16.gmra.mxu0 %v1131
        %v1560 = vpop.f32.mrf.mxu0
        %v1561 = vadd.f32 0.0, %v1560
        %v1562 = vpop.f32.mrf.mxu0
        %v1563 = vadd.f32 0.0, %v1562
        %1564 = vmatmul.bf16.gmra.mxu0 %v1132
        %v1565 = vpop.f32.mrf.mxu0
        %v1566 = vadd.f32 0.0, %v1565
        %v1567 = vpop.f32.mrf.mxu0
        %v1568 = vadd.f32 0.0, %v1567
        %1569 = vmatmul.bf16.gmra.mxu0 %v1133
        %v1570 = vpop.f32.mrf.mxu0
        %v1571 = vadd.f32 0.0, %v1570
        %v1572 = vpop.f32.mrf.mxu0
        %v1573 = vadd.f32 0.0, %v1572
        %1574 = vmatmul.bf16.gmra.mxu0 %v1134
        %v1575 = vpop.f32.mrf.mxu0
        %v1576 = vadd.f32 0.0, %v1575
        %v1577 = vpop.f32.mrf.mxu0
        %v1578 = vadd.f32 0.0, %v1577
        %1579 = vmatmul.bf16.gmra.mxu0 %v1135
        %v1580 = vpop.f32.mrf.mxu0
        %v1581 = vadd.f32 0.0, %v1580
        %v1582 = vpop.f32.mrf.mxu0
        %v1583 = vadd.f32 0.0, %v1582
        %1584 = vmatmul.bf16.gmra.mxu0 %v1136
        %v1585 = vpop.f32.mrf.mxu0
        %v1586 = vadd.f32 0.0, %v1585
        %v1587 = vpop.f32.mrf.mxu0
        %v1588 = vadd.f32 0.0, %v1587
        %1589 = vmatmul.bf16.gmra.mxu0 %v1137
        %v1590 = vpop.f32.mrf.mxu0
        %v1591 = vadd.f32 0.0, %v1590
        %v1592 = vpop.f32.mrf.mxu0
        %v1593 = vadd.f32 0.0, %v1592
        %1594 = vmatmul.bf16.gmra.mxu0 %v1138
        %v1595 = vpop.f32.mrf.mxu0
        %v1596 = vadd.f32 0.0, %v1595
        %v1597 = vpop.f32.mrf.mxu0
        %v1598 = vadd.f32 0.0, %v1597
        %1599 = vmatmul.bf16.gmra.mxu0 %v1139
        %v1600 = vpop.f32.mrf.mxu0
        %v1601 = vadd.f32 0.0, %v1600
        %v1602 = vpop.f32.mrf.mxu0
        %v1603 = vadd.f32 0.0, %v1602
        %1604 = vmatmul.bf16.gmra.mxu0 %v1140
        %v1605 = vpop.f32.mrf.mxu0
        %v1606 = vadd.f32 0.0, %v1605
        %v1607 = vpop.f32.mrf.mxu0
        %v1608 = vadd.f32 0.0, %v1607
        %1609 = vmatmul.bf16.gmra.mxu0 %v1141
        %v1610 = vpop.f32.mrf.mxu0
        %v1611 = vadd.f32 0.0, %v1610
        %v1612 = vpop.f32.mrf.mxu0
        %v1613 = vadd.f32 0.0, %v1612
        %1614 = vmatmul.bf16.gmra.mxu0 %v1142
        %v1615 = vpop.f32.mrf.mxu0
        %v1616 = vadd.f32 0.0, %v1615
        %v1617 = vpop.f32.mrf.mxu0
        %v1618 = vadd.f32 0.0, %v1617
        %1619 = vdwg.mxu0
        %v1620 = vadd.f32 %v1388, %v1541
        %v1621 = vadd.f32 %v1390, %v1543
        %v1622 = vadd.f32 %v1393, %v1546
        %v1623 = vadd.f32 %v1395, %v1548
        %v1624 = vadd.f32 %v1398, %v1551
        %v1625 = vadd.f32 %v1400, %v1553
        %v1626 = vadd.f32 %v1403, %v1556
        %v1627 = vadd.f32 %v1405, %v1558
        %v1628 = vadd.f32 %v1408, %v1561
        %v1629 = vadd.f32 %v1410, %v1563
        %v1630 = vadd.f32 %v1413, %v1566
        %v1631 = vadd.f32 %v1415, %v1568
        %v1632 = vadd.f32 %v1418, %v1571
        %v1633 = vadd.f32 %v1420, %v1573
        %v1634 = vadd.f32 %v1423, %v1576
        %v1635 = vadd.f32 %v1425, %v1578
        %v1636 = vadd.f32 %v1428, %v1581
        %v1637 = vadd.f32 %v1430, %v1583
        %v1638 = vadd.f32 %v1433, %v1586
        %v1639 = vadd.f32 %v1435, %v1588
        %v1640 = vadd.f32 %v1438, %v1591
        %v1641 = vadd.f32 %v1440, %v1593
        %v1642 = vadd.f32 %v1443, %v1596
        %v1643 = vadd.f32 %v1445, %v1598
        %v1644 = vadd.f32 %v1448, %v1601
        %v1645 = vadd.f32 %v1450, %v1603
        %v1646 = vadd.f32 %v1453, %v1606
        %v1647 = vadd.f32 %v1455, %v1608
        %v1648 = vadd.f32 %v1458, %v1611
        %v1649 = vadd.f32 %v1460, %v1613
        %v1650 = vadd.f32 %v1463, %v1616
        %v1651 = vadd.f32 %v1465, %v1618
        %v1652 = vld [vmem:[#allocation10 + $0xc0] sm:$0xf]
        %v1653 = vld [vmem:[#allocation10 + $0xc4] sm:$0xf]
        %v1654 = vld [vmem:[#allocation10 + $0xc8] sm:$0xf]
        %v1655 = vld [vmem:[#allocation10 + $0xcc] sm:$0xf]
        %v1656 = vld [vmem:[#allocation10 + $0xd0] sm:$0xf]
        %v1657 = vld [vmem:[#allocation10 + $0xd4] sm:$0xf]
        %v1658 = vld [vmem:[#allocation10 + $0xd8] sm:$0xf]
        %v1659 = vld [vmem:[#allocation10 + $0xdc] sm:$0xf]
        %v1660 = vld [vmem:[#allocation10 + $0xe0] sm:$0xf]
        %v1661 = vld [vmem:[#allocation10 + $0xe4] sm:$0xf]
        %v1662 = vld [vmem:[#allocation10 + $0xe8] sm:$0xf]
        %v1663 = vld [vmem:[#allocation10 + $0xec] sm:$0xf]
        %v1664 = vld [vmem:[#allocation10 + $0xf0] sm:$0xf]
        %v1665 = vld [vmem:[#allocation10 + $0xf4] sm:$0xf]
        %v1666 = vld [vmem:[#allocation10 + $0xf8] sm:$0xf]
        %v1667 = vld [vmem:[#allocation10 + $0xfc] sm:$0xf]
        %v1684 = vunpack.c.l.b16 %v1652
        %v1685 = vunpack.c.l.b16 %v1653
        %v1686 = vunpack.c.l.b16 %v1654
        %v1687 = vunpack.c.l.b16 %v1655
        %v1688 = vunpack.c.l.b16 %v1656
        %v1689 = vunpack.c.l.b16 %v1657
        %v1690 = vunpack.c.l.b16 %v1658
        %v1691 = vunpack.c.l.b16 %v1659
        %v1692 = vunpack.c.l.b16 %v1660
        %v1693 = vunpack.c.l.b16 %v1661
        %v1694 = vunpack.c.l.b16 %v1662
        %v1695 = vunpack.c.l.b16 %v1663
        %v1696 = vunpack.c.l.b16 %v1664
        %v1697 = vunpack.c.l.b16 %v1665
        %v1698 = vunpack.c.l.b16 %v1666
        %v1699 = vunpack.c.l.b16 %v1667
        %v1700 = vpack.c.b16 %v1685, %v1684
        %v1701 = vpack.c.b16 %v1687, %v1686
        %v1702 = vpack.c.b16 %v1689, %v1688
        %v1703 = vpack.c.b16 %v1691, %v1690
        %v1704 = vpack.c.b16 %v1693, %v1692
        %v1705 = vpack.c.b16 %v1695, %v1694
        %v1706 = vpack.c.b16 %v1697, %v1696
        %v1707 = vpack.c.b16 %v1699, %v1698
        %1716 = vmatpush.bf16.msra.mxu0 %v1707
        %1717 = vmatpush.bf16.msra.mxu0 %v1706
        %1718 = vmatpush.bf16.msra.mxu0 %v1705
        %1719 = vmatpush.bf16.msra.mxu0 %v1704
        %1720 = vmatpush.bf16.msra.mxu0 %v1703
        %1721 = vmatpush.bf16.msra.mxu0 %v1702
        %1722 = vmatpush.bf16.msra.mxu0 %v1701
        %1723 = vmatpush.bf16.msra.mxu0 %v1700
        %1724 = vmatmul.bf16.gmra.mxu0 %v1053
        %v1725 = vpop.f32.mrf.mxu0
        %v1726 = vadd.f32 0.0, %v1725
        %v1727 = vpop.f32.mrf.mxu0
        %v1728 = vadd.f32 0.0, %v1727
        %1729 = vmatmul.bf16.gmra.mxu0 %v1054
        %v1730 = vpop.f32.mrf.mxu0
        %v1731 = vadd.f32 0.0, %v1730
        %v1732 = vpop.f32.mrf.mxu0
        %v1733 = vadd.f32 0.0, %v1732
        %1734 = vmatmul.bf16.gmra.mxu0 %v1055
        %v1735 = vpop.f32.mrf.mxu0
        %v1736 = vadd.f32 0.0, %v1735
        %v1737 = vpop.f32.mrf.mxu0
        %v1738 = vadd.f32 0.0, %v1737
        %1739 = vmatmul.bf16.gmra.mxu0 %v1056
        %v1740 = vpop.f32.mrf.mxu0
        %v1741 = vadd.f32 0.0, %v1740
        %v1742 = vpop.f32.mrf.mxu0
        %v1743 = vadd.f32 0.0, %v1742
        %1744 = vmatmul.bf16.gmra.mxu0 %v1057
        %v1745 = vpop.f32.mrf.mxu0
        %v1746 = vadd.f32 0.0, %v1745
        %v1747 = vpop.f32.mrf.mxu0
        %v1748 = vadd.f32 0.0, %v1747
        %1749 = vmatmul.bf16.gmra.mxu0 %v1058
        %v1750 = vpop.f32.mrf.mxu0
        %v1751 = vadd.f32 0.0, %v1750
        %v1752 = vpop.f32.mrf.mxu0
        %v1753 = vadd.f32 0.0, %v1752
        %1754 = vmatmul.bf16.gmra.mxu0 %v1059
        %v1755 = vpop.f32.mrf.mxu0
        %v1756 = vadd.f32 0.0, %v1755
        %v1757 = vpop.f32.mrf.mxu0
        %v1758 = vadd.f32 0.0, %v1757
        %1759 = vmatmul.bf16.gmra.mxu0 %v1060
        %v1760 = vpop.f32.mrf.mxu0
        %v1761 = vadd.f32 0.0, %v1760
        %v1762 = vpop.f32.mrf.mxu0
        %v1763 = vadd.f32 0.0, %v1762
        %1764 = vmatmul.bf16.gmra.mxu0 %v1061
        %v1765 = vpop.f32.mrf.mxu0
        %v1766 = vadd.f32 0.0, %v1765
        %v1767 = vpop.f32.mrf.mxu0
        %v1768 = vadd.f32 0.0, %v1767
        %1769 = vmatmul.bf16.gmra.mxu0 %v1062
        %v1770 = vpop.f32.mrf.mxu0
        %v1771 = vadd.f32 0.0, %v1770
        %v1772 = vpop.f32.mrf.mxu0
        %v1773 = vadd.f32 0.0, %v1772
        %1774 = vmatmul.bf16.gmra.mxu0 %v1063
        %v1775 = vpop.f32.mrf.mxu0
        %v1776 = vadd.f32 0.0, %v1775
        %v1777 = vpop.f32.mrf.mxu0
        %v1778 = vadd.f32 0.0, %v1777
        %1779 = vmatmul.bf16.gmra.mxu0 %v1064
        %v1780 = vpop.f32.mrf.mxu0
        %v1781 = vadd.f32 0.0, %v1780
        %v1782 = vpop.f32.mrf.mxu0
        %v1783 = vadd.f32 0.0, %v1782
        %1784 = vmatmul.bf16.gmra.mxu0 %v1065
        %v1785 = vpop.f32.mrf.mxu0
        %v1786 = vadd.f32 0.0, %v1785
        %v1787 = vpop.f32.mrf.mxu0
        %v1788 = vadd.f32 0.0, %v1787
        %1789 = vmatmul.bf16.gmra.mxu0 %v1066
        %v1790 = vpop.f32.mrf.mxu0
        %v1791 = vadd.f32 0.0, %v1790
        %v1792 = vpop.f32.mrf.mxu0
        %v1793 = vadd.f32 0.0, %v1792
        %1794 = vmatmul.bf16.gmra.mxu0 %v1067
        %v1795 = vpop.f32.mrf.mxu0
        %v1796 = vadd.f32 0.0, %v1795
        %v1797 = vpop.f32.mrf.mxu0
        %v1798 = vadd.f32 0.0, %v1797
        %1799 = vmatmul.bf16.gmra.mxu0 %v1068
        %v1800 = vpop.f32.mrf.mxu0
        %v1801 = vadd.f32 0.0, %v1800
        %v1802 = vpop.f32.mrf.mxu0
        %v1803 = vadd.f32 0.0, %v1802
        %1804 = vdwg.mxu0
        %v1805 = vadd.f32 %v1620, %v1726
        %v1806 = vadd.f32 %v1621, %v1728
        %v1807 = vadd.f32 %v1622, %v1731
        %v1808 = vadd.f32 %v1623, %v1733
        %v1809 = vadd.f32 %v1624, %v1736
        %v1810 = vadd.f32 %v1625, %v1738
        %v1811 = vadd.f32 %v1626, %v1741
        %v1812 = vadd.f32 %v1627, %v1743
        %v1813 = vadd.f32 %v1628, %v1746
        %v1814 = vadd.f32 %v1629, %v1748
        %v1815 = vadd.f32 %v1630, %v1751
        %v1816 = vadd.f32 %v1631, %v1753
        %v1817 = vadd.f32 %v1632, %v1756
        %v1818 = vadd.f32 %v1633, %v1758
        %v1819 = vadd.f32 %v1634, %v1761
        %v1820 = vadd.f32 %v1635, %v1763
        %v1821 = vadd.f32 %v1636, %v1766
        %v1822 = vadd.f32 %v1637, %v1768
        %v1823 = vadd.f32 %v1638, %v1771
        %v1824 = vadd.f32 %v1639, %v1773
        %v1825 = vadd.f32 %v1640, %v1776
        %v1826 = vadd.f32 %v1641, %v1778
        %v1827 = vadd.f32 %v1642, %v1781
        %v1828 = vadd.f32 %v1643, %v1783
        %v1829 = vadd.f32 %v1644, %v1786
        %v1830 = vadd.f32 %v1645, %v1788
        %v1831 = vadd.f32 %v1646, %v1791
        %v1832 = vadd.f32 %v1647, %v1793
        %v1833 = vadd.f32 %v1648, %v1796
        %v1834 = vadd.f32 %v1649, %v1798
        %v1835 = vadd.f32 %v1650, %v1801
        %v1836 = vadd.f32 %v1651, %v1803
        %v1837 = vld [vmem:[#allocation10 + $0x100] sm:$0xf]
        %v1838 = vld [vmem:[#allocation10 + $0x104] sm:$0xf]
        %v1839 = vld [vmem:[#allocation10 + $0x108] sm:$0xf]
        %v1840 = vld [vmem:[#allocation10 + $0x10c] sm:$0xf]
        %v1841 = vld [vmem:[#allocation10 + $0x110] sm:$0xf]
        %v1842 = vld [vmem:[#allocation10 + $0x114] sm:$0xf]
        %v1843 = vld [vmem:[#allocation10 + $0x118] sm:$0xf]
        %v1844 = vld [vmem:[#allocation10 + $0x11c] sm:$0xf]
        %v1845 = vld [vmem:[#allocation10 + $0x120] sm:$0xf]
        %v1846 = vld [vmem:[#allocation10 + $0x124] sm:$0xf]
        %v1847 = vld [vmem:[#allocation10 + $0x128] sm:$0xf]
        %v1848 = vld [vmem:[#allocation10 + $0x12c] sm:$0xf]
        %v1849 = vld [vmem:[#allocation10 + $0x130] sm:$0xf]
        %v1850 = vld [vmem:[#allocation10 + $0x134] sm:$0xf]
        %v1851 = vld [vmem:[#allocation10 + $0x138] sm:$0xf]
        %v1852 = vld [vmem:[#allocation10 + $0x13c] sm:$0xf]
        %v1870 = vunpack.c.l.b16 %v1837
        %v1871 = vunpack.c.l.b16 %v1838
        %v1872 = vunpack.c.l.b16 %v1839
        %v1873 = vunpack.c.l.b16 %v1840
        %v1874 = vunpack.c.l.b16 %v1841
        %v1875 = vunpack.c.l.b16 %v1842
        %v1876 = vunpack.c.l.b16 %v1843
        %v1877 = vunpack.c.l.b16 %v1844
        %v1878 = vunpack.c.l.b16 %v1845
        %v1879 = vunpack.c.l.b16 %v1846
        %v1880 = vunpack.c.l.b16 %v1847
        %v1881 = vunpack.c.l.b16 %v1848
        %v1882 = vunpack.c.l.b16 %v1849
        %v1883 = vunpack.c.l.b16 %v1850
        %v1884 = vunpack.c.l.b16 %v1851
        %v1885 = vunpack.c.l.b16 %v1852
        %v1886 = vpack.c.b16 %v1871, %v1870
        %v1887 = vpack.c.b16 %v1873, %v1872
        %v1888 = vpack.c.b16 %v1875, %v1874
        %v1889 = vpack.c.b16 %v1877, %v1876
        %v1890 = vpack.c.b16 %v1879, %v1878
        %v1891 = vpack.c.b16 %v1881, %v1880
        %v1892 = vpack.c.b16 %v1883, %v1882
        %v1893 = vpack.c.b16 %v1885, %v1884
        %1902 = vmatpush.bf16.msra.mxu0 %v1893
        %1903 = vmatpush.bf16.msra.mxu0 %v1892
        %1904 = vmatpush.bf16.msra.mxu0 %v1891
        %1905 = vmatpush.bf16.msra.mxu0 %v1890
        %1906 = vmatpush.bf16.msra.mxu0 %v1889
        %1907 = vmatpush.bf16.msra.mxu0 %v1888
        %1908 = vmatpush.bf16.msra.mxu0 %v1887
        %1909 = vmatpush.bf16.msra.mxu0 %v1886
        %1910 = vmatmul.bf16.gmra.mxu0 %v888
        %v1911 = vpop.f32.mrf.mxu0
        %v1912 = vadd.f32 0.0, %v1911
        %v1913 = vpop.f32.mrf.mxu0
        %v1914 = vadd.f32 0.0, %v1913
        %1915 = vmatmul.bf16.gmra.mxu0 %v889
        %v1916 = vpop.f32.mrf.mxu0
        %v1917 = vadd.f32 0.0, %v1916
        %v1918 = vpop.f32.mrf.mxu0
        %v1919 = vadd.f32 0.0, %v1918
        %1920 = vmatmul.bf16.gmra.mxu0 %v890
        %v1921 = vpop.f32.mrf.mxu0
        %v1922 = vadd.f32 0.0, %v1921
        %v1923 = vpop.f32.mrf.mxu0
        %v1924 = vadd.f32 0.0, %v1923
        %1925 = vmatmul.bf16.gmra.mxu0 %v891
        %v1926 = vpop.f32.mrf.mxu0
        %v1927 = vadd.f32 0.0, %v1926
        %v1928 = vpop.f32.mrf.mxu0
        %v1929 = vadd.f32 0.0, %v1928
        %1930 = vmatmul.bf16.gmra.mxu0 %v892
        %v1931 = vpop.f32.mrf.mxu0
        %v1932 = vadd.f32 0.0, %v1931
        %v1933 = vpop.f32.mrf.mxu0
        %v1934 = vadd.f32 0.0, %v1933
        %1935 = vmatmul.bf16.gmra.mxu0 %v893
        %v1936 = vpop.f32.mrf.mxu0
        %v1937 = vadd.f32 0.0, %v1936
        %v1938 = vpop.f32.mrf.mxu0
        %v1939 = vadd.f32 0.0, %v1938
        %1940 = vmatmul.bf16.gmra.mxu0 %v894
        %v1941 = vpop.f32.mrf.mxu0
        %v1942 = vadd.f32 0.0, %v1941
        %v1943 = vpop.f32.mrf.mxu0
        %v1944 = vadd.f32 0.0, %v1943
        %1945 = vmatmul.bf16.gmra.mxu0 %v895
        %v1946 = vpop.f32.mrf.mxu0
        %v1947 = vadd.f32 0.0, %v1946
        %v1948 = vpop.f32.mrf.mxu0
        %v1949 = vadd.f32 0.0, %v1948
        %1950 = vmatmul.bf16.gmra.mxu0 %v896
        %v1951 = vpop.f32.mrf.mxu0
        %v1952 = vadd.f32 0.0, %v1951
        %v1953 = vpop.f32.mrf.mxu0
        %v1954 = vadd.f32 0.0, %v1953
        %1955 = vmatmul.bf16.gmra.mxu0 %v897
        %v1956 = vpop.f32.mrf.mxu0
        %v1957 = vadd.f32 0.0, %v1956
        %v1958 = vpop.f32.mrf.mxu0
        %v1959 = vadd.f32 0.0, %v1958
        %1960 = vmatmul.bf16.gmra.mxu0 %v898
        %v1961 = vpop.f32.mrf.mxu0
        %v1962 = vadd.f32 0.0, %v1961
        %v1963 = vpop.f32.mrf.mxu0
        %v1964 = vadd.f32 0.0, %v1963
        %1965 = vmatmul.bf16.gmra.mxu0 %v899
        %v1966 = vpop.f32.mrf.mxu0
        %v1967 = vadd.f32 0.0, %v1966
        %v1968 = vpop.f32.mrf.mxu0
        %v1969 = vadd.f32 0.0, %v1968
        %1970 = vmatmul.bf16.gmra.mxu0 %v900
        %v1971 = vpop.f32.mrf.mxu0
        %v1972 = vadd.f32 0.0, %v1971
        %v1973 = vpop.f32.mrf.mxu0
        %v1974 = vadd.f32 0.0, %v1973
        %1975 = vmatmul.bf16.gmra.mxu0 %v901
        %v1976 = vpop.f32.mrf.mxu0
        %v1977 = vadd.f32 0.0, %v1976
        %v1978 = vpop.f32.mrf.mxu0
        %v1979 = vadd.f32 0.0, %v1978
        %1980 = vmatmul.bf16.gmra.mxu0 %v902
        %v1981 = vpop.f32.mrf.mxu0
        %v1982 = vadd.f32 0.0, %v1981
        %v1983 = vpop.f32.mrf.mxu0
        %v1984 = vadd.f32 0.0, %v1983
        %1985 = vmatmul.bf16.gmra.mxu0 %v903
        %v1986 = vpop.f32.mrf.mxu0
        %v1987 = vadd.f32 0.0, %v1986
        %v1988 = vpop.f32.mrf.mxu0
        %v1989 = vadd.f32 0.0, %v1988
        %1990 = vdwg.mxu0
        %v1991 = vadd.f32 %v1805, %v1912
        %v1992 = vadd.f32 %v1806, %v1914
        %v1993 = vadd.f32 %v1807, %v1917
        %v1994 = vadd.f32 %v1808, %v1919
        %v1995 = vadd.f32 %v1809, %v1922
        %v1996 = vadd.f32 %v1810, %v1924
        %v1997 = vadd.f32 %v1811, %v1927
        %v1998 = vadd.f32 %v1812, %v1929
        %v1999 = vadd.f32 %v1813, %v1932
        %v2000 = vadd.f32 %v1814, %v1934
        %v2001 = vadd.f32 %v1815, %v1937
        %v2002 = vadd.f32 %v1816, %v1939
        %v2003 = vadd.f32 %v1817, %v1942
        %v2004 = vadd.f32 %v1818, %v1944
        %v2005 = vadd.f32 %v1819, %v1947
        %v2006 = vadd.f32 %v1820, %v1949
        %v2007 = vadd.f32 %v1821, %v1952
        %v2008 = vadd.f32 %v1822, %v1954
        %v2009 = vadd.f32 %v1823, %v1957
        %v2010 = vadd.f32 %v1824, %v1959
        %v2011 = vadd.f32 %v1825, %v1962
        %v2012 = vadd.f32 %v1826, %v1964
        %v2013 = vadd.f32 %v1827, %v1967
        %v2014 = vadd.f32 %v1828, %v1969
        %v2015 = vadd.f32 %v1829, %v1972
        %v2016 = vadd.f32 %v1830, %v1974
        %v2017 = vadd.f32 %v1831, %v1977
        %v2018 = vadd.f32 %v1832, %v1979
        %v2019 = vadd.f32 %v1833, %v1982
        %v2020 = vadd.f32 %v1834, %v1984
        %v2021 = vadd.f32 %v1835, %v1987
        %v2022 = vadd.f32 %v1836, %v1989
        %v2023 = vld [vmem:[#allocation10 + $0x140] sm:$0xf]
        %v2024 = vld [vmem:[#allocation10 + $0x144] sm:$0xf]
        %v2025 = vld [vmem:[#allocation10 + $0x148] sm:$0xf]
        %v2026 = vld [vmem:[#allocation10 + $0x14c] sm:$0xf]
        %v2027 = vld [vmem:[#allocation10 + $0x150] sm:$0xf]
        %v2028 = vld [vmem:[#allocation10 + $0x154] sm:$0xf]
        %v2029 = vld [vmem:[#allocation10 + $0x158] sm:$0xf]
        %v2030 = vld [vmem:[#allocation10 + $0x15c] sm:$0xf]
        %v2031 = vld [vmem:[#allocation10 + $0x160] sm:$0xf]
        %v2032 = vld [vmem:[#allocation10 + $0x164] sm:$0xf]
        %v2033 = vld [vmem:[#allocation10 + $0x168] sm:$0xf]
        %v2034 = vld [vmem:[#allocation10 + $0x16c] sm:$0xf]
        %v2035 = vld [vmem:[#allocation10 + $0x170] sm:$0xf]
        %v2036 = vld [vmem:[#allocation10 + $0x174] sm:$0xf]
        %v2037 = vld [vmem:[#allocation10 + $0x178] sm:$0xf]
        %v2038 = vld [vmem:[#allocation10 + $0x17c] sm:$0xf]
        %v2055 = vunpack.c.l.b16 %v2023
        %v2056 = vunpack.c.l.b16 %v2024
        %v2057 = vunpack.c.l.b16 %v2025
        %v2058 = vunpack.c.l.b16 %v2026
        %v2059 = vunpack.c.l.b16 %v2027
        %v2060 = vunpack.c.l.b16 %v2028
        %v2061 = vunpack.c.l.b16 %v2029
        %v2062 = vunpack.c.l.b16 %v2030
        %v2063 = vunpack.c.l.b16 %v2031
        %v2064 = vunpack.c.l.b16 %v2032
        %v2065 = vunpack.c.l.b16 %v2033
        %v2066 = vunpack.c.l.b16 %v2034
        %v2067 = vunpack.c.l.b16 %v2035
        %v2068 = vunpack.c.l.b16 %v2036
        %v2069 = vunpack.c.l.b16 %v2037
        %v2070 = vunpack.c.l.b16 %v2038
        %v2071 = vpack.c.b16 %v2056, %v2055
        %v2072 = vpack.c.b16 %v2058, %v2057
        %v2073 = vpack.c.b16 %v2060, %v2059
        %v2074 = vpack.c.b16 %v2062, %v2061
        %v2075 = vpack.c.b16 %v2064, %v2063
        %v2076 = vpack.c.b16 %v2066, %v2065
        %v2077 = vpack.c.b16 %v2068, %v2067
        %v2078 = vpack.c.b16 %v2070, %v2069
        %2087 = vmatpush.bf16.msra.mxu0 %v2078
        %2088 = vmatpush.bf16.msra.mxu0 %v2077
        %2089 = vmatpush.bf16.msra.mxu0 %v2076
        %2090 = vmatpush.bf16.msra.mxu0 %v2075
        %2091 = vmatpush.bf16.msra.mxu0 %v2074
        %2092 = vmatpush.bf16.msra.mxu0 %v2073
        %2093 = vmatpush.bf16.msra.mxu0 %v2072
        %2094 = vmatpush.bf16.msra.mxu0 %v2071
        %2095 = vmatmul.bf16.gmra.mxu0 %v1128
        %v2096 = vpop.f32.mrf.mxu0
        %v2097 = vadd.f32 0.0, %v2096
        %v2098 = vpop.f32.mrf.mxu0
        %v2099 = vadd.f32 0.0, %v2098
        %2100 = vmatmul.bf16.gmra.mxu0 %v1129
        %v2101 = vpop.f32.mrf.mxu0
        %v2102 = vadd.f32 0.0, %v2101
        %v2103 = vpop.f32.mrf.mxu0
        %v2104 = vadd.f32 0.0, %v2103
        %2105 = vmatmul.bf16.gmra.mxu0 %v1130
        %v2106 = vpop.f32.mrf.mxu0
        %v2107 = vadd.f32 0.0, %v2106
        %v2108 = vpop.f32.mrf.mxu0
        %v2109 = vadd.f32 0.0, %v2108
        %2110 = vmatmul.bf16.gmra.mxu0 %v1131
        %v2111 = vpop.f32.mrf.mxu0
        %v2112 = vadd.f32 0.0, %v2111
        %v2113 = vpop.f32.mrf.mxu0
        %v2114 = vadd.f32 0.0, %v2113
        %2115 = vmatmul.bf16.gmra.mxu0 %v1132
        %v2116 = vpop.f32.mrf.mxu0
        %v2117 = vadd.f32 0.0, %v2116
        %v2118 = vpop.f32.mrf.mxu0
        %v2119 = vadd.f32 0.0, %v2118
        %2120 = vmatmul.bf16.gmra.mxu0 %v1133
        %v2121 = vpop.f32.mrf.mxu0
        %v2122 = vadd.f32 0.0, %v2121
        %v2123 = vpop.f32.mrf.mxu0
        %v2124 = vadd.f32 0.0, %v2123
        %2125 = vmatmul.bf16.gmra.mxu0 %v1134
        %v2126 = vpop.f32.mrf.mxu0
        %v2127 = vadd.f32 0.0, %v2126
        %v2128 = vpop.f32.mrf.mxu0
        %v2129 = vadd.f32 0.0, %v2128
        %2130 = vmatmul.bf16.gmra.mxu0 %v1135
        %v2131 = vpop.f32.mrf.mxu0
        %v2132 = vadd.f32 0.0, %v2131
        %v2133 = vpop.f32.mrf.mxu0
        %v2134 = vadd.f32 0.0, %v2133
        %2135 = vmatmul.bf16.gmra.mxu0 %v1136
        %v2136 = vpop.f32.mrf.mxu0
        %v2137 = vadd.f32 0.0, %v2136
        %v2138 = vpop.f32.mrf.mxu0
        %v2139 = vadd.f32 0.0, %v2138
        %2140 = vmatmul.bf16.gmra.mxu0 %v1137
        %v2141 = vpop.f32.mrf.mxu0
        %v2142 = vadd.f32 0.0, %v2141
        %v2143 = vpop.f32.mrf.mxu0
        %v2144 = vadd.f32 0.0, %v2143
        %2145 = vmatmul.bf16.gmra.mxu0 %v1138
        %v2146 = vpop.f32.mrf.mxu0
        %v2147 = vadd.f32 0.0, %v2146
        %v2148 = vpop.f32.mrf.mxu0
        %v2149 = vadd.f32 0.0, %v2148
        %2150 = vmatmul.bf16.gmra.mxu0 %v1139
        %v2151 = vpop.f32.mrf.mxu0
        %v2152 = vadd.f32 0.0, %v2151
        %v2153 = vpop.f32.mrf.mxu0
        %v2154 = vadd.f32 0.0, %v2153
        %2155 = vmatmul.bf16.gmra.mxu0 %v1140
        %v2156 = vpop.f32.mrf.mxu0
        %v2157 = vadd.f32 0.0, %v2156
        %v2158 = vpop.f32.mrf.mxu0
        %v2159 = vadd.f32 0.0, %v2158
        %2160 = vmatmul.bf16.gmra.mxu0 %v1141
        %v2161 = vpop.f32.mrf.mxu0
        %v2162 = vadd.f32 0.0, %v2161
        %v2163 = vpop.f32.mrf.mxu0
        %v2164 = vadd.f32 0.0, %v2163
        %2165 = vmatmul.bf16.gmra.mxu0 %v1142
        %v2166 = vpop.f32.mrf.mxu0
        %v2167 = vadd.f32 0.0, %v2166
        %v2168 = vpop.f32.mrf.mxu0
        %v2169 = vadd.f32 0.0, %v2168
        %2170 = vmatmul.bf16.gmra.mxu0 %v1143
        %v2171 = vpop.f32.mrf.mxu0
        %v2172 = vadd.f32 0.0, %v2171
        %v2173 = vpop.f32.mrf.mxu0
        %v2174 = vadd.f32 0.0, %v2173
        %2175 = vdwg.mxu0
        %v2176 = vadd.f32 %v1991, %v2097
        %v2177 = vadd.f32 %v1992, %v2099
        %v2178 = vadd.f32 %v1993, %v2102
        %v2179 = vadd.f32 %v1994, %v2104
        %v2180 = vadd.f32 %v1995, %v2107
        %v2181 = vadd.f32 %v1996, %v2109
        %v2182 = vadd.f32 %v1997, %v2112
        %v2183 = vadd.f32 %v1998, %v2114
        %v2184 = vadd.f32 %v1999, %v2117
        %v2185 = vadd.f32 %v2000, %v2119
        %v2186 = vadd.f32 %v2001, %v2122
        %v2187 = vadd.f32 %v2002, %v2124
        %v2188 = vadd.f32 %v2003, %v2127
        %v2189 = vadd.f32 %v2004, %v2129
        %v2190 = vadd.f32 %v2005, %v2132
        %v2191 = vadd.f32 %v2006, %v2134
        %v2192 = vadd.f32 %v2007, %v2137
        %v2193 = vadd.f32 %v2008, %v2139
        %v2194 = vadd.f32 %v2009, %v2142
        %v2195 = vadd.f32 %v2010, %v2144
        %v2196 = vadd.f32 %v2011, %v2147
        %v2197 = vadd.f32 %v2012, %v2149
        %v2198 = vadd.f32 %v2013, %v2152
        %v2199 = vadd.f32 %v2014, %v2154
        %v2200 = vadd.f32 %v2015, %v2157
        %v2201 = vadd.f32 %v2016, %v2159
        %v2202 = vadd.f32 %v2017, %v2162
        %v2203 = vadd.f32 %v2018, %v2164
        %v2204 = vadd.f32 %v2019, %v2167
        %v2205 = vadd.f32 %v2020, %v2169
        %v2206 = vadd.f32 %v2021, %v2172
        %v2207 = vadd.f32 %v2022, %v2174
        %v2208 = vld [vmem:[#allocation10 + $0x180] sm:$0xf]
        %v2209 = vld [vmem:[#allocation10 + $0x184] sm:$0xf]
        %v2210 = vld [vmem:[#allocation10 + $0x188] sm:$0xf]
        %v2211 = vld [vmem:[#allocation10 + $0x18c] sm:$0xf]
        %v2212 = vld [vmem:[#allocation10 + $0x190] sm:$0xf]
        %v2213 = vld [vmem:[#allocation10 + $0x194] sm:$0xf]
        %v2214 = vld [vmem:[#allocation10 + $0x198] sm:$0xf]
        %v2215 = vld [vmem:[#allocation10 + $0x19c] sm:$0xf]
        %v2216 = vld [vmem:[#allocation10 + $0x1a0] sm:$0xf]
        %v2217 = vld [vmem:[#allocation10 + $0x1a4] sm:$0xf]
        %v2218 = vld [vmem:[#allocation10 + $0x1a8] sm:$0xf]
        %v2219 = vld [vmem:[#allocation10 + $0x1ac] sm:$0xf]
        %v2220 = vld [vmem:[#allocation10 + $0x1b0] sm:$0xf]
        %v2221 = vld [vmem:[#allocation10 + $0x1b4] sm:$0xf]
        %v2222 = vld [vmem:[#allocation10 + $0x1b8] sm:$0xf]
        %v2223 = vld [vmem:[#allocation10 + $0x1bc] sm:$0xf]
        %v2240 = vunpack.c.l.b16 %v2208
        %v2241 = vunpack.c.l.b16 %v2209
        %v2242 = vunpack.c.l.b16 %v2210
        %v2243 = vunpack.c.l.b16 %v2211
        %v2244 = vunpack.c.l.b16 %v2212
        %v2245 = vunpack.c.l.b16 %v2213
        %v2246 = vunpack.c.l.b16 %v2214
        %v2247 = vunpack.c.l.b16 %v2215
        %v2248 = vunpack.c.l.b16 %v2216
        %v2249 = vunpack.c.l.b16 %v2217
        %v2250 = vunpack.c.l.b16 %v2218
        %v2251 = vunpack.c.l.b16 %v2219
        %v2252 = vunpack.c.l.b16 %v2220
        %v2253 = vunpack.c.l.b16 %v2221
        %v2254 = vunpack.c.l.b16 %v2222
        %v2255 = vunpack.c.l.b16 %v2223
        %v2256 = vpack.c.b16 %v2241, %v2240
        %v2257 = vpack.c.b16 %v2243, %v2242
        %v2258 = vpack.c.b16 %v2245, %v2244
        %v2259 = vpack.c.b16 %v2247, %v2246
        %v2260 = vpack.c.b16 %v2249, %v2248
        %v2261 = vpack.c.b16 %v2251, %v2250
        %v2262 = vpack.c.b16 %v2253, %v2252
        %v2263 = vpack.c.b16 %v2255, %v2254
        %2272 = vmatpush.bf16.msra.mxu0 %v2263
        %2273 = vmatpush.bf16.msra.mxu0 %v2262
        %2274 = vmatpush.bf16.msra.mxu0 %v2261
        %2275 = vmatpush.bf16.msra.mxu0 %v2260
        %2276 = vmatpush.bf16.msra.mxu0 %v2259
        %2277 = vmatpush.bf16.msra.mxu0 %v2258
        %2278 = vmatpush.bf16.msra.mxu0 %v2257
        %2279 = vmatpush.bf16.msra.mxu0 %v2256
        %2280 = vmatmul.bf16.gmra.mxu0 %v1054
        %v2281 = vpop.f32.mrf.mxu0
        %v2282 = vadd.f32 0.0, %v2281
        %v2283 = vpop.f32.mrf.mxu0
        %v2284 = vadd.f32 0.0, %v2283
        %2285 = vmatmul.bf16.gmra.mxu0 %v1055
        %v2286 = vpop.f32.mrf.mxu0
        %v2287 = vadd.f32 0.0, %v2286
        %v2288 = vpop.f32.mrf.mxu0
        %v2289 = vadd.f32 0.0, %v2288
        %2290 = vmatmul.bf16.gmra.mxu0 %v1056
        %v2291 = vpop.f32.mrf.mxu0
        %v2292 = vadd.f32 0.0, %v2291
        %v2293 = vpop.f32.mrf.mxu0
        %v2294 = vadd.f32 0.0, %v2293
        %2295 = vmatmul.bf16.gmra.mxu0 %v1057
        %v2296 = vpop.f32.mrf.mxu0
        %v2297 = vadd.f32 0.0, %v2296
        %v2298 = vpop.f32.mrf.mxu0
        %v2299 = vadd.f32 0.0, %v2298
        %2300 = vmatmul.bf16.gmra.mxu0 %v1058
        %v2301 = vpop.f32.mrf.mxu0
        %v2302 = vadd.f32 0.0, %v2301
        %v2303 = vpop.f32.mrf.mxu0
        %v2304 = vadd.f32 0.0, %v2303
        %2305 = vmatmul.bf16.gmra.mxu0 %v1059
        %v2306 = vpop.f32.mrf.mxu0
        %v2307 = vadd.f32 0.0, %v2306
        %v2308 = vpop.f32.mrf.mxu0
        %v2309 = vadd.f32 0.0, %v2308
        %2310 = vmatmul.bf16.gmra.mxu0 %v1060
        %v2311 = vpop.f32.mrf.mxu0
        %v2312 = vadd.f32 0.0, %v2311
        %v2313 = vpop.f32.mrf.mxu0
        %v2314 = vadd.f32 0.0, %v2313
        %2315 = vmatmul.bf16.gmra.mxu0 %v1061
        %v2316 = vpop.f32.mrf.mxu0
        %v2317 = vadd.f32 0.0, %v2316
        %v2318 = vpop.f32.mrf.mxu0
        %v2319 = vadd.f32 0.0, %v2318
        %2320 = vmatmul.bf16.gmra.mxu0 %v1062
        %v2321 = vpop.f32.mrf.mxu0
        %v2322 = vadd.f32 0.0, %v2321
        %v2323 = vpop.f32.mrf.mxu0
        %v2324 = vadd.f32 0.0, %v2323
        %2325 = vmatmul.bf16.gmra.mxu0 %v1063
        %v2326 = vpop.f32.mrf.mxu0
        %v2327 = vadd.f32 0.0, %v2326
        %v2328 = vpop.f32.mrf.mxu0
        %v2329 = vadd.f32 0.0, %v2328
        %2330 = vmatmul.bf16.gmra.mxu0 %v1064
        %v2331 = vpop.f32.mrf.mxu0
        %v2332 = vadd.f32 0.0, %v2331
        %v2333 = vpop.f32.mrf.mxu0
        %v2334 = vadd.f32 0.0, %v2333
        %2335 = vmatmul.bf16.gmra.mxu0 %v1065
        %v2336 = vpop.f32.mrf.mxu0
        %v2337 = vadd.f32 0.0, %v2336
        %v2338 = vpop.f32.mrf.mxu0
        %v2339 = vadd.f32 0.0, %v2338
        %2340 = vmatmul.bf16.gmra.mxu0 %v1066
        %v2341 = vpop.f32.mrf.mxu0
        %v2342 = vadd.f32 0.0, %v2341
        %v2343 = vpop.f32.mrf.mxu0
        %v2344 = vadd.f32 0.0, %v2343
        %2345 = vmatmul.bf16.gmra.mxu0 %v1067
        %v2346 = vpop.f32.mrf.mxu0
        %v2347 = vadd.f32 0.0, %v2346
        %v2348 = vpop.f32.mrf.mxu0
        %v2349 = vadd.f32 0.0, %v2348
        %2350 = vmatmul.bf16.gmra.mxu0 %v1068
        %v2351 = vpop.f32.mrf.mxu0
        %v2352 = vadd.f32 0.0, %v2351
        %v2353 = vpop.f32.mrf.mxu0
        %v2354 = vadd.f32 0.0, %v2353
        %2355 = vmatmul.bf16.gmra.mxu0 %v1069
        %v2356 = vpop.f32.mrf.mxu0
        %v2357 = vadd.f32 0.0, %v2356
        %v2358 = vpop.f32.mrf.mxu0
        %v2359 = vadd.f32 0.0, %v2358
        %2360 = vdwg.mxu0
        %v2361 = vadd.f32 %v2176, %v2282
        %v2362 = vadd.f32 %v2177, %v2284
        %v2363 = vadd.f32 %v2178, %v2287
        %v2364 = vadd.f32 %v2179, %v2289
        %v2365 = vadd.f32 %v2180, %v2292
        %v2366 = vadd.f32 %v2181, %v2294
        %v2367 = vadd.f32 %v2182, %v2297
        %v2368 = vadd.f32 %v2183, %v2299
        %v2369 = vadd.f32 %v2184, %v2302
        %v2370 = vadd.f32 %v2185, %v2304
        %v2371 = vadd.f32 %v2186, %v2307
        %v2372 = vadd.f32 %v2187, %v2309
        %v2373 = vadd.f32 %v2188, %v2312
        %v2374 = vadd.f32 %v2189, %v2314
        %v2375 = vadd.f32 %v2190, %v2317
        %v2376 = vadd.f32 %v2191, %v2319
        %v2377 = vadd.f32 %v2192, %v2322
        %v2378 = vadd.f32 %v2193, %v2324
        %v2379 = vadd.f32 %v2194, %v2327
        %v2380 = vadd.f32 %v2195, %v2329
        %v2381 = vadd.f32 %v2196, %v2332
        %v2382 = vadd.f32 %v2197, %v2334
        %v2383 = vadd.f32 %v2198, %v2337
        %v2384 = vadd.f32 %v2199, %v2339
        %v2385 = vadd.f32 %v2200, %v2342
        %v2386 = vadd.f32 %v2201, %v2344
        %v2387 = vadd.f32 %v2202, %v2347
        %v2388 = vadd.f32 %v2203, %v2349
        %v2389 = vadd.f32 %v2204, %v2352
        %v2390 = vadd.f32 %v2205, %v2354
        %v2391 = vadd.f32 %v2206, %v2357
        %v2392 = vadd.f32 %v2207, %v2359
        %v2393 = vld [vmem:[#allocation10 + $0x1c0] sm:$0xf]
        %v2394 = vld [vmem:[#allocation10 + $0x1c4] sm:$0xf]
        %v2395 = vld [vmem:[#allocation10 + $0x1c8] sm:$0xf]
        %v2396 = vld [vmem:[#allocation10 + $0x1cc] sm:$0xf]
        %v2397 = vld [vmem:[#allocation10 + $0x1d0] sm:$0xf]
        %v2398 = vld [vmem:[#allocation10 + $0x1d4] sm:$0xf]
        %v2399 = vld [vmem:[#allocation10 + $0x1d8] sm:$0xf]
        %v2400 = vld [vmem:[#allocation10 + $0x1dc] sm:$0xf]
        %v2401 = vld [vmem:[#allocation10 + $0x1e0] sm:$0xf]
        %v2402 = vld [vmem:[#allocation10 + $0x1e4] sm:$0xf]
        %v2403 = vld [vmem:[#allocation10 + $0x1e8] sm:$0xf]
        %v2404 = vld [vmem:[#allocation10 + $0x1ec] sm:$0xf]
        %v2405 = vld [vmem:[#allocation10 + $0x1f0] sm:$0xf]
        %v2406 = vld [vmem:[#allocation10 + $0x1f4] sm:$0xf]
        %v2407 = vld [vmem:[#allocation10 + $0x1f8] sm:$0xf]
        %v2408 = vld [vmem:[#allocation10 + $0x1fc] sm:$0xf]
        %v2426 = vunpack.c.l.b16 %v2393
        %v2427 = vunpack.c.l.b16 %v2394
        %v2428 = vunpack.c.l.b16 %v2395
        %v2429 = vunpack.c.l.b16 %v2396
        %v2430 = vunpack.c.l.b16 %v2397
        %v2431 = vunpack.c.l.b16 %v2398
        %v2432 = vunpack.c.l.b16 %v2399
        %v2433 = vunpack.c.l.b16 %v2400
        %v2434 = vunpack.c.l.b16 %v2401
        %v2435 = vunpack.c.l.b16 %v2402
        %v2436 = vunpack.c.l.b16 %v2403
        %v2437 = vunpack.c.l.b16 %v2404
        %v2438 = vunpack.c.l.b16 %v2405
        %v2439 = vunpack.c.l.b16 %v2406
        %v2440 = vunpack.c.l.b16 %v2407
        %v2441 = vunpack.c.l.b16 %v2408
        %v2442 = vpack.c.b16 %v2427, %v2426
        %v2443 = vpack.c.b16 %v2429, %v2428
        %v2444 = vpack.c.b16 %v2431, %v2430
        %v2445 = vpack.c.b16 %v2433, %v2432
        %v2446 = vpack.c.b16 %v2435, %v2434
        %v2447 = vpack.c.b16 %v2437, %v2436
        %v2448 = vpack.c.b16 %v2439, %v2438
        %v2449 = vpack.c.b16 %v2441, %v2440
        %2458 = vmatpush.bf16.msra.mxu0 %v2449
        %2459 = vmatpush.bf16.msra.mxu0 %v2448
        %2460 = vmatpush.bf16.msra.mxu0 %v2447
        %2461 = vmatpush.bf16.msra.mxu0 %v2446
        %2462 = vmatpush.bf16.msra.mxu0 %v2445
        %2463 = vmatpush.bf16.msra.mxu0 %v2444
        %2464 = vmatpush.bf16.msra.mxu0 %v2443
        %2465 = vmatpush.bf16.msra.mxu0 %v2442
        %2466 = vmatmul.bf16.gmra.mxu0 %v889
        %v2467 = vpop.f32.mrf.mxu0
        %v2468 = vadd.f32 0.0, %v2467
        %v2469 = vpop.f32.mrf.mxu0
        %v2470 = vadd.f32 0.0, %v2469
        %2471 = vmatmul.bf16.gmra.mxu0 %v890
        %v2472 = vpop.f32.mrf.mxu0
        %v2473 = vadd.f32 0.0, %v2472
        %v2474 = vpop.f32.mrf.mxu0
        %v2475 = vadd.f32 0.0, %v2474
        %2476 = vmatmul.bf16.gmra.mxu0 %v891
        %v2477 = vpop.f32.mrf.mxu0
        %v2478 = vadd.f32 0.0, %v2477
        %v2479 = vpop.f32.mrf.mxu0
        %v2480 = vadd.f32 0.0, %v2479
        %2481 = vmatmul.bf16.gmra.mxu0 %v892
        %v2482 = vpop.f32.mrf.mxu0
        %v2483 = vadd.f32 0.0, %v2482
        %v2484 = vpop.f32.mrf.mxu0
        %v2485 = vadd.f32 0.0, %v2484
        %2486 = vmatmul.bf16.gmra.mxu0 %v893
        %v2487 = vpop.f32.mrf.mxu0
        %v2488 = vadd.f32 0.0, %v2487
        %v2489 = vpop.f32.mrf.mxu0
        %v2490 = vadd.f32 0.0, %v2489
        %2491 = vmatmul.bf16.gmra.mxu0 %v894
        %v2492 = vpop.f32.mrf.mxu0
        %v2493 = vadd.f32 0.0, %v2492
        %v2494 = vpop.f32.mrf.mxu0
        %v2495 = vadd.f32 0.0, %v2494
        %2496 = vmatmul.bf16.gmra.mxu0 %v895
        %v2497 = vpop.f32.mrf.mxu0
        %v2498 = vadd.f32 0.0, %v2497
        %v2499 = vpop.f32.mrf.mxu0
        %v2500 = vadd.f32 0.0, %v2499
        %2501 = vmatmul.bf16.gmra.mxu0 %v896
        %v2502 = vpop.f32.mrf.mxu0
        %v2503 = vadd.f32 0.0, %v2502
        %v2504 = vpop.f32.mrf.mxu0
        %v2505 = vadd.f32 0.0, %v2504
        %2506 = vmatmul.bf16.gmra.mxu0 %v897
        %v2507 = vpop.f32.mrf.mxu0
        %v2508 = vadd.f32 0.0, %v2507
        %v2509 = vpop.f32.mrf.mxu0
        %v2510 = vadd.f32 0.0, %v2509
        %2511 = vmatmul.bf16.gmra.mxu0 %v898
        %v2512 = vpop.f32.mrf.mxu0
        %v2513 = vadd.f32 0.0, %v2512
        %v2514 = vpop.f32.mrf.mxu0
        %v2515 = vadd.f32 0.0, %v2514
        %2516 = vmatmul.bf16.gmra.mxu0 %v899
        %v2517 = vpop.f32.mrf.mxu0
        %v2518 = vadd.f32 0.0, %v2517
        %v2519 = vpop.f32.mrf.mxu0
        %v2520 = vadd.f32 0.0, %v2519
        %2521 = vmatmul.bf16.gmra.mxu0 %v900
        %v2522 = vpop.f32.mrf.mxu0
        %v2523 = vadd.f32 0.0, %v2522
        %v2524 = vpop.f32.mrf.mxu0
        %v2525 = vadd.f32 0.0, %v2524
        %2526 = vmatmul.bf16.gmra.mxu0 %v901
        %v2527 = vpop.f32.mrf.mxu0
        %v2528 = vadd.f32 0.0, %v2527
        %v2529 = vpop.f32.mrf.mxu0
        %v2530 = vadd.f32 0.0, %v2529
        %2531 = vmatmul.bf16.gmra.mxu0 %v902
        %v2532 = vpop.f32.mrf.mxu0
        %v2533 = vadd.f32 0.0, %v2532
        %v2534 = vpop.f32.mrf.mxu0
        %v2535 = vadd.f32 0.0, %v2534
        %2536 = vmatmul.bf16.gmra.mxu0 %v903
        %v2537 = vpop.f32.mrf.mxu0
        %v2538 = vadd.f32 0.0, %v2537
        %v2539 = vpop.f32.mrf.mxu0
        %v2540 = vadd.f32 0.0, %v2539
        %2541 = vmatmul.bf16.gmra.mxu0 %v904
        %v2542 = vpop.f32.mrf.mxu0
        %v2543 = vadd.f32 0.0, %v2542
        %v2544 = vpop.f32.mrf.mxu0
        %v2545 = vadd.f32 0.0, %v2544
        %2546 = vdwg.mxu0
        %v2547 = vadd.f32 %v2361, %v2468
        %v2548 = vadd.f32 %v2362, %v2470
        %v2549 = vadd.f32 %v2363, %v2473
        %v2550 = vadd.f32 %v2364, %v2475
        %v2551 = vadd.f32 %v2365, %v2478
        %v2552 = vadd.f32 %v2366, %v2480
        %v2553 = vadd.f32 %v2367, %v2483
        %v2554 = vadd.f32 %v2368, %v2485
        %v2555 = vadd.f32 %v2369, %v2488
        %v2556 = vadd.f32 %v2370, %v2490
        %v2557 = vadd.f32 %v2371, %v2493
        %v2558 = vadd.f32 %v2372, %v2495
        %v2559 = vadd.f32 %v2373, %v2498
        %v2560 = vadd.f32 %v2374, %v2500
        %v2561 = vadd.f32 %v2375, %v2503
        %v2562 = vadd.f32 %v2376, %v2505
        %v2563 = vadd.f32 %v2377, %v2508
        %v2564 = vadd.f32 %v2378, %v2510
        %v2565 = vadd.f32 %v2379, %v2513
        %v2566 = vadd.f32 %v2380, %v2515
        %v2567 = vadd.f32 %v2381, %v2518
        %v2568 = vadd.f32 %v2382, %v2520
        %v2569 = vadd.f32 %v2383, %v2523
        %v2570 = vadd.f32 %v2384, %v2525
        %v2571 = vadd.f32 %v2385, %v2528
        %v2572 = vadd.f32 %v2386, %v2530
        %v2573 = vadd.f32 %v2387, %v2533
        %v2574 = vadd.f32 %v2388, %v2535
        %v2575 = vadd.f32 %v2389, %v2538
        %v2576 = vadd.f32 %v2390, %v2540
        %v2577 = vadd.f32 %v2391, %v2543
        %v2578 = vadd.f32 %v2392, %v2545
        %v2579 = vld [vmem:[#allocation10 + $0x200] sm:$0xf]
        %v2580 = vld [vmem:[#allocation10 + $0x204] sm:$0xf]
        %v2581 = vld [vmem:[#allocation10 + $0x208] sm:$0xf]
        %v2582 = vld [vmem:[#allocation10 + $0x20c] sm:$0xf]
        %v2583 = vld [vmem:[#allocation10 + $0x210] sm:$0xf]
        %v2584 = vld [vmem:[#allocation10 + $0x214] sm:$0xf]
        %v2585 = vld [vmem:[#allocation10 + $0x218] sm:$0xf]
        %v2586 = vld [vmem:[#allocation10 + $0x21c] sm:$0xf]
        %v2587 = vld [vmem:[#allocation10 + $0x220] sm:$0xf]
        %v2588 = vld [vmem:[#allocation10 + $0x224] sm:$0xf]
        %v2589 = vld [vmem:[#allocation10 + $0x228] sm:$0xf]
        %v2590 = vld [vmem:[#allocation10 + $0x22c] sm:$0xf]
        %v2591 = vld [vmem:[#allocation10 + $0x230] sm:$0xf]
        %v2592 = vld [vmem:[#allocation10 + $0x234] sm:$0xf]
        %v2593 = vld [vmem:[#allocation10 + $0x238] sm:$0xf]
        %v2594 = vld [vmem:[#allocation10 + $0x23c] sm:$0xf]
        %v2611 = vunpack.c.l.b16 %v2579
        %v2612 = vunpack.c.l.b16 %v2580
        %v2613 = vunpack.c.l.b16 %v2581
        %v2614 = vunpack.c.l.b16 %v2582
        %v2615 = vunpack.c.l.b16 %v2583
        %v2616 = vunpack.c.l.b16 %v2584
        %v2617 = vunpack.c.l.b16 %v2585
        %v2618 = vunpack.c.l.b16 %v2586
        %v2619 = vunpack.c.l.b16 %v2587
        %v2620 = vunpack.c.l.b16 %v2588
        %v2621 = vunpack.c.l.b16 %v2589
        %v2622 = vunpack.c.l.b16 %v2590
        %v2623 = vunpack.c.l.b16 %v2591
        %v2624 = vunpack.c.l.b16 %v2592
        %v2625 = vunpack.c.l.b16 %v2593
        %v2626 = vunpack.c.l.b16 %v2594
        %v2627 = vpack.c.b16 %v2612, %v2611
        %v2628 = vpack.c.b16 %v2614, %v2613
        %v2629 = vpack.c.b16 %v2616, %v2615
        %v2630 = vpack.c.b16 %v2618, %v2617
        %v2631 = vpack.c.b16 %v2620, %v2619
        %v2632 = vpack.c.b16 %v2622, %v2621
        %v2633 = vpack.c.b16 %v2624, %v2623
        %v2634 = vpack.c.b16 %v2626, %v2625
        %2643 = vmatpush.bf16.msra.mxu0 %v2634
        %2644 = vmatpush.bf16.msra.mxu0 %v2633
        %2645 = vmatpush.bf16.msra.mxu0 %v2632
        %2646 = vmatpush.bf16.msra.mxu0 %v2631
        %2647 = vmatpush.bf16.msra.mxu0 %v2630
        %2648 = vmatpush.bf16.msra.mxu0 %v2629
        %2649 = vmatpush.bf16.msra.mxu0 %v2628
        %2650 = vmatpush.bf16.msra.mxu0 %v2627
        %2651 = vmatmul.bf16.gmra.mxu0 %v1129
        %v2652 = vpop.f32.mrf.mxu0
        %v2653 = vadd.f32 0.0, %v2652
        %v2654 = vpop.f32.mrf.mxu0
        %v2655 = vadd.f32 0.0, %v2654
        %2656 = vmatmul.bf16.gmra.mxu0 %v1130
        %v2657 = vpop.f32.mrf.mxu0
        %v2658 = vadd.f32 0.0, %v2657
        %v2659 = vpop.f32.mrf.mxu0
        %v2660 = vadd.f32 0.0, %v2659
        %2661 = vmatmul.bf16.gmra.mxu0 %v1131
        %v2662 = vpop.f32.mrf.mxu0
        %v2663 = vadd.f32 0.0, %v2662
        %v2664 = vpop.f32.mrf.mxu0
        %v2665 = vadd.f32 0.0, %v2664
        %2666 = vmatmul.bf16.gmra.mxu0 %v1132
        %v2667 = vpop.f32.mrf.mxu0
        %v2668 = vadd.f32 0.0, %v2667
        %v2669 = vpop.f32.mrf.mxu0
        %v2670 = vadd.f32 0.0, %v2669
        %2671 = vmatmul.bf16.gmra.mxu0 %v1133
        %v2672 = vpop.f32.mrf.mxu0
        %v2673 = vadd.f32 0.0, %v2672
        %v2674 = vpop.f32.mrf.mxu0
        %v2675 = vadd.f32 0.0, %v2674
        %2676 = vmatmul.bf16.gmra.mxu0 %v1134
        %v2677 = vpop.f32.mrf.mxu0
        %v2678 = vadd.f32 0.0, %v2677
        %v2679 = vpop.f32.mrf.mxu0
        %v2680 = vadd.f32 0.0, %v2679
        %2681 = vmatmul.bf16.gmra.mxu0 %v1135
        %v2682 = vpop.f32.mrf.mxu0
        %v2683 = vadd.f32 0.0, %v2682
        %v2684 = vpop.f32.mrf.mxu0
        %v2685 = vadd.f32 0.0, %v2684
        %2686 = vmatmul.bf16.gmra.mxu0 %v1136
        %v2687 = vpop.f32.mrf.mxu0
        %v2688 = vadd.f32 0.0, %v2687
        %v2689 = vpop.f32.mrf.mxu0
        %v2690 = vadd.f32 0.0, %v2689
        %2691 = vmatmul.bf16.gmra.mxu0 %v1137
        %v2692 = vpop.f32.mrf.mxu0
        %v2693 = vadd.f32 0.0, %v2692
        %v2694 = vpop.f32.mrf.mxu0
        %v2695 = vadd.f32 0.0, %v2694
        %2696 = vmatmul.bf16.gmra.mxu0 %v1138
        %v2697 = vpop.f32.mrf.mxu0
        %v2698 = vadd.f32 0.0, %v2697
        %v2699 = vpop.f32.mrf.mxu0
        %v2700 = vadd.f32 0.0, %v2699
        %2701 = vmatmul.bf16.gmra.mxu0 %v1139
        %v2702 = vpop.f32.mrf.mxu0
        %v2703 = vadd.f32 0.0, %v2702
        %v2704 = vpop.f32.mrf.mxu0
        %v2705 = vadd.f32 0.0, %v2704
        %2706 = vmatmul.bf16.gmra.mxu0 %v1140
        %v2707 = vpop.f32.mrf.mxu0
        %v2708 = vadd.f32 0.0, %v2707
        %v2709 = vpop.f32.mrf.mxu0
        %v2710 = vadd.f32 0.0, %v2709
        %2711 = vmatmul.bf16.gmra.mxu0 %v1141
        %v2712 = vpop.f32.mrf.mxu0
        %v2713 = vadd.f32 0.0, %v2712
        %v2714 = vpop.f32.mrf.mxu0
        %v2715 = vadd.f32 0.0, %v2714
        %2716 = vmatmul.bf16.gmra.mxu0 %v1142
        %v2717 = vpop.f32.mrf.mxu0
        %v2718 = vadd.f32 0.0, %v2717
        %v2719 = vpop.f32.mrf.mxu0
        %v2720 = vadd.f32 0.0, %v2719
        %2721 = vmatmul.bf16.gmra.mxu0 %v1143
        %v2722 = vpop.f32.mrf.mxu0
        %v2723 = vadd.f32 0.0, %v2722
        %v2724 = vpop.f32.mrf.mxu0
        %v2725 = vadd.f32 0.0, %v2724
        %2726 = vmatmul.bf16.gmra.mxu0 %v1144
        %v2727 = vpop.f32.mrf.mxu0
        %v2728 = vadd.f32 0.0, %v2727
        %v2729 = vpop.f32.mrf.mxu0
        %v2730 = vadd.f32 0.0, %v2729
        %2731 = vdwg.mxu0
        %v2732 = vadd.f32 %v2547, %v2653
        %v2733 = vadd.f32 %v2548, %v2655
        %v2734 = vadd.f32 %v2549, %v2658
        %v2735 = vadd.f32 %v2550, %v2660
        %v2736 = vadd.f32 %v2551, %v2663
        %v2737 = vadd.f32 %v2552, %v2665
        %v2738 = vadd.f32 %v2553, %v2668
        %v2739 = vadd.f32 %v2554, %v2670
        %v2740 = vadd.f32 %v2555, %v2673
        %v2741 = vadd.f32 %v2556, %v2675
        %v2742 = vadd.f32 %v2557, %v2678
        %v2743 = vadd.f32 %v2558, %v2680
        %v2744 = vadd.f32 %v2559, %v2683
        %v2745 = vadd.f32 %v2560, %v2685
        %v2746 = vadd.f32 %v2561, %v2688
        %v2747 = vadd.f32 %v2562, %v2690
        %v2748 = vadd.f32 %v2563, %v2693
        %v2749 = vadd.f32 %v2564, %v2695
        %v2750 = vadd.f32 %v2565, %v2698
        %v2751 = vadd.f32 %v2566, %v2700
        %v2752 = vadd.f32 %v2567, %v2703
        %v2753 = vadd.f32 %v2568, %v2705
        %v2754 = vadd.f32 %v2569, %v2708
        %v2755 = vadd.f32 %v2570, %v2710
        %v2756 = vadd.f32 %v2571, %v2713
        %v2757 = vadd.f32 %v2572, %v2715
        %v2758 = vadd.f32 %v2573, %v2718
        %v2759 = vadd.f32 %v2574, %v2720
        %v2760 = vadd.f32 %v2575, %v2723
        %v2761 = vadd.f32 %v2576, %v2725
        %v2762 = vadd.f32 %v2577, %v2728
        %v2763 = vadd.f32 %v2578, %v2730
        %v2764 = vperm.slane %v493, 0
        %v2765 = vadd.f32 %v2732, %v2764
        %v2766 = vadd.f32 %v2733, %v2764
        %v2767 = vadd.f32 %v2734, %v2764
        %v2768 = vadd.f32 %v2735, %v2764
        %v2769 = vadd.f32 %v2736, %v2764
        %v2770 = vadd.f32 %v2737, %v2764
        %v2771 = vadd.f32 %v2738, %v2764
        %v2772 = vadd.f32 %v2739, %v2764
        %v2773 = vadd.f32 %v2740, %v2764
        %v2774 = vadd.f32 %v2741, %v2764
        %v2775 = vadd.f32 %v2742, %v2764
        %v2776 = vadd.f32 %v2743, %v2764
        %v2777 = vadd.f32 %v2744, %v2764
        %v2778 = vadd.f32 %v2745, %v2764
        %v2779 = vadd.f32 %v2746, %v2764
        %v2780 = vadd.f32 %v2747, %v2764
        %v2781 = vadd.f32 %v2748, %v2764
        %v2782 = vadd.f32 %v2749, %v2764
        %v2783 = vadd.f32 %v2750, %v2764
        %v2784 = vadd.f32 %v2751, %v2764
        %v2785 = vadd.f32 %v2752, %v2764
        %v2786 = vadd.f32 %v2753, %v2764
        %v2787 = vadd.f32 %v2754, %v2764
        %v2788 = vadd.f32 %v2755, %v2764
        %v2789 = vadd.f32 %v2756, %v2764
        %v2790 = vadd.f32 %v2757, %v2764
        %v2791 = vadd.f32 %v2758, %v2764
        %v2792 = vadd.f32 %v2759, %v2764
        %v2793 = vadd.f32 %v2760, %v2764
        %v2794 = vadd.f32 %v2761, %v2764
        %v2795 = vadd.f32 %v2762, %v2764
        %v2796 = vadd.f32 %v2763, %v2764
        %v2797 = vmax.f32 %v2765, 0.0
        %v2798 = vmax.f32 %v2766, 0.0
        %v2799 = vmax.f32 %v2767, 0.0
        %v2800 = vmax.f32 %v2768, 0.0
        %v2801 = vmax.f32 %v2769, 0.0
        %v2802 = vmax.f32 %v2770, 0.0
        %v2803 = vmax.f32 %v2771, 0.0
        %v2804 = vmax.f32 %v2772, 0.0
        %v2805 = vmax.f32 %v2773, 0.0
        %v2806 = vmax.f32 %v2774, 0.0
        %v2807 = vmax.f32 %v2775, 0.0
        %v2808 = vmax.f32 %v2776, 0.0
        %v2809 = vmax.f32 %v2777, 0.0
        %v2810 = vmax.f32 %v2778, 0.0
        %v2811 = vmax.f32 %v2779, 0.0
        %v2812 = vmax.f32 %v2780, 0.0
        %v2813 = vmax.f32 %v2781, 0.0
        %v2814 = vmax.f32 %v2782, 0.0
        %v2815 = vmax.f32 %v2783, 0.0
        %v2816 = vmax.f32 %v2784, 0.0
        %v2817 = vmax.f32 %v2785, 0.0
        %v2818 = vmax.f32 %v2786, 0.0
        %v2819 = vmax.f32 %v2787, 0.0
        %v2820 = vmax.f32 %v2788, 0.0
        %v2821 = vmax.f32 %v2789, 0.0
        %v2822 = vmax.f32 %v2790, 0.0
        %v2823 = vmax.f32 %v2791, 0.0
        %v2824 = vmax.f32 %v2792, 0.0
        %v2825 = vmax.f32 %v2793, 0.0
        %v2826 = vmax.f32 %v2794, 0.0
        %v2827 = vmax.f32 %v2795, 0.0
        %v2828 = vmax.f32 %v2796, 0.0
        %v2829 = vpack.c.bf16 %v2798, %v2797
        %v2830 = vpack.c.bf16 %v2800, %v2799
        %v2831 = vpack.c.bf16 %v2802, %v2801
        %v2832 = vpack.c.bf16 %v2804, %v2803
        %v2833 = vpack.c.bf16 %v2806, %v2805
        %v2834 = vpack.c.bf16 %v2808, %v2807
        %v2835 = vpack.c.bf16 %v2810, %v2809
        %v2836 = vpack.c.bf16 %v2812, %v2811
        %v2837 = vpack.c.bf16 %v2814, %v2813
        %v2838 = vpack.c.bf16 %v2816, %v2815
        %v2839 = vpack.c.bf16 %v2818, %v2817
        %v2840 = vpack.c.bf16 %v2820, %v2819
        %v2841 = vpack.c.bf16 %v2822, %v2821
        %v2842 = vpack.c.bf16 %v2824, %v2823
        %v2843 = vpack.c.bf16 %v2826, %v2825
        %v2844 = vpack.c.bf16 %v2828, %v2827
        %v2845 = vld [vmem:[#allocation11] sm:$0xf]
        %v2846 = vld [vmem:[#allocation11 + $0x4] sm:$0xf]
        %v2847 = vld [vmem:[#allocation11 + $0x8] sm:$0xf]
        %v2848 = vld [vmem:[#allocation11 + $0xc] sm:$0xf]
        %v2849 = vld [vmem:[#allocation11 + $0x10] sm:$0xf]
        %v2850 = vld [vmem:[#allocation11 + $0x14] sm:$0xf]
        %v2851 = vld [vmem:[#allocation11 + $0x18] sm:$0xf]
        %v2852 = vld [vmem:[#allocation11 + $0x1c] sm:$0xf]
        %v2853 = vld [vmem:[#allocation11 + $0x20] sm:$0xf]
        %v2854 = vld [vmem:[#allocation11 + $0x24] sm:$0xf]
        %v2855 = vld [vmem:[#allocation11 + $0x28] sm:$0xf]
        %v2856 = vld [vmem:[#allocation11 + $0x2c] sm:$0xf]
        %v2857 = vld [vmem:[#allocation11 + $0x30] sm:$0xf]
        %v2858 = vld [vmem:[#allocation11 + $0x34] sm:$0xf]
        %v2859 = vld [vmem:[#allocation11 + $0x38] sm:$0xf]
        %v2860 = vld [vmem:[#allocation11 + $0x3c] sm:$0xf]
        %v2861 = vperm.slane %v494, 0
        %v2878 = vunpack.c.l.b16 %v2845
        %v2879 = vunpack.c.l.b16 %v2846
        %v2880 = vunpack.c.l.b16 %v2847
        %v2881 = vunpack.c.l.b16 %v2848
        %v2882 = vunpack.c.l.b16 %v2849
        %v2883 = vunpack.c.l.b16 %v2850
        %v2884 = vunpack.c.l.b16 %v2851
        %v2885 = vunpack.c.l.b16 %v2852
        %v2886 = vunpack.c.l.b16 %v2853
        %v2887 = vunpack.c.l.b16 %v2854
        %v2888 = vunpack.c.l.b16 %v2855
        %v2889 = vunpack.c.l.b16 %v2856
        %v2890 = vunpack.c.l.b16 %v2857
        %v2891 = vunpack.c.l.b16 %v2858
        %v2892 = vunpack.c.l.b16 %v2859
        %v2893 = vunpack.c.l.b16 %v2860
        %v2894 = vpack.c.b16 %v2879, %v2878
        %v2895 = vpack.c.b16 %v2881, %v2880
        %v2896 = vpack.c.b16 %v2883, %v2882
        %v2897 = vpack.c.b16 %v2885, %v2884
        %v2898 = vpack.c.b16 %v2887, %v2886
        %v2899 = vpack.c.b16 %v2889, %v2888
        %v2900 = vpack.c.b16 %v2891, %v2890
        %v2901 = vpack.c.b16 %v2893, %v2892
        %2910 = vmatpush.bf16.msra.mxu0 %v2901
        %2911 = vmatpush.bf16.msra.mxu0 %v2900
        %2912 = vmatpush.bf16.msra.mxu0 %v2899
        %2913 = vmatpush.bf16.msra.mxu0 %v2898
        %2914 = vmatpush.bf16.msra.mxu0 %v2897
        %2915 = vmatpush.bf16.msra.mxu0 %v2896
        %2916 = vmatpush.bf16.msra.mxu0 %v2895
        %2917 = vmatpush.bf16.msra.mxu0 %v2894
        %2918 = vmatmul.bf16.gmra.mxu0 %v2829
        %v2919 = vpop.f32.mrf.mxu0
        %v2920 = vadd.f32 %v2861, %v2919
        %v2921 = vpop.f32.mrf.mxu0
        %v2922 = vadd.f32 %v2861, %v2921
        %2923 = vmatmul.bf16.gmra.mxu0 %v2830
        %v2924 = vpop.f32.mrf.mxu0
        %v2925 = vadd.f32 %v2861, %v2924
        %v2926 = vpop.f32.mrf.mxu0
        %v2927 = vadd.f32 %v2861, %v2926
        %2928 = vmatmul.bf16.gmra.mxu0 %v2831
        %v2929 = vpop.f32.mrf.mxu0
        %v2930 = vadd.f32 %v2861, %v2929
        %v2931 = vpop.f32.mrf.mxu0
        %v2932 = vadd.f32 %v2861, %v2931
        %2933 = vmatmul.bf16.gmra.mxu0 %v2832
        %v2934 = vpop.f32.mrf.mxu0
        %v2935 = vadd.f32 %v2861, %v2934
        %v2936 = vpop.f32.mrf.mxu0
        %v2937 = vadd.f32 %v2861, %v2936
        %2938 = vmatmul.bf16.gmra.mxu0 %v2833
        %v2939 = vpop.f32.mrf.mxu0
        %v2940 = vadd.f32 %v2861, %v2939
        %v2941 = vpop.f32.mrf.mxu0
        %v2942 = vadd.f32 %v2861, %v2941
        %2943 = vmatmul.bf16.gmra.mxu0 %v2834
        %v2944 = vpop.f32.mrf.mxu0
        %v2945 = vadd.f32 %v2861, %v2944
        %v2946 = vpop.f32.mrf.mxu0
        %v2947 = vadd.f32 %v2861, %v2946
        %2948 = vmatmul.bf16.gmra.mxu0 %v2835
        %v2949 = vpop.f32.mrf.mxu0
        %v2950 = vadd.f32 %v2861, %v2949
        %v2951 = vpop.f32.mrf.mxu0
        %v2952 = vadd.f32 %v2861, %v2951
        %2953 = vmatmul.bf16.gmra.mxu0 %v2836
        %v2954 = vpop.f32.mrf.mxu0
        %v2955 = vadd.f32 %v2861, %v2954
        %v2956 = vpop.f32.mrf.mxu0
        %v2957 = vadd.f32 %v2861, %v2956
        %2958 = vmatmul.bf16.gmra.mxu0 %v2837
        %v2959 = vpop.f32.mrf.mxu0
        %v2960 = vadd.f32 %v2861, %v2959
        %v2961 = vpop.f32.mrf.mxu0
        %v2962 = vadd.f32 %v2861, %v2961
        %2963 = vmatmul.bf16.gmra.mxu0 %v2838
        %v2964 = vpop.f32.mrf.mxu0
        %v2965 = vadd.f32 %v2861, %v2964
        %v2966 = vpop.f32.mrf.mxu0
        %v2967 = vadd.f32 %v2861, %v2966
        %2968 = vmatmul.bf16.gmra.mxu0 %v2839
        %v2969 = vpop.f32.mrf.mxu0
        %v2970 = vadd.f32 %v2861, %v2969
        %v2971 = vpop.f32.mrf.mxu0
        %v2972 = vadd.f32 %v2861, %v2971
        %2973 = vmatmul.bf16.gmra.mxu0 %v2840
        %v2974 = vpop.f32.mrf.mxu0
        %v2975 = vadd.f32 %v2861, %v2974
        %v2976 = vpop.f32.mrf.mxu0
        %v2977 = vadd.f32 %v2861, %v2976
        %2978 = vmatmul.bf16.gmra.mxu0 %v2841
        %v2979 = vpop.f32.mrf.mxu0
        %v2980 = vadd.f32 %v2861, %v2979
        %v2981 = vpop.f32.mrf.mxu0
        %v2982 = vadd.f32 %v2861, %v2981
        %2983 = vmatmul.bf16.gmra.mxu0 %v2842
        %v2984 = vpop.f32.mrf.mxu0
        %v2985 = vadd.f32 %v2861, %v2984
        %v2986 = vpop.f32.mrf.mxu0
        %v2987 = vadd.f32 %v2861, %v2986
        %2988 = vmatmul.bf16.gmra.mxu0 %v2843
        %v2989 = vpop.f32.mrf.mxu0
        %v2990 = vadd.f32 %v2861, %v2989
        %v2991 = vpop.f32.mrf.mxu0
        %v2992 = vadd.f32 %v2861, %v2991
        %2993 = vmatmul.bf16.gmra.mxu0 %v2844
        %v2994 = vpop.f32.mrf.mxu0
        %v2995 = vadd.f32 %v2861, %v2994
        %v2996 = vpop.f32.mrf.mxu0
        %v2997 = vadd.f32 %v2861, %v2996
        %2998 = vdwg.mxu0
        %v2999 = vadd.f32 %v2920, %v511
        %v3000 = vadd.f32 %v2922, %v512
        %v3001 = vadd.f32 %v2925, %v513
        %v3002 = vadd.f32 %v2927, %v514
        %v3003 = vadd.f32 %v2930, %v515
        %v3004 = vadd.f32 %v2932, %v516
        %v3005 = vadd.f32 %v2935, %v517
        %v3006 = vadd.f32 %v2937, %v518
        %v3007 = vadd.f32 %v2940, %v519
        %v3008 = vadd.f32 %v2942, %v520
        %v3009 = vadd.f32 %v2945, %v521
        %v3010 = vadd.f32 %v2947, %v522
        %v3011 = vadd.f32 %v2950, %v523
        %v3012 = vadd.f32 %v2952, %v524
        %v3013 = vadd.f32 %v2955, %v525
        %v3014 = vadd.f32 %v2957, %v526
        %v3015 = vadd.f32 %v2960, %v527
        %v3016 = vadd.f32 %v2962, %v528
        %v3017 = vadd.f32 %v2965, %v529
        %v3018 = vadd.f32 %v2967, %v530
        %v3019 = vadd.f32 %v2970, %v531
        %v3020 = vadd.f32 %v2972, %v532
        %v3021 = vadd.f32 %v2975, %v533
        %v3022 = vadd.f32 %v2977, %v534
        %v3023 = vadd.f32 %v2980, %v535
        %v3024 = vadd.f32 %v2982, %v536
        %v3025 = vadd.f32 %v2985, %v537
        %v3026 = vadd.f32 %v2987, %v538
        %v3027 = vadd.f32 %v2990, %v539
        %v3028 = vadd.f32 %v2992, %v540
        %v3029 = vadd.f32 %v2995, %v541
        %v3030 = vadd.f32 %v2997, %v542
        %v3031 = vmax.f32 %v2999, 0.0
        %v3032 = vmax.f32 %v3000, 0.0
        %v3033 = vmax.f32 %v3001, 0.0
        %v3034 = vmax.f32 %v3002, 0.0
        %v3035 = vmax.f32 %v3003, 0.0
        %v3036 = vmax.f32 %v3004, 0.0
        %v3037 = vmax.f32 %v3005, 0.0
        %v3038 = vmax.f32 %v3006, 0.0
        %v3039 = vmax.f32 %v3007, 0.0
        %v3040 = vmax.f32 %v3008, 0.0
        %v3041 = vmax.f32 %v3009, 0.0
        %v3042 = vmax.f32 %v3010, 0.0
        %v3043 = vmax.f32 %v3011, 0.0
        %v3044 = vmax.f32 %v3012, 0.0
        %v3045 = vmax.f32 %v3013, 0.0
        %v3046 = vmax.f32 %v3014, 0.0
        %v3047 = vmax.f32 %v3015, 0.0
        %v3048 = vmax.f32 %v3016, 0.0
        %v3049 = vmax.f32 %v3017, 0.0
        %v3050 = vmax.f32 %v3018, 0.0
        %v3051 = vmax.f32 %v3019, 0.0
        %v3052 = vmax.f32 %v3020, 0.0
        %v3053 = vmax.f32 %v3021, 0.0
        %v3054 = vmax.f32 %v3022, 0.0
        %v3055 = vmax.f32 %v3023, 0.0
        %v3056 = vmax.f32 %v3024, 0.0
        %v3057 = vmax.f32 %v3025, 0.0
        %v3058 = vmax.f32 %v3026, 0.0
        %v3059 = vmax.f32 %v3027, 0.0
        %v3060 = vmax.f32 %v3028, 0.0
        %v3061 = vmax.f32 %v3029, 0.0
        %v3062 = vmax.f32 %v3030, 0.0
        %3063 = vst [vmem:[%s480] sm:$0xff] %v3031
        %3064 = vst [vmem:[%s480 + $0x8] sm:$0xff] %v3032
        %3065 = vst [vmem:[%s480 + $0x10] sm:$0xff] %v3033
        %3066 = vst [vmem:[%s480 + $0x18] sm:$0xff] %v3034
        %3067 = vst [vmem:[%s480 + $0x20] sm:$0xff] %v3035
        %3068 = vst [vmem:[%s480 + $0x28] sm:$0xff] %v3036
        %3069 = vst [vmem:[%s480 + $0x30] sm:$0xff] %v3037
        %3070 = vst [vmem:[%s480 + $0x38] sm:$0xff] %v3038
        %3071 = vst [vmem:[%s480 + $0x40] sm:$0xff] %v3039
        %3072 = vst [vmem:[%s480 + $0x48] sm:$0xff] %v3040
        %3073 = vst [vmem:[%s480 + $0x50] sm:$0xff] %v3041
        %3074 = vst [vmem:[%s480 + $0x58] sm:$0xff] %v3042
        %3075 = vst [vmem:[%s480 + $0x60] sm:$0xff] %v3043
        %3076 = vst [vmem:[%s480 + $0x68] sm:$0xff] %v3044
        %3077 = vst [vmem:[%s480 + $0x70] sm:$0xff] %v3045
        %3078 = vst [vmem:[%s480 + $0x78] sm:$0xff] %v3046
        %3079 = vst [vmem:[%s480 + $0x80] sm:$0xff] %v3047
        %3080 = vst [vmem:[%s480 + $0x88] sm:$0xff] %v3048
        %3081 = vst [vmem:[%s480 + $0x90] sm:$0xff] %v3049
        %3082 = vst [vmem:[%s480 + $0x98] sm:$0xff] %v3050
        %3083 = vst [vmem:[%s480 + $0xa0] sm:$0xff] %v3051
        %3084 = vst [vmem:[%s480 + $0xa8] sm:$0xff] %v3052
        %3085 = vst [vmem:[%s480 + $0xb0] sm:$0xff] %v3053
        %3086 = vst [vmem:[%s480 + $0xb8] sm:$0xff] %v3054
        %3087 = vst [vmem:[%s480 + $0xc0] sm:$0xff] %v3055
        %3088 = vst [vmem:[%s480 + $0xc8] sm:$0xff] %v3056
        %3089 = vst [vmem:[%s480 + $0xd0] sm:$0xff] %v3057
        %3090 = vst [vmem:[%s480 + $0xd8] sm:$0xff] %v3058
        %3091 = vst [vmem:[%s480 + $0xe0] sm:$0xff] %v3059
        %3092 = vst [vmem:[%s480 + $0xe8] sm:$0xff] %v3060
        %3093 = vst [vmem:[%s480 + $0xf0] sm:$0xff] %v3061
        %3094 = vst [vmem:[%s480 + $0xf8] sm:$0xff] %v3062
        %s3095 = sand.u32 %s235, 1
        %s3096 = scalar_lea.sflag [#allocation4], %s3095
        %s3097 = sand.u32 %s235, 1
        %s3098 = smul.addr %s3097, 256
        %s3099 = scalar_lea.vmem [#allocation13], %s3098
        // Predicated region
        $region73: #{tpu_custom_call.1} parent=47 // pred_check
          %p3100 = pneg %p245
        $region74: #{tpu_custom_call.1} parent=47 // pred_check_branch
          %3102 = sbr.rel (%p3100) target = $region76
        $region75: #{tpu_custom_call.1} parent=47 // pred_region
          %s3103 = smul.u32 16, %s34
          %3105 = vsyncadd %s3096, 0
          %s3106 = smul.addr %s3103, 2
          %s3107 = smul.addr %s33, 32
          %s3108 = sadd.s32 %s3106, %s3107
          %s3109 = smul.addr %s3108, 8
          %s3110 = scalar_lea.hbm %s7, %s3109
          %s3111 = sshll.u32 %s3099, 4
          %s3112 = int_to_ptr.vmem [resolvable:$true] %s3111
          %s3113 = sshll.u32 %s3110, 4
          %s3114 = int_to_ptr.hbm [resolvable:$true] %s3113
          %3119 = dma.vmem_to_hbm [thread:$0]  %s3112, 4096, %s3114, %s3096, 128, 128, 8
        $region76: #{tpu_custom_call.1} parent=47 // pred_fallthru
          _
      $region48: #{tpu_custom_call.1} parent=5 // pred_fallthru
        _
      %p3120 = scmp.le.s32.totalorder 2, %s24
      // Predicated region
      $region77: #{tpu_custom_call.1} parent=5 // pred_check
        %p3121 = pneg %p3120
      $region78: #{tpu_custom_call.1} parent=5 // pred_check_branch
        %3123 = sbr.rel (%p3121) target = $region80
      $region79: #{tpu_custom_call.1} parent=5 // pred_region
        %s3124 = ssub.s32 %s24, 2
        // Predicated region
        $region81: #{tpu_custom_call.1} parent=79 // pred_check
          %p3125 = pneg %p251
        $region82: #{tpu_custom_call.1} parent=79 // pred_check_branch
          %3127 = sbr.rel (%p3125) target = $region84
        $region83: #{tpu_custom_call.1} parent=79 // pred_region
          %s3128 = sand.u32 %s236, 1
          %s3129 = scalar_lea.sflag [#allocation4], %s3128
          %s3130 = sand.u32 %s236, 1
          %s3131 = smul.addr %s3130, 256
          %s3132 = scalar_lea.vmem [#allocation13], %s3131
          %3134 = dma.done %s3129, 4096
        $region84: #{tpu_custom_call.1} parent=79 // pred_fallthru
          _
      $region80: #{tpu_custom_call.1} parent=5 // pred_fallthru
        _
    $region6: #{tpu_custom_call.1} parent=1 // loop_footer
      %s28 = sadd.s32 1, %s24
    $region7: #{tpu_custom_call.1} parent=1 // loop_footer_branch
      %23 = sbr.rel target = $region3
    $region8: #{tpu_custom_call.1} parent=1 // loop_exit
      _
    %3135 = vsyncpa [#allocation3], 1
    %s3136 = scalar_lea.sflag [#allocation3], 1
    %3137 = vsyncpa %s3136, 1
    %3138 = vsyncpa [#allocation6], 1
    %s3139 = scalar_lea.sflag [#allocation6], 1
    %3140 = vsyncpa %s3139, 1
    %3141 = vsyncpa [#allocation9], 1
    %3142 = vsyncpa [#allocation12], 1
    %3143 = vsyncpa [#allocation4], 1
    %s3144 = scalar_lea.sflag [#allocation4], 1
    %3145 = vsyncpa %s3144, 1

// kernel: tpu_custom_call.1
$region0: #{tpu_custom_call.1}
  #allocation0 [shape = 'u32[]', space=smem, size = 0x4, offset = 0x4, fixed_abs, tag = 'smem constant byte address 0x4 - core index']
  #allocation1 [shape = 'u32[72,128]{1,0:T(1,128)}', space=vmem, size = 0x9000, scoped, tag = 'internal scratch']
  %s0 = inlined_call_operand.hbm [shape: f32[2,16,16,128], index: 0, kind: input, shape index: {}]
  %s1 = inlined_call_operand.hbm [shape: f32[2,16,16,128], index: 1, kind: input, shape index: {}]
  %s2 = inlined_call_operand.hbm [shape: f32[2,16,16,128], index: 2, kind: input, shape index: {}]
  %s3 = inlined_call_operand.hbm [shape: bf16[128,128], index: 3, kind: input, shape index: {}]
  %s4 = inlined_call_operand.hbm [shape: bf16[1152,128], index: 4, kind: input, shape index: {}]
  %s5 = inlined_call_operand.hbm [shape: bf16[128,128], index: 5, kind: input, shape index: {}]
  %s6 = inlined_call_operand.vmem [shape: f32[3,128], index: 6, kind: input, shape index: {}]
  %s7 = inlined_call_operand.hbm [shape: f32[2,16,16,128], index: 7, kind: output, shape index: {}]
  %s8 = sld [smem:[#allocation0]]
  $region85: #{tpu_custom_call.1} parent=0
    _
  %s10 = ssub.s32 1, %s8
  %s11 = scalar_select 0, %s10, %s8
  $region1: #{tpu_custom_call.1} parent=0
    #allocation2 [shape = 'u8[262144]{0}', space=vmem, size = 0x40000, scoped, tag = 'input window, operand 0']
    #allocation3 [shape = 's32[2]{0}', space=sflag, size = 0x8, scoped, tag = 'scoped memory for tpu_custom_call.1']
    #allocation4 [shape = 's32[2]{0}', space=sflag, size = 0x8, scoped, tag = 'scoped memory for tpu_custom_call.1']
    #allocation5 [shape = 'u8[16384]{0}', space=vmem, size = 0x4000, scoped, tag = 'input window, operand 1']
    #allocation6 [shape = 's32[2]{0}', space=sflag, size = 0x8, scoped, tag = 'scoped memory for tpu_custom_call.1']
    #allocation7 [shape = 'u8[16384]{0}', space=vmem, size = 0x4000, scoped, tag = 'input window, operand 2']
    #allocation8 [shape = 'u8[32768]{0}', space=vmem, size = 0x8000, scoped, tag = 'input window, operand 3, single buffered']
    #allocation9 [shape = 's32[1]{0}', space=sflag, size = 0x4, scoped, tag = 'scoped memory for tpu_custom_call.1']
    #allocation10 [shape = 'u8[294912]{0}', space=vmem, size = 0x48000, scoped, tag = 'input window, operand 4, single buffered']
    #allocation11 [shape = 'u8[32768]{0}', space=vmem, size = 0x8000, scoped, tag = 'input window, operand 5, single buffered']
    #allocation12 [shape = 's32[1]{0}', space=sflag, size = 0x4, scoped, tag = 'scoped memory for tpu_custom_call.1']
    #allocation13 [shape = 'u8[262144]{0}', space=vmem, size = 0x40000, scoped, tag = 'output window, operand 0']
    %12 = vsyncpa [#allocation3], 0
    %s13 = scalar_lea.sflag [#allocation3], 1
    %14 = vsyncpa %s13, 0
    %15 = vsyncpa [#allocation6], 0
    %s16 = scalar_lea.sflag [#allocation6], 1
    %17 = vsyncpa %s16, 0
    %18 = vsyncpa [#allocation9], 0
    %19 = vsyncpa [#allocation12], 0
    %20 = vsyncpa [#allocation4], 0
    %s21 = scalar_lea.sflag [#allocation4], 1
    %22 = vsyncpa %s21, 0
    loop: start=0, step=1, limit=4
    $region2: #{tpu_custom_call.1} parent=1 // loop_pre_header
      _
    $region3: #{tpu_custom_call.1} parent=1 // loop_header
      %s24 = sphi 0, %s28
      %p25 = scmp.ge.s32.totalorder %s24, 4
      %s31 = sphi 0, %s43
      %s32 = sphi 0, %s39
      %s33 = sphi 0, %s31
      %s34 = sphi 0, %s32
      %s35 = sphi 0, %s33
      %s36 = sphi 0, %s34
      %s48 = sphi 0, %s50
      %s51 = sphi 0, %s48
      %s52 = sphi 0, %s51
      %s68 = sphi 0, %s52
      %s84 = sphi 0, %s86
      %s87 = sphi 0, %s84
      %s88 = sphi 0, %s87
      %s104 = sphi 0, %s88
      %s120 = sphi 0, %s122
      %s123 = sphi 0, %s120
      %s124 = sphi 0, %s123
      %s140 = sphi 0, %s124
      %s144 = sphi 0, %s144
      %s146 = sphi 0, %s144
      %s147 = sphi 0, %s146
      %s161 = sphi 0, %s147
      %s165 = sphi 0, %s165
      %s167 = sphi 0, %s165
      %s168 = sphi 0, %s167
      %s182 = sphi 0, %s168
      %s186 = sphi 0, %s186
      %s188 = sphi 0, %s186
      %s189 = sphi 0, %s188
      %s203 = sphi 0, %s189
      %s207 = sphi 0, %s207
      %s209 = sphi 0, %s207
      %s210 = sphi 0, %s209
      %s224 = sphi 0, %s210
      %s232 = sphi 0, %s234
      %s235 = sphi 0, %s232
      %s236 = sphi 0, %s235
      %s252 = sphi 0, %s236
    $region4: #{tpu_custom_call.1} parent=1 // loop_header_branch
      %27 = sbr.rel (%p25) target = $region8
    $region5: #{tpu_custom_call.1} parent=1 // loop_body
      %s29 = ssub.s32 %s24, 1
      %s30 = ssub.s32 %s24, 2
      %s37 = sadd.s32 1, %s32
      %p38 = scmp.ge.s32.totalorder %s37, 1
      %s39 = scalar_select %p38, 0, %s37
      %s40 = sadd.s32 1, %s31
      %s41 = scalar_select %p38, %s40, %s31
      %p42 = scmp.ge.s32.totalorder %s41, 2
      %s43 = scalar_select %p42, 0, %s41
      %s44 = ssub.s32 %s31, %s43
      %s45 = ssub.s32 %s32, %s39
      %s46 = sor.u32 %s44, %s45
      %p47 = scmp.eq.s32.totalorder %s46, 0
      %s49 = sadd.s32 %s48, 1
      %s50 = scalar_select %p47, %s48, %s49
      %p53 = pneg %p47
      %p54 = scmp.eq.s32.totalorder %s24, 1
      %p55 = por %p53, %p54
      %p56 = scmp.ne.s32.totalorder %s48, %s51
      %p57 = scmp.eq.s32.totalorder %s24, 0
      %p58 = por %p56, %p57
      %p59 = scmp.ne.s32.totalorder %s48, %s51
      %p60 = scmp.eq.s32.totalorder %s29, 1
      %p61 = por %p59, %p60
      %p62 = scmp.ne.s32.totalorder %s51, %s52
      %p63 = scmp.eq.s32.totalorder %s29, 0
      %p64 = por %p62, %p63
      %p65 = scmp.ne.s32.totalorder %s51, %s52
      %p66 = scmp.eq.s32.totalorder %s30, 1
      %p67 = por %p65, %p66
      %p69 = scmp.ne.s32.totalorder %s52, %s68
      %p70 = scmp.eq.s32.totalorder %s30, 0
      %p71 = por %p69, %p70
      %s72 = smul.u32 %s32, 16
      %s73 = ssub.s32 %s72, 1
      %p74 = scmp.gt.s32.totalorder %s73, 0
      %s75 = scalar_select %p74, %s73, 0
      %s76 = smul.u32 %s39, 16
      %s77 = ssub.s32 %s76, 1
      %p78 = scmp.gt.s32.totalorder %s77, 0
      %s79 = scalar_select %p78, %s77, 0
      %s80 = ssub.s32 %s31, %s43
      %s81 = ssub.s32 %s75, %s79
      %s82 = sor.u32 %s80, %s81
      %p83 = scmp.eq.s32.totalorder %s82, 0
      %s85 = sadd.s32 %s84, 1
      %s86 = scalar_select %p83, %s84, %s85
      %p89 = pneg %p83
      %p90 = scmp.eq.s32.totalorder %s24, 1
      %p91 = por %p89, %p90
      %p92 = scmp.ne.s32.totalorder %s84, %s87
      %p93 = scmp.eq.s32.totalorder %s24, 0
      %p94 = por %p92, %p93
      %p95 = scmp.ne.s32.totalorder %s84, %s87
      %p96 = scmp.eq.s32.totalorder %s29, 1
      %p97 = por %p95, %p96
      %p98 = scmp.ne.s32.totalorder %s87, %s88
      %p99 = scmp.eq.s32.totalorder %s29, 0
      %p100 = por %p98, %p99
      %p101 = scmp.ne.s32.totalorder %s87, %s88
      %p102 = scmp.eq.s32.totalorder %s30, 1
      %p103 = por %p101, %p102
      %p105 = scmp.ne.s32.totalorder %s88, %s104
      %p106 = scmp.eq.s32.totalorder %s30, 0
      %p107 = por %p105, %p106
      %s108 = sadd.s32 %s32, 1
      %s109 = smul.u32 %s108, 16
      %p110 = scmp.lt.s32.totalorder %s109, 15
      %s111 = scalar_select %p110, %s109, 15
      %s112 = sadd.s32 %s39, 1
      %s113 = smul.u32 %s112, 16
      %p114 = scmp.lt.s32.totalorder %s113, 15
      %s115 = scalar_select %p114, %s113, 15
      %s116 = ssub.s32 %s31, %s43
      %s117 = ssub.s32 %s111, %s115
      %s118 = sor.u32 %s116, %s117
      %p119 = scmp.eq.s32.totalorder %s118, 0
      %s121 = sadd.s32 %s120, 1
      %s122 = scalar_select %p119, %s120, %s121
      %p125 = pneg %p119
      %p126 = scmp.eq.s32.totalorder %s24, 1
      %p127 = por %p125, %p126
      %p128 = scmp.ne.s32.totalorder %s120, %s123
      %p129 = scmp.eq.s32.totalorder %s24, 0
      %p130 = por %p128, %p129
      %p131 = scmp.ne.s32.totalorder %s120, %s123
      %p132 = scmp.eq.s32.totalorder %s29, 1
      %p133 = por %p131, %p132
      %p134 = scmp.ne.s32.totalorder %s123, %s124
      %p135 = scmp.eq.s32.totalorder %s29, 0
      %p136 = por %p134, %p135
      %p137 = scmp.ne.s32.totalorder %s123, %s124
      %p138 = scmp.eq.s32.totalorder %s30, 1
      %p139 = por %p137, %p138
      %p141 = scmp.ne.s32.totalorder %s124, %s140
      %p142 = scmp.eq.s32.totalorder %s30, 0
      %p143 = por %p141, %p142
      %s145 = sadd.s32 %s144, 1
      %p148 = scmp.eq.s32.totalorder %s24, 1
      %p149 = scmp.ne.s32.totalorder %s144, %s146
      %p150 = scmp.eq.s32.totalorder %s24, 0
      %p151 = por %p149, %p150
      %p152 = scmp.ne.s32.totalorder %s144, %s146
      %p153 = scmp.eq.s32.totalorder %s29, 1
      %p154 = por %p152, %p153
      %p155 = scmp.ne.s32.totalorder %s146, %s147
      %p156 = scmp.eq.s32.totalorder %s29, 0
      %p157 = por %p155, %p156
      %p158 = scmp.ne.s32.totalorder %s146, %s147
      %p159 = scmp.eq.s32.totalorder %s30, 1
      %p160 = por %p158, %p159
      %p162 = scmp.ne.s32.totalorder %s147, %s161
      %p163 = scmp.eq.s32.totalorder %s30, 0
      %p164 = por %p162, %p163
      %s166 = sadd.s32 %s165, 1
      %p169 = scmp.eq.s32.totalorder %s24, 1
      %p170 = scmp.ne.s32.totalorder %s165, %s167
      %p171 = scmp.eq.s32.totalorder %s24, 0
      %p172 = por %p170, %p171
      %p173 = scmp.ne.s32.totalorder %s165, %s167
      %p174 = scmp.eq.s32.totalorder %s29, 1
      %p175 = por %p173, %p174
      %p176 = scmp.ne.s32.totalorder %s167, %s168
      %p177 = scmp.eq.s32.totalorder %s29, 0
      %p178 = por %p176, %p177
      %p179 = scmp.ne.s32.totalorder %s167, %s168
      %p180 = scmp.eq.s32.totalorder %s30, 1
      %p181 = por %p179, %p180
      %p183 = scmp.ne.s32.totalorder %s168, %s182
      %p184 = scmp.eq.s32.totalorder %s30, 0
      %p185 = por %p183, %p184
      %s187 = sadd.s32 %s186, 1
      %p190 = scmp.eq.s32.totalorder %s24, 1
      %p191 = scmp.ne.s32.totalorder %s186, %s188
      %p192 = scmp.eq.s32.totalorder %s24, 0
      %p193 = por %p191, %p192
      %p194 = scmp.ne.s32.totalorder %s186, %s188
      %p195 = scmp.eq.s32.totalorder %s29, 1
      %p196 = por %p194, %p195
      %p197 = scmp.ne.s32.totalorder %s188, %s189
      %p198 = scmp.eq.s32.totalorder %s29, 0
      %p199 = por %p197, %p198
      %p200 = scmp.ne.s32.totalorder %s188, %s189
      %p201 = scmp.eq.s32.totalorder %s30, 1
      %p202 = por %p200, %p201
      %p204 = scmp.ne.s32.totalorder %s189, %s203
      %p205 = scmp.eq.s32.totalorder %s30, 0
      %p206 = por %p204, %p205
      %s208 = sadd.s32 %s207, 1
      %p211 = scmp.eq.s32.totalorder %s24, 1
      %p212 = scmp.ne.s32.totalorder %s207, %s209
      %p213 = scmp.eq.s32.totalorder %s24, 0
      %p214 = por %p212, %p213
      %p215 = scmp.ne.s32.totalorder %s207, %s209
      %p216 = scmp.eq.s32.totalorder %s29, 1
      %p217 = por %p215, %p216
      %p218 = scmp.ne.s32.totalorder %s209, %s210
      %p219 = scmp.eq.s32.totalorder %s29, 0
      %p220 = por %p218, %p219
      %p221 = scmp.ne.s32.totalorder %s209, %s210
      %p222 = scmp.eq.s32.totalorder %s30, 1
      %p223 = por %p221, %p222
      %p225 = scmp.ne.s32.totalorder %s210, %s224
      %p226 = scmp.eq.s32.totalorder %s30, 0
      %p227 = por %p225, %p226
      %s228 = ssub.s32 %s31, %s43
      %s229 = ssub.s32 %s32, %s39
      %s230 = sor.u32 %s228, %s229
      %p231 = scmp.eq.s32.totalorder %s230, 0
      %s233 = sadd.s32 %s232, 1
      %s234 = scalar_select %p231, %s232, %s233
      %p237 = pneg %p231
      %p238 = scmp.eq.s32.totalorder %s24, 1
      %p239 = por %p237, %p238
      %p240 = scmp.ne.s32.totalorder %s232, %s235
      %p241 = scmp.eq.s32.totalorder %s24, 0
      %p242 = por %p240, %p241
      %p243 = scmp.ne.s32.totalorder %s232, %s235
      %p244 = scmp.eq.s32.totalorder %s29, 1
      %p245 = por %p243, %p244
      %p246 = scmp.ne.s32.totalorder %s235, %s236
      %p247 = scmp.eq.s32.totalorder %s29, 0
      %p248 = por %p246, %p247
      %p249 = scmp.ne.s32.totalorder %s235, %s236
      %p250 = scmp.eq.s32.totalorder %s30, 1
      %p251 = por %p249, %p250
      %p253 = scmp.ne.s32.totalorder %s236, %s252
      %p254 = scmp.eq.s32.totalorder %s30, 0
      %p255 = por %p253, %p254
      %p256 = scmp.le.s32.totalorder 1, %s24
      %p257 = scmp.lt.s32.totalorder %s24, 3
      %p258 = pnand %p256, %p257
      %p259 = pneg %p258
      // Predicated region
      $region9: #{tpu_custom_call.1} parent=5 // pred_check
        _
      $region10: #{tpu_custom_call.1} parent=5 // pred_check_branch
        %261 = sbr.rel (%p258) target = $region12
      $region11: #{tpu_custom_call.1} parent=5 // pred_region
        %s262 = ssub.s32 %s24, 1
        // Predicated region
        $region13: #{tpu_custom_call.1} parent=11 // pred_check
          %p263 = pneg %p157
        $region14: #{tpu_custom_call.1} parent=11 // pred_check_branch
          %265 = sbr.rel (%p263) target = $region16
        $region15: #{tpu_custom_call.1} parent=11 // pred_region
          %267 = vsyncadd [#allocation9], 0
          %s268 = sshll.u32 %s3, 4
          %s269 = int_to_ptr.hbm [resolvable:$true] %s268
          %s270 = sshll.u32 [#allocation8], 4
          %s271 = int_to_ptr.vmem [resolvable:$true] %s270
          %276 = dma.hbm_to_vmem [thread:$0]  %s269, 1024, %s271, [#allocation9], 64, 64, 4
        $region16: #{tpu_custom_call.1} parent=11 // pred_fallthru
          _
        // Predicated region
        $region17: #{tpu_custom_call.1} parent=11 // pred_check
          %p277 = pneg %p178
        $region18: #{tpu_custom_call.1} parent=11 // pred_check_branch
          %279 = sbr.rel (%p277) target = $region20
        $region19: #{tpu_custom_call.1} parent=11 // pred_region
          %281 = vsyncadd [#allocation9], 0
          %s282 = sshll.u32 %s4, 4
          %s283 = int_to_ptr.hbm [resolvable:$true] %s282
          %s284 = sshll.u32 [#allocation10], 4
          %s285 = int_to_ptr.vmem [resolvable:$true] %s284
          %290 = dma.hbm_to_vmem [thread:$0]  %s283, 9216, %s285, [#allocation9], 64, 64, 4
        $region20: #{tpu_custom_call.1} parent=11 // pred_fallthru
          _
        // Predicated region
        $region21: #{tpu_custom_call.1} parent=11 // pred_check
          %p291 = pneg %p199
        $region22: #{tpu_custom_call.1} parent=11 // pred_check_branch
          %293 = sbr.rel (%p291) target = $region24
        $region23: #{tpu_custom_call.1} parent=11 // pred_region
          %295 = vsyncadd [#allocation12], 0
          %s296 = sshll.u32 %s5, 4
          %s297 = int_to_ptr.hbm [resolvable:$true] %s296
          %s298 = sshll.u32 [#allocation11], 4
          %s299 = int_to_ptr.vmem [resolvable:$true] %s298
          %304 = dma.hbm_to_vmem [thread:$0]  %s297, 1024, %s299, [#allocation12], 64, 64, 4
        $region24: #{tpu_custom_call.1} parent=11 // pred_fallthru
          _
        // Predicated region
        $region25: #{tpu_custom_call.1} parent=11 // pred_check
          %p305 = pneg %p220
        $region26: #{tpu_custom_call.1} parent=11 // pred_check_branch
          %307 = sbr.rel (%p305) target = $region28
        $region27: #{tpu_custom_call.1} parent=11 // pred_region
          _
        $region28: #{tpu_custom_call.1} parent=11 // pred_fallthru
          _
      $region12: #{tpu_custom_call.1} parent=5 // pred_fallthru
        _
      %p308 = scmp.lt.s32.totalorder %s24, 2
      // Predicated region
      $region29: #{tpu_custom_call.1} parent=5 // pred_check
        %p309 = pneg %p308
      $region30: #{tpu_custom_call.1} parent=5 // pred_check_branch
        %311 = sbr.rel (%p309) target = $region32
      $region31: #{tpu_custom_call.1} parent=5 // pred_region
        // Predicated region
        $region33: #{tpu_custom_call.1} parent=31 // pred_check
          %p312 = pneg %p58
        $region34: #{tpu_custom_call.1} parent=31 // pred_check_branch
          %314 = sbr.rel (%p312) target = $region36
        $region35: #{tpu_custom_call.1} parent=31 // pred_region
          %s315 = sand.u32 %s48, 1
          %s316 = scalar_lea.sflag [#allocation3], %s315
          %s317 = sand.u32 %s48, 1
          %s318 = smul.addr %s317, 256
          %s319 = scalar_lea.vmem [#allocation2], %s318
          %s320 = smul.u32 16, %s32
          %322 = vsyncadd %s316, 0
          %s323 = smul.addr %s320, 2
          %s324 = smul.addr %s31, 32
          %s325 = sadd.s32 %s323, %s324
          %s326 = smul.addr %s325, 8
          %s327 = scalar_lea.hbm %s0, %s326
          %s328 = sshll.u32 %s327, 4
          %s329 = int_to_ptr.hbm [resolvable:$true] %s328
          %s330 = sshll.u32 %s319, 4
          %s331 = int_to_ptr.vmem [resolvable:$true] %s330
          %336 = dma.hbm_to_vmem [thread:$0]  %s329, 4096, %s331, %s316, 128, 128, 8
        $region36: #{tpu_custom_call.1} parent=31 // pred_fallthru
          _
        // Predicated region
        $region37: #{tpu_custom_call.1} parent=31 // pred_check
          %p337 = pneg %p94
        $region38: #{tpu_custom_call.1} parent=31 // pred_check_branch
          %339 = sbr.rel (%p337) target = $region40
        $region39: #{tpu_custom_call.1} parent=31 // pred_region
          %s340 = sand.u32 %s24, 1
          %s341 = scalar_lea.sflag [#allocation6], %s340
          %s342 = sand.u32 %s84, 1
          %s343 = smul.addr %s342, 16
          %s344 = scalar_lea.vmem [#allocation5], %s343
          %s345 = smul.u32 %s32, 16
          %s346 = ssub.s32 %s345, 1
          %p347 = scmp.gt.s32.totalorder %s346, 0
          %s348 = scalar_select %p347, %s346, 0
          %350 = vsyncadd %s341, 0
          %s351 = smul.addr %s348, 2
          %s352 = smul.addr %s31, 32
          %s353 = sadd.s32 %s351, %s352
          %s354 = smul.addr %s353, 8
          %s355 = scalar_lea.hbm %s1, %s354
          %s356 = sshll.u32 %s355, 4
          %s357 = int_to_ptr.hbm [resolvable:$true] %s356
          %s358 = sshll.u32 %s344, 4
          %s359 = int_to_ptr.vmem [resolvable:$true] %s358
          %364 = dma.hbm_to_vmem [thread:$0]  %s357, 256, %s359, %s341, 128, 128, 8
        $region40: #{tpu_custom_call.1} parent=31 // pred_fallthru
          _
        // Predicated region
        $region41: #{tpu_custom_call.1} parent=31 // pred_check
          %p365 = pneg %p130
        $region42: #{tpu_custom_call.1} parent=31 // pred_check_branch
          %367 = sbr.rel (%p365) target = $region44
        $region43: #{tpu_custom_call.1} parent=31 // pred_region
          %s368 = sand.u32 %s24, 1
          %s369 = scalar_lea.sflag [#allocation6], %s368
          %s370 = sand.u32 %s120, 1
          %s371 = smul.addr %s370, 16
          %s372 = scalar_lea.vmem [#allocation7], %s371
          %s373 = sadd.s32 %s32, 1
          %s374 = smul.u32 %s373, 16
          %p375 = scmp.lt.s32.totalorder %s374, 15
          %s376 = scalar_select %p375, %s374, 15
          %378 = vsyncadd %s369, 0
          %s379 = smul.addr %s376, 2
          %s380 = smul.addr %s31, 32
          %s381 = sadd.s32 %s379, %s380
          %s382 = smul.addr %s381, 8
          %s383 = scalar_lea.hbm %s2, %s382
          %s384 = sshll.u32 %s383, 4
          %s385 = int_to_ptr.hbm [resolvable:$true] %s384
          %s386 = sshll.u32 %s372, 4
          %s387 = int_to_ptr.vmem [resolvable:$true] %s386
          %392 = dma.hbm_to_vmem [thread:$0]  %s385, 256, %s387, %s369, 128, 128, 8
        $region44: #{tpu_custom_call.1} parent=31 // pred_fallthru
          _
      $region32: #{tpu_custom_call.1} parent=5 // pred_fallthru
        _
      %p393 = scmp.le.s32.totalorder 1, %s24
      %p394 = scmp.lt.s32.totalorder %s24, 3
      %p395 = pnand %p393, %p394
      %p396 = pneg %p395
      // Predicated region
      $region45: #{tpu_custom_call.1} parent=5 // pred_check
        _
      $region46: #{tpu_custom_call.1} parent=5 // pred_check_branch
        %398 = sbr.rel (%p395) target = $region48
      $region47: #{tpu_custom_call.1} parent=5 // pred_region
        %s399 = ssub.s32 %s24, 1
        %s400 = sand.u32 %s51, 1
        %s401 = scalar_lea.sflag [#allocation3], %s400
        %s402 = sand.u32 %s51, 1
        %s403 = smul.addr %s402, 256
        %s404 = scalar_lea.vmem [#allocation2], %s403
        // Predicated region
        $region49: #{tpu_custom_call.1} parent=47 // pred_check
          %p405 = pneg %p64
        $region50: #{tpu_custom_call.1} parent=47 // pred_check_branch
          %407 = sbr.rel (%p405) target = $region52
        $region51: #{tpu_custom_call.1} parent=47 // pred_region
          %409 = dma.done %s401, 4096
        $region52: #{tpu_custom_call.1} parent=47 // pred_fallthru
          _
        %s410 = sand.u32 %s29, 1
        %s411 = scalar_lea.sflag [#allocation6], %s410
        %s412 = sand.u32 %s87, 1
        %s413 = smul.addr %s412, 16
        %s414 = scalar_lea.vmem [#allocation5], %s413
        // Predicated region
        $region53: #{tpu_custom_call.1} parent=47 // pred_check
          %p415 = pneg %p100
        $region54: #{tpu_custom_call.1} parent=47 // pred_check_branch
          %417 = sbr.rel (%p415) target = $region56
        $region55: #{tpu_custom_call.1} parent=47 // pred_region
          %419 = dma.done %s411, 256
        $region56: #{tpu_custom_call.1} parent=47 // pred_fallthru
          _
        %s420 = sand.u32 %s29, 1
        %s421 = scalar_lea.sflag [#allocation6], %s420
        %s422 = sand.u32 %s123, 1
        %s423 = smul.addr %s422, 16
        %s424 = scalar_lea.vmem [#allocation7], %s423
        // Predicated region
        $region57: #{tpu_custom_call.1} parent=47 // pred_check
          %p425 = pneg %p136
        $region58: #{tpu_custom_call.1} parent=47 // pred_check_branch
          %427 = sbr.rel (%p425) target = $region60
        $region59: #{tpu_custom_call.1} parent=47 // pred_region
          %429 = dma.done %s421, 256
        $region60: #{tpu_custom_call.1} parent=47 // pred_fallthru
          _
        // Predicated region
        $region61: #{tpu_custom_call.1} parent=47 // pred_check
          %p430 = pneg %p157
        $region62: #{tpu_custom_call.1} parent=47 // pred_check_branch
          %432 = sbr.rel (%p430) target = $region64
        $region63: #{tpu_custom_call.1} parent=47 // pred_region
          %434 = dma.done [#allocation9], 1024
        $region64: #{tpu_custom_call.1} parent=47 // pred_fallthru
          _
        // Predicated region
        $region65: #{tpu_custom_call.1} parent=47 // pred_check
          %p435 = pneg %p178
        $region66: #{tpu_custom_call.1} parent=47 // pred_check_branch
          %437 = sbr.rel (%p435) target = $region68
        $region67: #{tpu_custom_call.1} parent=47 // pred_region
          %439 = dma.done [#allocation9], 9216
        $region68: #{tpu_custom_call.1} parent=47 // pred_fallthru
          _
        // Predicated region
        $region69: #{tpu_custom_call.1} parent=47 // pred_check
          %p440 = pneg %p199
        $region70: #{tpu_custom_call.1} parent=47 // pred_check_branch
          %442 = sbr.rel (%p440) target = $region72
        $region71: #{tpu_custom_call.1} parent=47 // pred_region
          %444 = dma.done [#allocation12], 1024
        $region72: #{tpu_custom_call.1} parent=47 // pred_fallthru
          _
        %s445 = sand.u32 %s51, 1
        %s446 = scalar_lea.sflag [#allocation3], %s445
        %s447 = sand.u32 %s51, 1
        %s448 = smul.addr %s447, 256
        %s449 = scalar_lea.vmem [#allocation2], %s448
        %p450 = pneg %p64
        %p451 = pneg %p61
        %s452 = sand.u32 %s29, 1
        %s453 = scalar_lea.sflag [#allocation6], %s452
        %s454 = sand.u32 %s87, 1
        %s455 = smul.addr %s454, 16
        %s456 = scalar_lea.vmem [#allocation5], %s455
        %p457 = pneg %p100
        %p458 = pneg %p97
        %s459 = sand.u32 %s29, 1
        %s460 = scalar_lea.sflag [#allocation6], %s459
        %s461 = sand.u32 %s123, 1
        %s462 = smul.addr %s461, 16
        %s463 = scalar_lea.vmem [#allocation7], %s462
        %p464 = pneg %p136
        %p465 = pneg %p133
        %p466 = pneg %p157
        %p467 = pneg %p154
        %p468 = pneg %p178
        %p469 = pneg %p175
        %p470 = pneg %p199
        %p471 = pneg %p196
        %p472 = pneg %p220
        %p473 = pneg %p217
        %p474 = pneg %p248
        %p475 = pneg %p245
        %s476 = sand.u32 %s235, 1
        %s477 = scalar_lea.sflag [#allocation4], %s476
        %s478 = sand.u32 %s235, 1
        %s479 = smul.addr %s478, 256
        %s480 = scalar_lea.vmem [#allocation13], %s479
        %s481 = smul.u32 16, %s34
        %s482 = smul.u32 %s34, 16
        %s483 = ssub.s32 %s482, 1
        %p484 = scmp.gt.s32.totalorder %s483, 0
        %s485 = scalar_select %p484, %s483, 0
        %s486 = sadd.s32 %s34, 1
        %s487 = smul.u32 %s486, 16
        %p488 = scmp.lt.s32.totalorder %s487, 15
        %s489 = scalar_select %p488, %s487, 15
        %s490 = smul.u32 16, %s34
        %v492 = vld [vmem:[%s6] sm:$0x1]
        %v493 = vld [vmem:[%s6 + $0x1] sm:$0x1]
        %v494 = vld [vmem:[%s6 + $0x2] sm:$0x1]
        %v495 = vld [vmem:[#allocation8] sm:$0xf]
        %v496 = vld [vmem:[#allocation8 + $0x4] sm:$0xf]
        %v497 = vld [vmem:[#allocation8 + $0x8] sm:$0xf]
        %v498 = vld [vmem:[#allocation8 + $0xc] sm:$0xf]
        %v499 = vld [vmem:[#allocation8 + $0x10] sm:$0xf]
        %v500 = vld [vmem:[#allocation8 + $0x14] sm:$0xf]
        %v501 = vld [vmem:[#allocation8 + $0x18] sm:$0xf]
        %v502 = vld [vmem:[#allocation8 + $0x1c] sm:$0xf]
        %v503 = vld [vmem:[#allocation8 + $0x20] sm:$0xf]
        %v504 = vld [vmem:[#allocation8 + $0x24] sm:$0xf]
        %v505 = vld [vmem:[#allocation8 + $0x28] sm:$0xf]
        %v506 = vld [vmem:[#allocation8 + $0x2c] sm:$0xf]
        %v507 = vld [vmem:[#allocation8 + $0x30] sm:$0xf]
        %v508 = vld [vmem:[#allocation8 + $0x34] sm:$0xf]
        %v509 = vld [vmem:[#allocation8 + $0x38] sm:$0xf]
        %v510 = vld [vmem:[#allocation8 + $0x3c] sm:$0xf]
        %v511 = vld [vmem:[%s404] sm:$0xff]
        %v512 = vld [vmem:[%s404 + $0x8] sm:$0xff]
        %v513 = vld [vmem:[%s404 + $0x10] sm:$0xff]
        %v514 = vld [vmem:[%s404 + $0x18] sm:$0xff]
        %v515 = vld [vmem:[%s404 + $0x20] sm:$0xff]
        %v516 = vld [vmem:[%s404 + $0x28] sm:$0xff]
        %v517 = vld [vmem:[%s404 + $0x30] sm:$0xff]
        %v518 = vld [vmem:[%s404 + $0x38] sm:$0xff]
        %v519 = vld [vmem:[%s404 + $0x40] sm:$0xff]
        %v520 = vld [vmem:[%s404 + $0x48] sm:$0xff]
        %v521 = vld [vmem:[%s404 + $0x50] sm:$0xff]
        %v522 = vld [vmem:[%s404 + $0x58] sm:$0xff]
        %v523 = vld [vmem:[%s404 + $0x60] sm:$0xff]
        %v524 = vld [vmem:[%s404 + $0x68] sm:$0xff]
        %v525 = vld [vmem:[%s404 + $0x70] sm:$0xff]
        %v526 = vld [vmem:[%s404 + $0x78] sm:$0xff]
        %v527 = vld [vmem:[%s404 + $0x80] sm:$0xff]
        %v528 = vld [vmem:[%s404 + $0x88] sm:$0xff]
        %v529 = vld [vmem:[%s404 + $0x90] sm:$0xff]
        %v530 = vld [vmem:[%s404 + $0x98] sm:$0xff]
        %v531 = vld [vmem:[%s404 + $0xa0] sm:$0xff]
        %v532 = vld [vmem:[%s404 + $0xa8] sm:$0xff]
        %v533 = vld [vmem:[%s404 + $0xb0] sm:$0xff]
        %v534 = vld [vmem:[%s404 + $0xb8] sm:$0xff]
        %v535 = vld [vmem:[%s404 + $0xc0] sm:$0xff]
        %v536 = vld [vmem:[%s404 + $0xc8] sm:$0xff]
        %v537 = vld [vmem:[%s404 + $0xd0] sm:$0xff]
        %v538 = vld [vmem:[%s404 + $0xd8] sm:$0xff]
        %v539 = vld [vmem:[%s404 + $0xe0] sm:$0xff]
        %v540 = vld [vmem:[%s404 + $0xe8] sm:$0xff]
        %v541 = vld [vmem:[%s404 + $0xf0] sm:$0xff]
        %v542 = vld [vmem:[%s404 + $0xf8] sm:$0xff]
        %v543 = vpack.c.bf16 %v512, %v511
        %v544 = vpack.c.bf16 %v514, %v513
        %v545 = vpack.c.bf16 %v516, %v515
        %v546 = vpack.c.bf16 %v518, %v517
        %v547 = vpack.c.bf16 %v520, %v519
        %v548 = vpack.c.bf16 %v522, %v521
        %v549 = vpack.c.bf16 %v524, %v523
        %v550 = vpack.c.bf16 %v526, %v525
        %v551 = vpack.c.bf16 %v528, %v527
        %v552 = vpack.c.bf16 %v530, %v529
        %v553 = vpack.c.bf16 %v532, %v531
        %v554 = vpack.c.bf16 %v534, %v533
        %v555 = vpack.c.bf16 %v536, %v535
        %v556 = vpack.c.bf16 %v538, %v537
        %v557 = vpack.c.bf16 %v540, %v539
        %v558 = vpack.c.bf16 %v542, %v541
        %v559 = vperm.slane %v492, 0
        %v576 = vunpack.c.l.b16 %v495
        %v577 = vunpack.c.l.b16 %v496
        %v578 = vunpack.c.l.b16 %v497
        %v579 = vunpack.c.l.b16 %v498
        %v580 = vunpack.c.l.b16 %v499
        %v581 = vunpack.c.l.b16 %v500
        %v582 = vunpack.c.l.b16 %v501
        %v583 = vunpack.c.l.b16 %v502
        %v584 = vunpack.c.l.b16 %v503
        %v585 = vunpack.c.l.b16 %v504
        %v586 = vunpack.c.l.b16 %v505
        %v587 = vunpack.c.l.b16 %v506
        %v588 = vunpack.c.l.b16 %v507
        %v589 = vunpack.c.l.b16 %v508
        %v590 = vunpack.c.l.b16 %v509
        %v591 = vunpack.c.l.b16 %v510
        %v592 = vpack.c.b16 %v577, %v576
        %v593 = vpack.c.b16 %v579, %v578
        %v594 = vpack.c.b16 %v581, %v580
        %v595 = vpack.c.b16 %v583, %v582
        %v596 = vpack.c.b16 %v585, %v584
        %v597 = vpack.c.b16 %v587, %v586
        %v598 = vpack.c.b16 %v589, %v588
        %v599 = vpack.c.b16 %v591, %v590
        %608 = vmatpush.bf16.msra.mxu0 %v599
        %609 = vmatpush.bf16.msra.mxu0 %v598
        %610 = vmatpush.bf16.msra.mxu0 %v597
        %611 = vmatpush.bf16.msra.mxu0 %v596
        %612 = vmatpush.bf16.msra.mxu0 %v595
        %613 = vmatpush.bf16.msra.mxu0 %v594
        %614 = vmatpush.bf16.msra.mxu0 %v593
        %615 = vmatpush.bf16.msra.mxu0 %v592
        %616 = vmatmul.bf16.gmra.mxu0 %v543
        %v617 = vpop.f32.mrf.mxu0
        %v618 = vadd.f32 %v559, %v617
        %v619 = vpop.f32.mrf.mxu0
        %v620 = vadd.f32 %v559, %v619
        %621 = vmatmul.bf16.gmra.mxu0 %v544
        %v622 = vpop.f32.mrf.mxu0
        %v623 = vadd.f32 %v559, %v622
        %v624 = vpop.f32.mrf.mxu0
        %v625 = vadd.f32 %v559, %v624
        %626 = vmatmul.bf16.gmra.mxu0 %v545
        %v627 = vpop.f32.mrf.mxu0
        %v628 = vadd.f32 %v559, %v627
        %v629 = vpop.f32.mrf.mxu0
        %v630 = vadd.f32 %v559, %v629
        %631 = vmatmul.bf16.gmra.mxu0 %v546
        %v632 = vpop.f32.mrf.mxu0
        %v633 = vadd.f32 %v559, %v632
        %v634 = vpop.f32.mrf.mxu0
        %v635 = vadd.f32 %v559, %v634
        %636 = vmatmul.bf16.gmra.mxu0 %v547
        %v637 = vpop.f32.mrf.mxu0
        %v638 = vadd.f32 %v559, %v637
        %v639 = vpop.f32.mrf.mxu0
        %v640 = vadd.f32 %v559, %v639
        %641 = vmatmul.bf16.gmra.mxu0 %v548
        %v642 = vpop.f32.mrf.mxu0
        %v643 = vadd.f32 %v559, %v642
        %v644 = vpop.f32.mrf.mxu0
        %v645 = vadd.f32 %v559, %v644
        %646 = vmatmul.bf16.gmra.mxu0 %v549
        %v647 = vpop.f32.mrf.mxu0
        %v648 = vadd.f32 %v559, %v647
        %v649 = vpop.f32.mrf.mxu0
        %v650 = vadd.f32 %v559, %v649
        %651 = vmatmul.bf16.gmra.mxu0 %v550
        %v652 = vpop.f32.mrf.mxu0
        %v653 = vadd.f32 %v559, %v652
        %v654 = vpop.f32.mrf.mxu0
        %v655 = vadd.f32 %v559, %v654
        %656 = vmatmul.bf16.gmra.mxu0 %v551
        %v657 = vpop.f32.mrf.mxu0
        %v658 = vadd.f32 %v559, %v657
        %v659 = vpop.f32.mrf.mxu0
        %v660 = vadd.f32 %v559, %v659
        %661 = vmatmul.bf16.gmra.mxu0 %v552
        %v662 = vpop.f32.mrf.mxu0
        %v663 = vadd.f32 %v559, %v662
        %v664 = vpop.f32.mrf.mxu0
        %v665 = vadd.f32 %v559, %v664
        %666 = vmatmul.bf16.gmra.mxu0 %v553
        %v667 = vpop.f32.mrf.mxu0
        %v668 = vadd.f32 %v559, %v667
        %v669 = vpop.f32.mrf.mxu0
        %v670 = vadd.f32 %v559, %v669
        %671 = vmatmul.bf16.gmra.mxu0 %v554
        %v672 = vpop.f32.mrf.mxu0
        %v673 = vadd.f32 %v559, %v672
        %v674 = vpop.f32.mrf.mxu0
        %v675 = vadd.f32 %v559, %v674
        %676 = vmatmul.bf16.gmra.mxu0 %v555
        %v677 = vpop.f32.mrf.mxu0
        %v678 = vadd.f32 %v559, %v677
        %v679 = vpop.f32.mrf.mxu0
        %v680 = vadd.f32 %v559, %v679
        %681 = vmatmul.bf16.gmra.mxu0 %v556
        %v682 = vpop.f32.mrf.mxu0
        %v683 = vadd.f32 %v559, %v682
        %v684 = vpop.f32.mrf.mxu0
        %v685 = vadd.f32 %v559, %v684
        %686 = vmatmul.bf16.gmra.mxu0 %v557
        %v687 = vpop.f32.mrf.mxu0
        %v688 = vadd.f32 %v559, %v687
        %v689 = vpop.f32.mrf.mxu0
        %v690 = vadd.f32 %v559, %v689
        %691 = vmatmul.bf16.gmra.mxu0 %v558
        %v692 = vpop.f32.mrf.mxu0
        %v693 = vadd.f32 %v559, %v692
        %v694 = vpop.f32.mrf.mxu0
        %v695 = vadd.f32 %v559, %v694
        %696 = vdwg.mxu0
        %v697 = vmax.f32 %v618, 0.0
        %v698 = vmax.f32 %v620, 0.0
        %v699 = vmax.f32 %v623, 0.0
        %v700 = vmax.f32 %v625, 0.0
        %v701 = vmax.f32 %v628, 0.0
        %v702 = vmax.f32 %v630, 0.0
        %v703 = vmax.f32 %v633, 0.0
        %v704 = vmax.f32 %v635, 0.0
        %v705 = vmax.f32 %v638, 0.0
        %v706 = vmax.f32 %v640, 0.0
        %v707 = vmax.f32 %v643, 0.0
        %v708 = vmax.f32 %v645, 0.0
        %v709 = vmax.f32 %v648, 0.0
        %v710 = vmax.f32 %v650, 0.0
        %v711 = vmax.f32 %v653, 0.0
        %v712 = vmax.f32 %v655, 0.0
        %v713 = vmax.f32 %v658, 0.0
        %v714 = vmax.f32 %v660, 0.0
        %v715 = vmax.f32 %v663, 0.0
        %v716 = vmax.f32 %v665, 0.0
        %v717 = vmax.f32 %v668, 0.0
        %v718 = vmax.f32 %v670, 0.0
        %v719 = vmax.f32 %v673, 0.0
        %v720 = vmax.f32 %v675, 0.0
        %v721 = vmax.f32 %v678, 0.0
        %v722 = vmax.f32 %v680, 0.0
        %v723 = vmax.f32 %v683, 0.0
        %v724 = vmax.f32 %v685, 0.0
        %v725 = vmax.f32 %v688, 0.0
        %v726 = vmax.f32 %v690, 0.0
        %v727 = vmax.f32 %v693, 0.0
        %v728 = vmax.f32 %v695, 0.0
        %v729 = vpack.c.bf16 %v697, %v697
        %v730 = vpack.c.bf16 %v698, %v698
        %v731 = vpack.c.bf16 %v699, %v699
        %v732 = vpack.c.bf16 %v700, %v700
        %v733 = vpack.c.bf16 %v701, %v701
        %v734 = vpack.c.bf16 %v702, %v702
        %v735 = vpack.c.bf16 %v703, %v703
        %v736 = vpack.c.bf16 %v704, %v704
        %v737 = vpack.c.bf16 %v705, %v705
        %v738 = vpack.c.bf16 %v706, %v706
        %v739 = vpack.c.bf16 %v707, %v707
        %v740 = vpack.c.bf16 %v708, %v708
        %v741 = vpack.c.bf16 %v709, %v709
        %v742 = vpack.c.bf16 %v710, %v710
        %v743 = vpack.c.bf16 %v711, %v711
        %v744 = vpack.c.bf16 %v712, %v712
        %v745 = vpack.c.bf16 %v713, %v713
        %v746 = vpack.c.bf16 %v714, %v714
        %v747 = vpack.c.bf16 %v715, %v715
        %v748 = vpack.c.bf16 %v716, %v716
        %v749 = vpack.c.bf16 %v717, %v717
        %v750 = vpack.c.bf16 %v718, %v718
        %v751 = vpack.c.bf16 %v719, %v719
        %v752 = vpack.c.bf16 %v720, %v720
        %v753 = vpack.c.bf16 %v721, %v721
        %v754 = vpack.c.bf16 %v722, %v722
        %v755 = vpack.c.bf16 %v723, %v723
        %v756 = vpack.c.bf16 %v724, %v724
        %v757 = vpack.c.bf16 %v725, %v725
        %v758 = vpack.c.bf16 %v726, %v726
        %v759 = vpack.c.bf16 %v727, %v727
        %v760 = vpack.c.bf16 %v728, %v728
        %v761 = vld [vmem:[%s414] sm:$0xff]
        %v762 = vld [vmem:[%s414 + $0x8] sm:$0xff]
        %v763 = vpack.c.bf16 %v762, %v761
        %p764 = scmp.gt.s32.totalorder %s34, 0
        %765 = vmatpush.bf16.msra.mxu0 %v599
        %766 = vmatpush.bf16.msra.mxu0 %v598
        %767 = vmatpush.bf16.msra.mxu0 %v597
        %768 = vmatpush.bf16.msra.mxu0 %v596
        %769 = vmatpush.bf16.msra.mxu0 %v595
        %770 = vmatpush.bf16.msra.mxu0 %v594
        %771 = vmatpush.bf16.msra.mxu0 %v593
        %772 = vmatpush.bf16.msra.mxu0 %v592
        %773 = vmatmul.bf16.gmra.mxu0 %v763
        %v774 = vpop.f32.mrf.mxu0
        %v775 = vadd.f32 %v559, %v774
        %v776 = vpop.f32.mrf.mxu0
        %v777 = vadd.f32 %v559, %v776
        %778 = vdwg.mxu0
        %v779 = vmax.f32 %v775, 0.0
        %v780 = vmax.f32 %v777, 0.0
        %s781 = scalar_select %p764, 1, 0
        %v782 = vstv %s781
        %vm783 = vcmp.eq.s32.totalorder %v782, 1
        %v784 = vsel %vm783, %v779, 0.0
        %v785 = vsel %vm783, %v780, 0.0
        %v786 = vld [vmem:[%s424] sm:$0xff]
        %v787 = vld [vmem:[%s424 + $0x8] sm:$0xff]
        %v788 = vpack.c.bf16 %v787, %v786
        %p789 = scmp.lt.s32.totalorder %s34, 0
        %790 = vmatpush.bf16.msra.mxu0 %v599
        %791 = vmatpush.bf16.msra.mxu0 %v598
        %792 = vmatpush.bf16.msra.mxu0 %v597
        %793 = vmatpush.bf16.msra.mxu0 %v596
        %794 = vmatpush.bf16.msra.mxu0 %v595
        %795 = vmatpush.bf16.msra.mxu0 %v594
        %796 = vmatpush.bf16.msra.mxu0 %v593
        %797 = vmatpush.bf16.msra.mxu0 %v592
        %798 = vmatmul.bf16.gmra.mxu0 %v788
        %v799 = vpop.f32.mrf.mxu0
        %v800 = vadd.f32 %v559, %v799
        %v801 = vpop.f32.mrf.mxu0
        %v802 = vadd.f32 %v559, %v801
        %803 = vdwg.mxu0
        %v804 = vmax.f32 %v800, 0.0
        %v805 = vmax.f32 %v802, 0.0
        %s806 = scalar_select %p789, 1, 0
        %v807 = vstv %s806
        %vm808 = vcmp.eq.s32.totalorder %v807, 1
        %v809 = vsel %vm808, %v804, 0.0
        %v810 = vsel %vm808, %v805, 0.0
        %v811 = vpack.c.bf16 %v784, %v784
        %v812 = vpack.c.bf16 %v785, %v785
        %v813 = vpack.c.bf16 %v809, %v809
        %v814 = vpack.c.bf16 %v810, %v810
        %v851 = vunpack.c.l.b16 %v811
        %v852 = vunpack.c.l.b16 %v812
        %v853 = vunpack.c.l.b16 %v729
        %v854 = vunpack.c.l.b16 %v730
        %v855 = vunpack.c.l.b16 %v731
        %v856 = vunpack.c.l.b16 %v732
        %v857 = vunpack.c.l.b16 %v733
        %v858 = vunpack.c.l.b16 %v734
        %v859 = vunpack.c.l.b16 %v735
        %v860 = vunpack.c.l.b16 %v736
        %v861 = vunpack.c.l.b16 %v737
        %v862 = vunpack.c.l.b16 %v738
        %v863 = vunpack.c.l.b16 %v739
        %v864 = vunpack.c.l.b16 %v740
        %v865 = vunpack.c.l.b16 %v741
        %v866 = vunpack.c.l.b16 %v742
        %v867 = vunpack.c.l.b16 %v743
        %v868 = vunpack.c.l.b16 %v744
        %v869 = vunpack.c.l.b16 %v745
        %v870 = vunpack.c.l.b16 %v746
        %v871 = vunpack.c.l.b16 %v747
        %v872 = vunpack.c.l.b16 %v748
        %v873 = vunpack.c.l.b16 %v749
        %v874 = vunpack.c.l.b16 %v750
        %v875 = vunpack.c.l.b16 %v751
        %v876 = vunpack.c.l.b16 %v752
        %v877 = vunpack.c.l.b16 %v753
        %v878 = vunpack.c.l.b16 %v754
        %v879 = vunpack.c.l.b16 %v755
        %v880 = vunpack.c.l.b16 %v756
        %v881 = vunpack.c.l.b16 %v757
        %v882 = vunpack.c.l.b16 %v758
        %v883 = vunpack.c.l.b16 %v759
        %v884 = vunpack.c.l.b16 %v760
        %v885 = vunpack.c.l.b16 %v813
        %v886 = vunpack.c.l.b16 %v814
        %v887 = vpack.c.b16 %v852, %v851
        %v888 = vpack.c.b16 %v854, %v853
        %v889 = vpack.c.b16 %v856, %v855
        %v890 = vpack.c.b16 %v858, %v857
        %v891 = vpack.c.b16 %v860, %v859
        %v892 = vpack.c.b16 %v862, %v861
        %v893 = vpack.c.b16 %v864, %v863
        %v894 = vpack.c.b16 %v866, %v865
        %v895 = vpack.c.b16 %v868, %v867
        %v896 = vpack.c.b16 %v870, %v869
        %v897 = vpack.c.b16 %v872, %v871
        %v898 = vpack.c.b16 %v874, %v873
        %v899 = vpack.c.b16 %v876, %v875
        %v900 = vpack.c.b16 %v878, %v877
        %v901 = vpack.c.b16 %v880, %v879
        %v902 = vpack.c.b16 %v882, %v881
        %v903 = vpack.c.b16 %v884, %v883
        %v904 = vpack.c.b16 %v886, %v885
        %v906 = vshrl.u32 %v887, 16
        %v908 = vrot.slane %v906, 7
        %v909 = vshll.u32 %v887, 16
        %v911 = vor.u32 %v908, %v909
        %v913 = vshrl.u32 %v888, 16
        %v915 = vrot.slane %v913, 7
        %v916 = vshll.u32 %v888, 16
        %v918 = vor.u32 %v915, %v916
        %v920 = vshrl.u32 %v889, 16
        %v922 = vrot.slane %v920, 7
        %v923 = vshll.u32 %v889, 16
        %v925 = vor.u32 %v922, %v923
        %v927 = vshrl.u32 %v890, 16
        %v929 = vrot.slane %v927, 7
        %v930 = vshll.u32 %v890, 16
        %v932 = vor.u32 %v929, %v930
        %v934 = vshrl.u32 %v891, 16
        %v936 = vrot.slane %v934, 7
        %v937 = vshll.u32 %v891, 16
        %v939 = vor.u32 %v936, %v937
        %v941 = vshrl.u32 %v892, 16
        %v943 = vrot.slane %v941, 7
        %v944 = vshll.u32 %v892, 16
        %v946 = vor.u32 %v943, %v944
        %v948 = vshrl.u32 %v893, 16
        %v950 = vrot.slane %v948, 7
        %v951 = vshll.u32 %v893, 16
        %v953 = vor.u32 %v950, %v951
        %v955 = vshrl.u32 %v894, 16
        %v957 = vrot.slane %v955, 7
        %v958 = vshll.u32 %v894, 16
        %v960 = vor.u32 %v957, %v958
        %v962 = vshrl.u32 %v895, 16
        %v964 = vrot.slane %v962, 7
        %v965 = vshll.u32 %v895, 16
        %v967 = vor.u32 %v964, %v965
        %v969 = vshrl.u32 %v896, 16
        %v971 = vrot.slane %v969, 7
        %v972 = vshll.u32 %v896, 16
        %v974 = vor.u32 %v971, %v972
        %v976 = vshrl.u32 %v897, 16
        %v978 = vrot.slane %v976, 7
        %v979 = vshll.u32 %v897, 16
        %v981 = vor.u32 %v978, %v979
        %v983 = vshrl.u32 %v898, 16
        %v985 = vrot.slane %v983, 7
        %v986 = vshll.u32 %v898, 16
        %v988 = vor.u32 %v985, %v986
        %v990 = vshrl.u32 %v899, 16
        %v992 = vrot.slane %v990, 7
        %v993 = vshll.u32 %v899, 16
        %v995 = vor.u32 %v992, %v993
        %v997 = vshrl.u32 %v900, 16
        %v999 = vrot.slane %v997, 7
        %v1000 = vshll.u32 %v900, 16
        %v1002 = vor.u32 %v999, %v1000
        %v1004 = vshrl.u32 %v901, 16
        %v1006 = vrot.slane %v1004, 7
        %v1007 = vshll.u32 %v901, 16
        %v1009 = vor.u32 %v1006, %v1007
        %v1011 = vshrl.u32 %v902, 16
        %v1013 = vrot.slane %v1011, 7
        %v1014 = vshll.u32 %v902, 16
        %v1016 = vor.u32 %v1013, %v1014
        %v1018 = vshrl.u32 %v903, 16
        %v1020 = vrot.slane %v1018, 7
        %v1021 = vshll.u32 %v903, 16
        %v1023 = vor.u32 %v1020, %v1021
        %v1025 = vshrl.u32 %v904, 16
        %v1027 = vrot.slane %v1025, 7
        %v1028 = vshll.u32 %v904, 16
        %v1030 = vor.u32 %v1027, %v1028
        %vm1049 = vcmask 1040384
        %vm1050 = vsmask.f32 256
        %vm1051 = vmand %vm1049, %vm1050
        %v1052 = vsel %vm1051, 0, %v911
        %v1053 = vsel %vm1051, 0, %v918
        %v1054 = vsel %vm1051, 0, %v925
        %v1055 = vsel %vm1051, 0, %v932
        %v1056 = vsel %vm1051, 0, %v939
        %v1057 = vsel %vm1051, 0, %v946
        %v1058 = vsel %vm1051, 0, %v953
        %v1059 = vsel %vm1051, 0, %v960
        %v1060 = vsel %vm1051, 0, %v967
        %v1061 = vsel %vm1051, 0, %v974
        %v1062 = vsel %vm1051, 0, %v981
        %v1063 = vsel %vm1051, 0, %v988
        %v1064 = vsel %vm1051, 0, %v995
        %v1065 = vsel %vm1051, 0, %v1002
        %v1066 = vsel %vm1051, 0, %v1009
        %v1067 = vsel %vm1051, 0, %v1016
        %v1068 = vsel %vm1051, 0, %v1023
        %v1069 = vsel %vm1051, 0, %v1030
        %v1070 = vrot.slane %v909, 1
        %v1071 = vor.u32 %v906, %v1070
        %v1072 = vrot.slane %v916, 1
        %v1073 = vor.u32 %v913, %v1072
        %v1074 = vrot.slane %v923, 1
        %v1075 = vor.u32 %v920, %v1074
        %v1076 = vrot.slane %v930, 1
        %v1077 = vor.u32 %v927, %v1076
        %v1078 = vrot.slane %v937, 1
        %v1079 = vor.u32 %v934, %v1078
        %v1080 = vrot.slane %v944, 1
        %v1081 = vor.u32 %v941, %v1080
        %v1082 = vrot.slane %v951, 1
        %v1083 = vor.u32 %v948, %v1082
        %v1084 = vrot.slane %v958, 1
        %v1085 = vor.u32 %v955, %v1084
        %v1086 = vrot.slane %v965, 1
        %v1087 = vor.u32 %v962, %v1086
        %v1088 = vrot.slane %v972, 1
        %v1089 = vor.u32 %v969, %v1088
        %v1090 = vrot.slane %v979, 1
        %v1091 = vor.u32 %v976, %v1090
        %v1092 = vrot.slane %v986, 1
        %v1093 = vor.u32 %v983, %v1092
        %v1094 = vrot.slane %v993, 1
        %v1095 = vor.u32 %v990, %v1094
        %v1096 = vrot.slane %v1000, 1
        %v1097 = vor.u32 %v997, %v1096
        %v1098 = vrot.slane %v1007, 1
        %v1099 = vor.u32 %v1004, %v1098
        %v1100 = vrot.slane %v1014, 1
        %v1101 = vor.u32 %v1011, %v1100
        %v1102 = vrot.slane %v1021, 1
        %v1103 = vor.u32 %v1018, %v1102
        %v1104 = vrot.slane %v1028, 1
        %v1105 = vor.u32 %v1025, %v1104
        %vm1124 = vcmask 1047552
        %vm1125 = vsmask.f32 7424
        %vm1126 = vmand %vm1124, %vm1125
        %v1127 = vsel %vm1126, %v1071, 0
        %v1128 = vsel %vm1126, %v1073, 0
        %v1129 = vsel %vm1126, %v1075, 0
        %v1130 = vsel %vm1126, %v1077, 0
        %v1131 = vsel %vm1126, %v1079, 0
        %v1132 = vsel %vm1126, %v1081, 0
        %v1133 = vsel %vm1126, %v1083, 0
        %v1134 = vsel %vm1126, %v1085, 0
        %v1135 = vsel %vm1126, %v1087, 0
        %v1136 = vsel %vm1126, %v1089, 0
        %v1137 = vsel %vm1126, %v1091, 0
        %v1138 = vsel %vm1126, %v1093, 0
        %v1139 = vsel %vm1126, %v1095, 0
        %v1140 = vsel %vm1126, %v1097, 0
        %v1141 = vsel %vm1126, %v1099, 0
        %v1142 = vsel %vm1126, %v1101, 0
        %v1143 = vsel %vm1126, %v1103, 0
        %v1144 = vsel %vm1126, %v1105, 0
        %v1145 = vld [vmem:[#allocation10] sm:$0xf]
        %v1146 = vld [vmem:[#allocation10 + $0x4] sm:$0xf]
        %v1147 = vld [vmem:[#allocation10 + $0x8] sm:$0xf]
        %v1148 = vld [vmem:[#allocation10 + $0xc] sm:$0xf]
        %v1149 = vld [vmem:[#allocation10 + $0x10] sm:$0xf]
        %v1150 = vld [vmem:[#allocation10 + $0x14] sm:$0xf]
        %v1151 = vld [vmem:[#allocation10 + $0x18] sm:$0xf]
        %v1152 = vld [vmem:[#allocation10 + $0x1c] sm:$0xf]
        %v1153 = vld [vmem:[#allocation10 + $0x20] sm:$0xf]
        %v1154 = vld [vmem:[#allocation10 + $0x24] sm:$0xf]
        %v1155 = vld [vmem:[#allocation10 + $0x28] sm:$0xf]
        %v1156 = vld [vmem:[#allocation10 + $0x2c] sm:$0xf]
        %v1157 = vld [vmem:[#allocation10 + $0x30] sm:$0xf]
        %v1158 = vld [vmem:[#allocation10 + $0x34] sm:$0xf]
        %v1159 = vld [vmem:[#allocation10 + $0x38] sm:$0xf]
        %v1160 = vld [vmem:[#allocation10 + $0x3c] sm:$0xf]
        %v1161 = vld [vmem:[#allocation10 + $0x40] sm:$0xf]
        %v1162 = vld [vmem:[#allocation10 + $0x44] sm:$0xf]
        %v1163 = vld [vmem:[#allocation10 + $0x48] sm:$0xf]
        %v1164 = vld [vmem:[#allocation10 + $0x4c] sm:$0xf]
        %v1165 = vld [vmem:[#allocation10 + $0x50] sm:$0xf]
        %v1166 = vld [vmem:[#allocation10 + $0x54] sm:$0xf]
        %v1167 = vld [vmem:[#allocation10 + $0x58] sm:$0xf]
        %v1168 = vld [vmem:[#allocation10 + $0x5c] sm:$0xf]
        %v1169 = vld [vmem:[#allocation10 + $0x60] sm:$0xf]
        %v1170 = vld [vmem:[#allocation10 + $0x64] sm:$0xf]
        %v1171 = vld [vmem:[#allocation10 + $0x68] sm:$0xf]
        %v1172 = vld [vmem:[#allocation10 + $0x6c] sm:$0xf]
        %v1173 = vld [vmem:[#allocation10 + $0x70] sm:$0xf]
        %v1174 = vld [vmem:[#allocation10 + $0x74] sm:$0xf]
        %v1175 = vld [vmem:[#allocation10 + $0x78] sm:$0xf]
        %v1176 = vld [vmem:[#allocation10 + $0x7c] sm:$0xf]
        %v1209 = vunpack.c.l.b16 %v1161
        %v1210 = vunpack.c.l.b16 %v1162
        %v1211 = vunpack.c.l.b16 %v1163
        %v1212 = vunpack.c.l.b16 %v1164
        %v1213 = vunpack.c.l.b16 %v1165
        %v1214 = vunpack.c.l.b16 %v1166
        %v1215 = vunpack.c.l.b16 %v1167
        %v1216 = vunpack.c.l.b16 %v1168
        %v1217 = vunpack.c.l.b16 %v1169
        %v1218 = vunpack.c.l.b16 %v1170
        %v1219 = vunpack.c.l.b16 %v1171
        %v1220 = vunpack.c.l.b16 %v1172
        %v1221 = vunpack.c.l.b16 %v1173
        %v1222 = vunpack.c.l.b16 %v1174
        %v1223 = vunpack.c.l.b16 %v1175
        %v1224 = vunpack.c.l.b16 %v1176
        %v1225 = vpack.c.b16 %v1210, %v1209
        %v1226 = vpack.c.b16 %v1212, %v1211
        %v1227 = vpack.c.b16 %v1214, %v1213
        %v1228 = vpack.c.b16 %v1216, %v1215
        %v1229 = vpack.c.b16 %v1218, %v1217
        %v1230 = vpack.c.b16 %v1220, %v1219
        %v1231 = vpack.c.b16 %v1222, %v1221
        %v1232 = vpack.c.b16 %v1224, %v1223
        %1241 = vmatpush.bf16.msra.mxu0 %v1232
        %1242 = vmatpush.bf16.msra.mxu0 %v1231
        %1243 = vmatpush.bf16.msra.mxu0 %v1230
        %1244 = vmatpush.bf16.msra.mxu0 %v1229
        %1245 = vmatpush.bf16.msra.mxu0 %v1228
        %1246 = vmatpush.bf16.msra.mxu0 %v1227
        %1247 = vmatpush.bf16.msra.mxu0 %v1226
        %1248 = vmatpush.bf16.msra.mxu0 %v1225
        %1249 = vmatmul.bf16.gmra.mxu0 %v887
        %v1250 = vpop.f32.mrf.mxu0
        %v1251 = vadd.f32 0.0, %v1250
        %v1252 = vpop.f32.mrf.mxu0
        %v1253 = vadd.f32 0.0, %v1252
        %1254 = vmatmul.bf16.gmra.mxu0 %v888
        %v1255 = vpop.f32.mrf.mxu0
        %v1256 = vadd.f32 0.0, %v1255
        %v1257 = vpop.f32.mrf.mxu0
        %v1258 = vadd.f32 0.0, %v1257
        %1259 = vmatmul.bf16.gmra.mxu0 %v889
        %v1260 = vpop.f32.mrf.mxu0
        %v1261 = vadd.f32 0.0, %v1260
        %v1262 = vpop.f32.mrf.mxu0
        %v1263 = vadd.f32 0.0, %v1262
        %1264 = vmatmul.bf16.gmra.mxu0 %v890
        %v1265 = vpop.f32.mrf.mxu0
        %v1266 = vadd.f32 0.0, %v1265
        %v1267 = vpop.f32.mrf.mxu0
        %v1268 = vadd.f32 0.0, %v1267
        %1269 = vmatmul.bf16.gmra.mxu0 %v891
        %v1270 = vpop.f32.mrf.mxu0
        %v1271 = vadd.f32 0.0, %v1270
        %v1272 = vpop.f32.mrf.mxu0
        %v1273 = vadd.f32 0.0, %v1272
        %1274 = vmatmul.bf16.gmra.mxu0 %v892
        %v1275 = vpop.f32.mrf.mxu0
        %v1276 = vadd.f32 0.0, %v1275
        %v1277 = vpop.f32.mrf.mxu0
        %v1278 = vadd.f32 0.0, %v1277
        %1279 = vmatmul.bf16.gmra.mxu0 %v893
        %v1280 = vpop.f32.mrf.mxu0
        %v1281 = vadd.f32 0.0, %v1280
        %v1282 = vpop.f32.mrf.mxu0
        %v1283 = vadd.f32 0.0, %v1282
        %1284 = vmatmul.bf16.gmra.mxu0 %v894
        %v1285 = vpop.f32.mrf.mxu0
        %v1286 = vadd.f32 0.0, %v1285
        %v1287 = vpop.f32.mrf.mxu0
        %v1288 = vadd.f32 0.0, %v1287
        %1289 = vmatmul.bf16.gmra.mxu0 %v895
        %v1290 = vpop.f32.mrf.mxu0
        %v1291 = vadd.f32 0.0, %v1290
        %v1292 = vpop.f32.mrf.mxu0
        %v1293 = vadd.f32 0.0, %v1292
        %1294 = vmatmul.bf16.gmra.mxu0 %v896
        %v1295 = vpop.f32.mrf.mxu0
        %v1296 = vadd.f32 0.0, %v1295
        %v1297 = vpop.f32.mrf.mxu0
        %v1298 = vadd.f32 0.0, %v1297
        %1299 = vmatmul.bf16.gmra.mxu0 %v897
        %v1300 = vpop.f32.mrf.mxu0
        %v1301 = vadd.f32 0.0, %v1300
        %v1302 = vpop.f32.mrf.mxu0
        %v1303 = vadd.f32 0.0, %v1302
        %1304 = vmatmul.bf16.gmra.mxu0 %v898
        %v1305 = vpop.f32.mrf.mxu0
        %v1306 = vadd.f32 0.0, %v1305
        %v1307 = vpop.f32.mrf.mxu0
        %v1308 = vadd.f32 0.0, %v1307
        %1309 = vmatmul.bf16.gmra.mxu0 %v899
        %v1310 = vpop.f32.mrf.mxu0
        %v1311 = vadd.f32 0.0, %v1310
        %v1312 = vpop.f32.mrf.mxu0
        %v1313 = vadd.f32 0.0, %v1312
        %1314 = vmatmul.bf16.gmra.mxu0 %v900
        %v1315 = vpop.f32.mrf.mxu0
        %v1316 = vadd.f32 0.0, %v1315
        %v1317 = vpop.f32.mrf.mxu0
        %v1318 = vadd.f32 0.0, %v1317
        %1319 = vmatmul.bf16.gmra.mxu0 %v901
        %v1320 = vpop.f32.mrf.mxu0
        %v1321 = vadd.f32 0.0, %v1320
        %v1322 = vpop.f32.mrf.mxu0
        %v1323 = vadd.f32 0.0, %v1322
        %1324 = vmatmul.bf16.gmra.mxu0 %v902
        %v1325 = vpop.f32.mrf.mxu0
        %v1326 = vadd.f32 0.0, %v1325
        %v1327 = vpop.f32.mrf.mxu0
        %v1328 = vadd.f32 0.0, %v1327
        %1329 = vdwg.mxu0
        %v1346 = vunpack.c.l.b16 %v1145
        %v1347 = vunpack.c.l.b16 %v1146
        %v1348 = vunpack.c.l.b16 %v1147
        %v1349 = vunpack.c.l.b16 %v1148
        %v1350 = vunpack.c.l.b16 %v1149
        %v1351 = vunpack.c.l.b16 %v1150
        %v1352 = vunpack.c.l.b16 %v1151
        %v1353 = vunpack.c.l.b16 %v1152
        %v1354 = vunpack.c.l.b16 %v1153
        %v1355 = vunpack.c.l.b16 %v1154
        %v1356 = vunpack.c.l.b16 %v1155
        %v1357 = vunpack.c.l.b16 %v1156
        %v1358 = vunpack.c.l.b16 %v1157
        %v1359 = vunpack.c.l.b16 %v1158
        %v1360 = vunpack.c.l.b16 %v1159
        %v1361 = vunpack.c.l.b16 %v1160
        %v1362 = vpack.c.b16 %v1347, %v1346
        %v1363 = vpack.c.b16 %v1349, %v1348
        %v1364 = vpack.c.b16 %v1351, %v1350
        %v1365 = vpack.c.b16 %v1353, %v1352
        %v1366 = vpack.c.b16 %v1355, %v1354
        %v1367 = vpack.c.b16 %v1357, %v1356
        %v1368 = vpack.c.b16 %v1359, %v1358
        %v1369 = vpack.c.b16 %v1361, %v1360
        %1378 = vmatpush.bf16.msra.mxu0 %v1369
        %1379 = vmatpush.bf16.msra.mxu0 %v1368
        %1380 = vmatpush.bf16.msra.mxu0 %v1367
        %1381 = vmatpush.bf16.msra.mxu0 %v1366
        %1382 = vmatpush.bf16.msra.mxu0 %v1365
        %1383 = vmatpush.bf16.msra.mxu0 %v1364
        %1384 = vmatpush.bf16.msra.mxu0 %v1363
        %1385 = vmatpush.bf16.msra.mxu0 %v1362
        %1386 = vmatmul.bf16.gmra.mxu0 %v1052
        %v1387 = vpop.f32.mrf.mxu0
        %v1388 = vadd.f32 %v1251, %v1387
        %v1389 = vpop.f32.mrf.mxu0
        %v1390 = vadd.f32 %v1253, %v1389
        %1391 = vmatmul.bf16.gmra.mxu0 %v1053
        %v1392 = vpop.f32.mrf.mxu0
        %v1393 = vadd.f32 %v1256, %v1392
        %v1394 = vpop.f32.mrf.mxu0
        %v1395 = vadd.f32 %v1258, %v1394
        %1396 = vmatmul.bf16.gmra.mxu0 %v1054
        %v1397 = vpop.f32.mrf.mxu0
        %v1398 = vadd.f32 %v1261, %v1397
        %v1399 = vpop.f32.mrf.mxu0
        %v1400 = vadd.f32 %v1263, %v1399
        %1401 = vmatmul.bf16.gmra.mxu0 %v1055
        %v1402 = vpop.f32.mrf.mxu0
        %v1403 = vadd.f32 %v1266, %v1402
        %v1404 = vpop.f32.mrf.mxu0
        %v1405 = vadd.f32 %v1268, %v1404
        %1406 = vmatmul.bf16.gmra.mxu0 %v1056
        %v1407 = vpop.f32.mrf.mxu0
        %v1408 = vadd.f32 %v1271, %v1407
        %v1409 = vpop.f32.mrf.mxu0
        %v1410 = vadd.f32 %v1273, %v1409
        %1411 = vmatmul.bf16.gmra.mxu0 %v1057
        %v1412 = vpop.f32.mrf.mxu0
        %v1413 = vadd.f32 %v1276, %v1412
        %v1414 = vpop.f32.mrf.mxu0
        %v1415 = vadd.f32 %v1278, %v1414
        %1416 = vmatmul.bf16.gmra.mxu0 %v1058
        %v1417 = vpop.f32.mrf.mxu0
        %v1418 = vadd.f32 %v1281, %v1417
        %v1419 = vpop.f32.mrf.mxu0
        %v1420 = vadd.f32 %v1283, %v1419
        %1421 = vmatmul.bf16.gmra.mxu0 %v1059
        %v1422 = vpop.f32.mrf.mxu0
        %v1423 = vadd.f32 %v1286, %v1422
        %v1424 = vpop.f32.mrf.mxu0
        %v1425 = vadd.f32 %v1288, %v1424
        %1426 = vmatmul.bf16.gmra.mxu0 %v1060
        %v1427 = vpop.f32.mrf.mxu0
        %v1428 = vadd.f32 %v1291, %v1427
        %v1429 = vpop.f32.mrf.mxu0
        %v1430 = vadd.f32 %v1293, %v1429
        %1431 = vmatmul.bf16.gmra.mxu0 %v1061
        %v1432 = vpop.f32.mrf.mxu0
        %v1433 = vadd.f32 %v1296, %v1432
        %v1434 = vpop.f32.mrf.mxu0
        %v1435 = vadd.f32 %v1298, %v1434
        %1436 = vmatmul.bf16.gmra.mxu0 %v1062
        %v1437 = vpop.f32.mrf.mxu0
        %v1438 = vadd.f32 %v1301, %v1437
        %v1439 = vpop.f32.mrf.mxu0
        %v1440 = vadd.f32 %v1303, %v1439
        %1441 = vmatmul.bf16.gmra.mxu0 %v1063
        %v1442 = vpop.f32.mrf.mxu0
        %v1443 = vadd.f32 %v1306, %v1442
        %v1444 = vpop.f32.mrf.mxu0
        %v1445 = vadd.f32 %v1308, %v1444
        %1446 = vmatmul.bf16.gmra.mxu0 %v1064
        %v1447 = vpop.f32.mrf.mxu0
        %v1448 = vadd.f32 %v1311, %v1447
        %v1449 = vpop.f32.mrf.mxu0
        %v1450 = vadd.f32 %v1313, %v1449
        %1451 = vmatmul.bf16.gmra.mxu0 %v1065
        %v1452 = vpop.f32.mrf.mxu0
        %v1453 = vadd.f32 %v1316, %v1452
        %v1454 = vpop.f32.mrf.mxu0
        %v1455 = vadd.f32 %v1318, %v1454
        %1456 = vmatmul.bf16.gmra.mxu0 %v1066
        %v1457 = vpop.f32.mrf.mxu0
        %v1458 = vadd.f32 %v1321, %v1457
        %v1459 = vpop.f32.mrf.mxu0
        %v1460 = vadd.f32 %v1323, %v1459
        %1461 = vmatmul.bf16.gmra.mxu0 %v1067
        %v1462 = vpop.f32.mrf.mxu0
        %v1463 = vadd.f32 %v1326, %v1462
        %v1464 = vpop.f32.mrf.mxu0
        %v1465 = vadd.f32 %v1328, %v1464
        %1466 = vdwg.mxu0
        %v1467 = vld [vmem:[#allocation10 + $0x80] sm:$0xf]
        %v1468 = vld [vmem:[#allocation10 + $0x84] sm:$0xf]
        %v1469 = vld [vmem:[#allocation10 + $0x88] sm:$0xf]
        %v1470 = vld [vmem:[#allocation10 + $0x8c] sm:$0xf]
        %v1471 = vld [vmem:[#allocation10 + $0x90] sm:$0xf]
        %v1472 = vld [vmem:[#allocation10 + $0x94] sm:$0xf]
        %v1473 = vld [vmem:[#allocation10 + $0x98] sm:$0xf]
        %v1474 = vld [vmem:[#allocation10 + $0x9c] sm:$0xf]
        %v1475 = vld [vmem:[#allocation10 + $0xa0] sm:$0xf]
        %v1476 = vld [vmem:[#allocation10 + $0xa4] sm:$0xf]
        %v1477 = vld [vmem:[#allocation10 + $0xa8] sm:$0xf]
        %v1478 = vld [vmem:[#allocation10 + $0xac] sm:$0xf]
        %v1479 = vld [vmem:[#allocation10 + $0xb0] sm:$0xf]
        %v1480 = vld [vmem:[#allocation10 + $0xb4] sm:$0xf]
        %v1481 = vld [vmem:[#allocation10 + $0xb8] sm:$0xf]
        %v1482 = vld [vmem:[#allocation10 + $0xbc] sm:$0xf]
        %v1499 = vunpack.c.l.b16 %v1467
        %v1500 = vunpack.c.l.b16 %v1468
        %v1501 = vunpack.c.l.b16 %v1469
        %v1502 = vunpack.c.l.b16 %v1470
        %v1503 = vunpack.c.l.b16 %v1471
        %v1504 = vunpack.c.l.b16 %v1472
        %v1505 = vunpack.c.l.b16 %v1473
        %v1506 = vunpack.c.l.b16 %v1474
        %v1507 = vunpack.c.l.b16 %v1475
        %v1508 = vunpack.c.l.b16 %v1476
        %v1509 = vunpack.c.l.b16 %v1477
        %v1510 = vunpack.c.l.b16 %v1478
        %v1511 = vunpack.c.l.b16 %v1479
        %v1512 = vunpack.c.l.b16 %v1480
        %v1513 = vunpack.c.l.b16 %v1481
        %v1514 = vunpack.c.l.b16 %v1482
        %v1515 = vpack.c.b16 %v1500, %v1499
        %v1516 = vpack.c.b16 %v1502, %v1501
        %v1517 = vpack.c.b16 %v1504, %v1503
        %v1518 = vpack.c.b16 %v1506, %v1505
        %v1519 = vpack.c.b16 %v1508, %v1507
        %v1520 = vpack.c.b16 %v1510, %v1509
        %v1521 = vpack.c.b16 %v1512, %v1511
        %v1522 = vpack.c.b16 %v1514, %v1513
        %1531 = vmatpush.bf16.msra.mxu0 %v1522
        %1532 = vmatpush.bf16.msra.mxu0 %v1521
        %1533 = vmatpush.bf16.msra.mxu0 %v1520
        %1534 = vmatpush.bf16.msra.mxu0 %v1519
        %1535 = vmatpush.bf16.msra.mxu0 %v1518
        %1536 = vmatpush.bf16.msra.mxu0 %v1517
        %1537 = vmatpush.bf16.msra.mxu0 %v1516
        %1538 = vmatpush.bf16.msra.mxu0 %v1515
        %1539 = vmatmul.bf16.gmra.mxu0 %v1127
        %v1540 = vpop.f32.mrf.mxu0
        %v1541 = vadd.f32 0.0, %v1540
        %v1542 = vpop.f32.mrf.mxu0
        %v1543 = vadd.f32 0.0, %v1542
        %1544 = vmatmul.bf16.gmra.mxu0 %v1128
        %v1545 = vpop.f32.mrf.mxu0
        %v1546 = vadd.f32 0.0, %v1545
        %v1547 = vpop.f32.mrf.mxu0
        %v1548 = vadd.f32 0.0, %v1547
        %1549 = vmatmul.bf16.gmra.mxu0 %v1129
        %v1550 = vpop.f32.mrf.mxu0
        %v1551 = vadd.f32 0.0, %v1550
        %v1552 = vpop.f32.mrf.mxu0
        %v1553 = vadd.f32 0.0, %v1552
        %1554 = vmatmul.bf16.gmra.mxu0 %v1130
        %v1555 = vpop.f32.mrf.mxu0
        %v1556 = vadd.f32 0.0, %v1555
        %v1557 = vpop.f32.mrf.mxu0
        %v1558 = vadd.f32 0.0, %v1557
        %1559 = vmatmul.bf16.gmra.mxu0 %v1131
        %v1560 = vpop.f32.mrf.mxu0
        %v1561 = vadd.f32 0.0, %v1560
        %v1562 = vpop.f32.mrf.mxu0
        %v1563 = vadd.f32 0.0, %v1562
        %1564 = vmatmul.bf16.gmra.mxu0 %v1132
        %v1565 = vpop.f32.mrf.mxu0
        %v1566 = vadd.f32 0.0, %v1565
        %v1567 = vpop.f32.mrf.mxu0
        %v1568 = vadd.f32 0.0, %v1567
        %1569 = vmatmul.bf16.gmra.mxu0 %v1133
        %v1570 = vpop.f32.mrf.mxu0
        %v1571 = vadd.f32 0.0, %v1570
        %v1572 = vpop.f32.mrf.mxu0
        %v1573 = vadd.f32 0.0, %v1572
        %1574 = vmatmul.bf16.gmra.mxu0 %v1134
        %v1575 = vpop.f32.mrf.mxu0
        %v1576 = vadd.f32 0.0, %v1575
        %v1577 = vpop.f32.mrf.mxu0
        %v1578 = vadd.f32 0.0, %v1577
        %1579 = vmatmul.bf16.gmra.mxu0 %v1135
        %v1580 = vpop.f32.mrf.mxu0
        %v1581 = vadd.f32 0.0, %v1580
        %v1582 = vpop.f32.mrf.mxu0
        %v1583 = vadd.f32 0.0, %v1582
        %1584 = vmatmul.bf16.gmra.mxu0 %v1136
        %v1585 = vpop.f32.mrf.mxu0
        %v1586 = vadd.f32 0.0, %v1585
        %v1587 = vpop.f32.mrf.mxu0
        %v1588 = vadd.f32 0.0, %v1587
        %1589 = vmatmul.bf16.gmra.mxu0 %v1137
        %v1590 = vpop.f32.mrf.mxu0
        %v1591 = vadd.f32 0.0, %v1590
        %v1592 = vpop.f32.mrf.mxu0
        %v1593 = vadd.f32 0.0, %v1592
        %1594 = vmatmul.bf16.gmra.mxu0 %v1138
        %v1595 = vpop.f32.mrf.mxu0
        %v1596 = vadd.f32 0.0, %v1595
        %v1597 = vpop.f32.mrf.mxu0
        %v1598 = vadd.f32 0.0, %v1597
        %1599 = vmatmul.bf16.gmra.mxu0 %v1139
        %v1600 = vpop.f32.mrf.mxu0
        %v1601 = vadd.f32 0.0, %v1600
        %v1602 = vpop.f32.mrf.mxu0
        %v1603 = vadd.f32 0.0, %v1602
        %1604 = vmatmul.bf16.gmra.mxu0 %v1140
        %v1605 = vpop.f32.mrf.mxu0
        %v1606 = vadd.f32 0.0, %v1605
        %v1607 = vpop.f32.mrf.mxu0
        %v1608 = vadd.f32 0.0, %v1607
        %1609 = vmatmul.bf16.gmra.mxu0 %v1141
        %v1610 = vpop.f32.mrf.mxu0
        %v1611 = vadd.f32 0.0, %v1610
        %v1612 = vpop.f32.mrf.mxu0
        %v1613 = vadd.f32 0.0, %v1612
        %1614 = vmatmul.bf16.gmra.mxu0 %v1142
        %v1615 = vpop.f32.mrf.mxu0
        %v1616 = vadd.f32 0.0, %v1615
        %v1617 = vpop.f32.mrf.mxu0
        %v1618 = vadd.f32 0.0, %v1617
        %1619 = vdwg.mxu0
        %v1620 = vadd.f32 %v1388, %v1541
        %v1621 = vadd.f32 %v1390, %v1543
        %v1622 = vadd.f32 %v1393, %v1546
        %v1623 = vadd.f32 %v1395, %v1548
        %v1624 = vadd.f32 %v1398, %v1551
        %v1625 = vadd.f32 %v1400, %v1553
        %v1626 = vadd.f32 %v1403, %v1556
        %v1627 = vadd.f32 %v1405, %v1558
        %v1628 = vadd.f32 %v1408, %v1561
        %v1629 = vadd.f32 %v1410, %v1563
        %v1630 = vadd.f32 %v1413, %v1566
        %v1631 = vadd.f32 %v1415, %v1568
        %v1632 = vadd.f32 %v1418, %v1571
        %v1633 = vadd.f32 %v1420, %v1573
        %v1634 = vadd.f32 %v1423, %v1576
        %v1635 = vadd.f32 %v1425, %v1578
        %v1636 = vadd.f32 %v1428, %v1581
        %v1637 = vadd.f32 %v1430, %v1583
        %v1638 = vadd.f32 %v1433, %v1586
        %v1639 = vadd.f32 %v1435, %v1588
        %v1640 = vadd.f32 %v1438, %v1591
        %v1641 = vadd.f32 %v1440, %v1593
        %v1642 = vadd.f32 %v1443, %v1596
        %v1643 = vadd.f32 %v1445, %v1598
        %v1644 = vadd.f32 %v1448, %v1601
        %v1645 = vadd.f32 %v1450, %v1603
        %v1646 = vadd.f32 %v1453, %v1606
        %v1647 = vadd.f32 %v1455, %v1608
        %v1648 = vadd.f32 %v1458, %v1611
        %v1649 = vadd.f32 %v1460, %v1613
        %v1650 = vadd.f32 %v1463, %v1616
        %v1651 = vadd.f32 %v1465, %v1618
        %v1652 = vld [vmem:[#allocation10 + $0xc0] sm:$0xf]
        %v1653 = vld [vmem:[#allocation10 + $0xc4] sm:$0xf]
        %v1654 = vld [vmem:[#allocation10 + $0xc8] sm:$0xf]
        %v1655 = vld [vmem:[#allocation10 + $0xcc] sm:$0xf]
        %v1656 = vld [vmem:[#allocation10 + $0xd0] sm:$0xf]
        %v1657 = vld [vmem:[#allocation10 + $0xd4] sm:$0xf]
        %v1658 = vld [vmem:[#allocation10 + $0xd8] sm:$0xf]
        %v1659 = vld [vmem:[#allocation10 + $0xdc] sm:$0xf]
        %v1660 = vld [vmem:[#allocation10 + $0xe0] sm:$0xf]
        %v1661 = vld [vmem:[#allocation10 + $0xe4] sm:$0xf]
        %v1662 = vld [vmem:[#allocation10 + $0xe8] sm:$0xf]
        %v1663 = vld [vmem:[#allocation10 + $0xec] sm:$0xf]
        %v1664 = vld [vmem:[#allocation10 + $0xf0] sm:$0xf]
        %v1665 = vld [vmem:[#allocation10 + $0xf4] sm:$0xf]
        %v1666 = vld [vmem:[#allocation10 + $0xf8] sm:$0xf]
        %v1667 = vld [vmem:[#allocation10 + $0xfc] sm:$0xf]
        %v1684 = vunpack.c.l.b16 %v1652
        %v1685 = vunpack.c.l.b16 %v1653
        %v1686 = vunpack.c.l.b16 %v1654
        %v1687 = vunpack.c.l.b16 %v1655
        %v1688 = vunpack.c.l.b16 %v1656
        %v1689 = vunpack.c.l.b16 %v1657
        %v1690 = vunpack.c.l.b16 %v1658
        %v1691 = vunpack.c.l.b16 %v1659
        %v1692 = vunpack.c.l.b16 %v1660
        %v1693 = vunpack.c.l.b16 %v1661
        %v1694 = vunpack.c.l.b16 %v1662
        %v1695 = vunpack.c.l.b16 %v1663
        %v1696 = vunpack.c.l.b16 %v1664
        %v1697 = vunpack.c.l.b16 %v1665
        %v1698 = vunpack.c.l.b16 %v1666
        %v1699 = vunpack.c.l.b16 %v1667
        %v1700 = vpack.c.b16 %v1685, %v1684
        %v1701 = vpack.c.b16 %v1687, %v1686
        %v1702 = vpack.c.b16 %v1689, %v1688
        %v1703 = vpack.c.b16 %v1691, %v1690
        %v1704 = vpack.c.b16 %v1693, %v1692
        %v1705 = vpack.c.b16 %v1695, %v1694
        %v1706 = vpack.c.b16 %v1697, %v1696
        %v1707 = vpack.c.b16 %v1699, %v1698
        %1716 = vmatpush.bf16.msra.mxu0 %v1707
        %1717 = vmatpush.bf16.msra.mxu0 %v1706
        %1718 = vmatpush.bf16.msra.mxu0 %v1705
        %1719 = vmatpush.bf16.msra.mxu0 %v1704
        %1720 = vmatpush.bf16.msra.mxu0 %v1703
        %1721 = vmatpush.bf16.msra.mxu0 %v1702
        %1722 = vmatpush.bf16.msra.mxu0 %v1701
        %1723 = vmatpush.bf16.msra.mxu0 %v1700
        %1724 = vmatmul.bf16.gmra.mxu0 %v1053
        %v1725 = vpop.f32.mrf.mxu0
        %v1726 = vadd.f32 0.0, %v1725
        %v1727 = vpop.f32.mrf.mxu0
        %v1728 = vadd.f32 0.0, %v1727
        %1729 = vmatmul.bf16.gmra.mxu0 %v1054
        %v1730 = vpop.f32.mrf.mxu0
        %v1731 = vadd.f32 0.0, %v1730
        %v1732 = vpop.f32.mrf.mxu0
        %v1733 = vadd.f32 0.0, %v1732
        %1734 = vmatmul.bf16.gmra.mxu0 %v1055
        %v1735 = vpop.f32.mrf.mxu0
        %v1736 = vadd.f32 0.0, %v1735
        %v1737 = vpop.f32.mrf.mxu0
        %v1738 = vadd.f32 0.0, %v1737
        %1739 = vmatmul.bf16.gmra.mxu0 %v1056
        %v1740 = vpop.f32.mrf.mxu0
        %v1741 = vadd.f32 0.0, %v1740
        %v1742 = vpop.f32.mrf.mxu0
        %v1743 = vadd.f32 0.0, %v1742
        %1744 = vmatmul.bf16.gmra.mxu0 %v1057
        %v1745 = vpop.f32.mrf.mxu0
        %v1746 = vadd.f32 0.0, %v1745
        %v1747 = vpop.f32.mrf.mxu0
        %v1748 = vadd.f32 0.0, %v1747
        %1749 = vmatmul.bf16.gmra.mxu0 %v1058
        %v1750 = vpop.f32.mrf.mxu0
        %v1751 = vadd.f32 0.0, %v1750
        %v1752 = vpop.f32.mrf.mxu0
        %v1753 = vadd.f32 0.0, %v1752
        %1754 = vmatmul.bf16.gmra.mxu0 %v1059
        %v1755 = vpop.f32.mrf.mxu0
        %v1756 = vadd.f32 0.0, %v1755
        %v1757 = vpop.f32.mrf.mxu0
        %v1758 = vadd.f32 0.0, %v1757
        %1759 = vmatmul.bf16.gmra.mxu0 %v1060
        %v1760 = vpop.f32.mrf.mxu0
        %v1761 = vadd.f32 0.0, %v1760
        %v1762 = vpop.f32.mrf.mxu0
        %v1763 = vadd.f32 0.0, %v1762
        %1764 = vmatmul.bf16.gmra.mxu0 %v1061
        %v1765 = vpop.f32.mrf.mxu0
        %v1766 = vadd.f32 0.0, %v1765
        %v1767 = vpop.f32.mrf.mxu0
        %v1768 = vadd.f32 0.0, %v1767
        %1769 = vmatmul.bf16.gmra.mxu0 %v1062
        %v1770 = vpop.f32.mrf.mxu0
        %v1771 = vadd.f32 0.0, %v1770
        %v1772 = vpop.f32.mrf.mxu0
        %v1773 = vadd.f32 0.0, %v1772
        %1774 = vmatmul.bf16.gmra.mxu0 %v1063
        %v1775 = vpop.f32.mrf.mxu0
        %v1776 = vadd.f32 0.0, %v1775
        %v1777 = vpop.f32.mrf.mxu0
        %v1778 = vadd.f32 0.0, %v1777
        %1779 = vmatmul.bf16.gmra.mxu0 %v1064
        %v1780 = vpop.f32.mrf.mxu0
        %v1781 = vadd.f32 0.0, %v1780
        %v1782 = vpop.f32.mrf.mxu0
        %v1783 = vadd.f32 0.0, %v1782
        %1784 = vmatmul.bf16.gmra.mxu0 %v1065
        %v1785 = vpop.f32.mrf.mxu0
        %v1786 = vadd.f32 0.0, %v1785
        %v1787 = vpop.f32.mrf.mxu0
        %v1788 = vadd.f32 0.0, %v1787
        %1789 = vmatmul.bf16.gmra.mxu0 %v1066
        %v1790 = vpop.f32.mrf.mxu0
        %v1791 = vadd.f32 0.0, %v1790
        %v1792 = vpop.f32.mrf.mxu0
        %v1793 = vadd.f32 0.0, %v1792
        %1794 = vmatmul.bf16.gmra.mxu0 %v1067
        %v1795 = vpop.f32.mrf.mxu0
        %v1796 = vadd.f32 0.0, %v1795
        %v1797 = vpop.f32.mrf.mxu0
        %v1798 = vadd.f32 0.0, %v1797
        %1799 = vmatmul.bf16.gmra.mxu0 %v1068
        %v1800 = vpop.f32.mrf.mxu0
        %v1801 = vadd.f32 0.0, %v1800
        %v1802 = vpop.f32.mrf.mxu0
        %v1803 = vadd.f32 0.0, %v1802
        %1804 = vdwg.mxu0
        %v1805 = vadd.f32 %v1620, %v1726
        %v1806 = vadd.f32 %v1621, %v1728
        %v1807 = vadd.f32 %v1622, %v1731
        %v1808 = vadd.f32 %v1623, %v1733
        %v1809 = vadd.f32 %v1624, %v1736
        %v1810 = vadd.f32 %v1625, %v1738
        %v1811 = vadd.f32 %v1626, %v1741
        %v1812 = vadd.f32 %v1627, %v1743
        %v1813 = vadd.f32 %v1628, %v1746
        %v1814 = vadd.f32 %v1629, %v1748
        %v1815 = vadd.f32 %v1630, %v1751
        %v1816 = vadd.f32 %v1631, %v1753
        %v1817 = vadd.f32 %v1632, %v1756
        %v1818 = vadd.f32 %v1633, %v1758
        %v1819 = vadd.f32 %v1634, %v1761
        %v1820 = vadd.f32 %v1635, %v1763
        %v1821 = vadd.f32 %v1636, %v1766
        %v1822 = vadd.f32 %v1637, %v1768
        %v1823 = vadd.f32 %v1638, %v1771
        %v1824 = vadd.f32 %v1639, %v1773
        %v1825 = vadd.f32 %v1640, %v1776
        %v1826 = vadd.f32 %v1641, %v1778
        %v1827 = vadd.f32 %v1642, %v1781
        %v1828 = vadd.f32 %v1643, %v1783
        %v1829 = vadd.f32 %v1644, %v1786
        %v1830 = vadd.f32 %v1645, %v1788
        %v1831 = vadd.f32 %v1646, %v1791
        %v1832 = vadd.f32 %v1647, %v1793
        %v1833 = vadd.f32 %v1648, %v1796
        %v1834 = vadd.f32 %v1649, %v1798
        %v1835 = vadd.f32 %v1650, %v1801
        %v1836 = vadd.f32 %v1651, %v1803
        %v1837 = vld [vmem:[#allocation10 + $0x100] sm:$0xf]
        %v1838 = vld [vmem:[#allocation10 + $0x104] sm:$0xf]
        %v1839 = vld [vmem:[#allocation10 + $0x108] sm:$0xf]
        %v1840 = vld [vmem:[#allocation10 + $0x10c] sm:$0xf]
        %v1841 = vld [vmem:[#allocation10 + $0x110] sm:$0xf]
        %v1842 = vld [vmem:[#allocation10 + $0x114] sm:$0xf]
        %v1843 = vld [vmem:[#allocation10 + $0x118] sm:$0xf]
        %v1844 = vld [vmem:[#allocation10 + $0x11c] sm:$0xf]
        %v1845 = vld [vmem:[#allocation10 + $0x120] sm:$0xf]
        %v1846 = vld [vmem:[#allocation10 + $0x124] sm:$0xf]
        %v1847 = vld [vmem:[#allocation10 + $0x128] sm:$0xf]
        %v1848 = vld [vmem:[#allocation10 + $0x12c] sm:$0xf]
        %v1849 = vld [vmem:[#allocation10 + $0x130] sm:$0xf]
        %v1850 = vld [vmem:[#allocation10 + $0x134] sm:$0xf]
        %v1851 = vld [vmem:[#allocation10 + $0x138] sm:$0xf]
        %v1852 = vld [vmem:[#allocation10 + $0x13c] sm:$0xf]
        %v1870 = vunpack.c.l.b16 %v1837
        %v1871 = vunpack.c.l.b16 %v1838
        %v1872 = vunpack.c.l.b16 %v1839
        %v1873 = vunpack.c.l.b16 %v1840
        %v1874 = vunpack.c.l.b16 %v1841
        %v1875 = vunpack.c.l.b16 %v1842
        %v1876 = vunpack.c.l.b16 %v1843
        %v1877 = vunpack.c.l.b16 %v1844
        %v1878 = vunpack.c.l.b16 %v1845
        %v1879 = vunpack.c.l.b16 %v1846
        %v1880 = vunpack.c.l.b16 %v1847
        %v1881 = vunpack.c.l.b16 %v1848
        %v1882 = vunpack.c.l.b16 %v1849
        %v1883 = vunpack.c.l.b16 %v1850
        %v1884 = vunpack.c.l.b16 %v1851
        %v1885 = vunpack.c.l.b16 %v1852
        %v1886 = vpack.c.b16 %v1871, %v1870
        %v1887 = vpack.c.b16 %v1873, %v1872
        %v1888 = vpack.c.b16 %v1875, %v1874
        %v1889 = vpack.c.b16 %v1877, %v1876
        %v1890 = vpack.c.b16 %v1879, %v1878
        %v1891 = vpack.c.b16 %v1881, %v1880
        %v1892 = vpack.c.b16 %v1883, %v1882
        %v1893 = vpack.c.b16 %v1885, %v1884
        %1902 = vmatpush.bf16.msra.mxu0 %v1893
        %1903 = vmatpush.bf16.msra.mxu0 %v1892
        %1904 = vmatpush.bf16.msra.mxu0 %v1891
        %1905 = vmatpush.bf16.msra.mxu0 %v1890
        %1906 = vmatpush.bf16.msra.mxu0 %v1889
        %1907 = vmatpush.bf16.msra.mxu0 %v1888
        %1908 = vmatpush.bf16.msra.mxu0 %v1887
        %1909 = vmatpush.bf16.msra.mxu0 %v1886
        %1910 = vmatmul.bf16.gmra.mxu0 %v888
        %v1911 = vpop.f32.mrf.mxu0
        %v1912 = vadd.f32 0.0, %v1911
        %v1913 = vpop.f32.mrf.mxu0
        %v1914 = vadd.f32 0.0, %v1913
        %1915 = vmatmul.bf16.gmra.mxu0 %v889
        %v1916 = vpop.f32.mrf.mxu0
        %v1917 = vadd.f32 0.0, %v1916
        %v1918 = vpop.f32.mrf.mxu0
        %v1919 = vadd.f32 0.0, %v1918
        %1920 = vmatmul.bf16.gmra.mxu0 %v890
        %v1921 = vpop.f32.mrf.mxu0
        %v1922 = vadd.f32 0.0, %v1921
        %v1923 = vpop.f32.mrf.mxu0
        %v1924 = vadd.f32 0.0, %v1923
        %1925 = vmatmul.bf16.gmra.mxu0 %v891
        %v1926 = vpop.f32.mrf.mxu0
        %v1927 = vadd.f32 0.0, %v1926
        %v1928 = vpop.f32.mrf.mxu0
        %v1929 = vadd.f32 0.0, %v1928
        %1930 = vmatmul.bf16.gmra.mxu0 %v892
        %v1931 = vpop.f32.mrf.mxu0
        %v1932 = vadd.f32 0.0, %v1931
        %v1933 = vpop.f32.mrf.mxu0
        %v1934 = vadd.f32 0.0, %v1933
        %1935 = vmatmul.bf16.gmra.mxu0 %v893
        %v1936 = vpop.f32.mrf.mxu0
        %v1937 = vadd.f32 0.0, %v1936
        %v1938 = vpop.f32.mrf.mxu0
        %v1939 = vadd.f32 0.0, %v1938
        %1940 = vmatmul.bf16.gmra.mxu0 %v894
        %v1941 = vpop.f32.mrf.mxu0
        %v1942 = vadd.f32 0.0, %v1941
        %v1943 = vpop.f32.mrf.mxu0
        %v1944 = vadd.f32 0.0, %v1943
        %1945 = vmatmul.bf16.gmra.mxu0 %v895
        %v1946 = vpop.f32.mrf.mxu0
        %v1947 = vadd.f32 0.0, %v1946
        %v1948 = vpop.f32.mrf.mxu0
        %v1949 = vadd.f32 0.0, %v1948
        %1950 = vmatmul.bf16.gmra.mxu0 %v896
        %v1951 = vpop.f32.mrf.mxu0
        %v1952 = vadd.f32 0.0, %v1951
        %v1953 = vpop.f32.mrf.mxu0
        %v1954 = vadd.f32 0.0, %v1953
        %1955 = vmatmul.bf16.gmra.mxu0 %v897
        %v1956 = vpop.f32.mrf.mxu0
        %v1957 = vadd.f32 0.0, %v1956
        %v1958 = vpop.f32.mrf.mxu0
        %v1959 = vadd.f32 0.0, %v1958
        %1960 = vmatmul.bf16.gmra.mxu0 %v898
        %v1961 = vpop.f32.mrf.mxu0
        %v1962 = vadd.f32 0.0, %v1961
        %v1963 = vpop.f32.mrf.mxu0
        %v1964 = vadd.f32 0.0, %v1963
        %1965 = vmatmul.bf16.gmra.mxu0 %v899
        %v1966 = vpop.f32.mrf.mxu0
        %v1967 = vadd.f32 0.0, %v1966
        %v1968 = vpop.f32.mrf.mxu0
        %v1969 = vadd.f32 0.0, %v1968
        %1970 = vmatmul.bf16.gmra.mxu0 %v900
        %v1971 = vpop.f32.mrf.mxu0
        %v1972 = vadd.f32 0.0, %v1971
        %v1973 = vpop.f32.mrf.mxu0
        %v1974 = vadd.f32 0.0, %v1973
        %1975 = vmatmul.bf16.gmra.mxu0 %v901
        %v1976 = vpop.f32.mrf.mxu0
        %v1977 = vadd.f32 0.0, %v1976
        %v1978 = vpop.f32.mrf.mxu0
        %v1979 = vadd.f32 0.0, %v1978
        %1980 = vmatmul.bf16.gmra.mxu0 %v902
        %v1981 = vpop.f32.mrf.mxu0
        %v1982 = vadd.f32 0.0, %v1981
        %v1983 = vpop.f32.mrf.mxu0
        %v1984 = vadd.f32 0.0, %v1983
        %1985 = vmatmul.bf16.gmra.mxu0 %v903
        %v1986 = vpop.f32.mrf.mxu0
        %v1987 = vadd.f32 0.0, %v1986
        %v1988 = vpop.f32.mrf.mxu0
        %v1989 = vadd.f32 0.0, %v1988
        %1990 = vdwg.mxu0
        %v1991 = vadd.f32 %v1805, %v1912
        %v1992 = vadd.f32 %v1806, %v1914
        %v1993 = vadd.f32 %v1807, %v1917
        %v1994 = vadd.f32 %v1808, %v1919
        %v1995 = vadd.f32 %v1809, %v1922
        %v1996 = vadd.f32 %v1810, %v1924
        %v1997 = vadd.f32 %v1811, %v1927
        %v1998 = vadd.f32 %v1812, %v1929
        %v1999 = vadd.f32 %v1813, %v1932
        %v2000 = vadd.f32 %v1814, %v1934
        %v2001 = vadd.f32 %v1815, %v1937
        %v2002 = vadd.f32 %v1816, %v1939
        %v2003 = vadd.f32 %v1817, %v1942
        %v2004 = vadd.f32 %v1818, %v1944
        %v2005 = vadd.f32 %v1819, %v1947
        %v2006 = vadd.f32 %v1820, %v1949
        %v2007 = vadd.f32 %v1821, %v1952
        %v2008 = vadd.f32 %v1822, %v1954
        %v2009 = vadd.f32 %v1823, %v1957
        %v2010 = vadd.f32 %v1824, %v1959
        %v2011 = vadd.f32 %v1825, %v1962
        %v2012 = vadd.f32 %v1826, %v1964
        %v2013 = vadd.f32 %v1827, %v1967
        %v2014 = vadd.f32 %v1828, %v1969
        %v2015 = vadd.f32 %v1829, %v1972
        %v2016 = vadd.f32 %v1830, %v1974
        %v2017 = vadd.f32 %v1831, %v1977
        %v2018 = vadd.f32 %v1832, %v1979
        %v2019 = vadd.f32 %v1833, %v1982
        %v2020 = vadd.f32 %v1834, %v1984
        %v2021 = vadd.f32 %v1835, %v1987
        %v2022 = vadd.f32 %v1836, %v1989
        %v2023 = vld [vmem:[#allocation10 + $0x140] sm:$0xf]
        %v2024 = vld [vmem:[#allocation10 + $0x144] sm:$0xf]
        %v2025 = vld [vmem:[#allocation10 + $0x148] sm:$0xf]
        %v2026 = vld [vmem:[#allocation10 + $0x14c] sm:$0xf]
        %v2027 = vld [vmem:[#allocation10 + $0x150] sm:$0xf]
        %v2028 = vld [vmem:[#allocation10 + $0x154] sm:$0xf]
        %v2029 = vld [vmem:[#allocation10 + $0x158] sm:$0xf]
        %v2030 = vld [vmem:[#allocation10 + $0x15c] sm:$0xf]
        %v2031 = vld [vmem:[#allocation10 + $0x160] sm:$0xf]
        %v2032 = vld [vmem:[#allocation10 + $0x164] sm:$0xf]
        %v2033 = vld [vmem:[#allocation10 + $0x168] sm:$0xf]
        %v2034 = vld [vmem:[#allocation10 + $0x16c] sm:$0xf]
        %v2035 = vld [vmem:[#allocation10 + $0x170] sm:$0xf]
        %v2036 = vld [vmem:[#allocation10 + $0x174] sm:$0xf]
        %v2037 = vld [vmem:[#allocation10 + $0x178] sm:$0xf]
        %v2038 = vld [vmem:[#allocation10 + $0x17c] sm:$0xf]
        %v2055 = vunpack.c.l.b16 %v2023
        %v2056 = vunpack.c.l.b16 %v2024
        %v2057 = vunpack.c.l.b16 %v2025
        %v2058 = vunpack.c.l.b16 %v2026
        %v2059 = vunpack.c.l.b16 %v2027
        %v2060 = vunpack.c.l.b16 %v2028
        %v2061 = vunpack.c.l.b16 %v2029
        %v2062 = vunpack.c.l.b16 %v2030
        %v2063 = vunpack.c.l.b16 %v2031
        %v2064 = vunpack.c.l.b16 %v2032
        %v2065 = vunpack.c.l.b16 %v2033
        %v2066 = vunpack.c.l.b16 %v2034
        %v2067 = vunpack.c.l.b16 %v2035
        %v2068 = vunpack.c.l.b16 %v2036
        %v2069 = vunpack.c.l.b16 %v2037
        %v2070 = vunpack.c.l.b16 %v2038
        %v2071 = vpack.c.b16 %v2056, %v2055
        %v2072 = vpack.c.b16 %v2058, %v2057
        %v2073 = vpack.c.b16 %v2060, %v2059
        %v2074 = vpack.c.b16 %v2062, %v2061
        %v2075 = vpack.c.b16 %v2064, %v2063
        %v2076 = vpack.c.b16 %v2066, %v2065
        %v2077 = vpack.c.b16 %v2068, %v2067
        %v2078 = vpack.c.b16 %v2070, %v2069
        %2087 = vmatpush.bf16.msra.mxu0 %v2078
        %2088 = vmatpush.bf16.msra.mxu0 %v2077
        %2089 = vmatpush.bf16.msra.mxu0 %v2076
        %2090 = vmatpush.bf16.msra.mxu0 %v2075
        %2091 = vmatpush.bf16.msra.mxu0 %v2074
        %2092 = vmatpush.bf16.msra.mxu0 %v2073
        %2093 = vmatpush.bf16.msra.mxu0 %v2072
        %2094 = vmatpush.bf16.msra.mxu0 %v2071
        %2095 = vmatmul.bf16.gmra.mxu0 %v1128
        %v2096 = vpop.f32.mrf.mxu0
        %v2097 = vadd.f32 0.0, %v2096
        %v2098 = vpop.f32.mrf.mxu0
        %v2099 = vadd.f32 0.0, %v2098
        %2100 = vmatmul.bf16.gmra.mxu0 %v1129
        %v2101 = vpop.f32.mrf.mxu0
        %v2102 = vadd.f32 0.0, %v2101
        %v2103 = vpop.f32.mrf.mxu0
        %v2104 = vadd.f32 0.0, %v2103
        %2105 = vmatmul.bf16.gmra.mxu0 %v1130
        %v2106 = vpop.f32.mrf.mxu0
        %v2107 = vadd.f32 0.0, %v2106
        %v2108 = vpop.f32.mrf.mxu0
        %v2109 = vadd.f32 0.0, %v2108
        %2110 = vmatmul.bf16.gmra.mxu0 %v1131
        %v2111 = vpop.f32.mrf.mxu0
        %v2112 = vadd.f32 0.0, %v2111
        %v2113 = vpop.f32.mrf.mxu0
        %v2114 = vadd.f32 0.0, %v2113
        %2115 = vmatmul.bf16.gmra.mxu0 %v1132
        %v2116 = vpop.f32.mrf.mxu0
        %v2117 = vadd.f32 0.0, %v2116
        %v2118 = vpop.f32.mrf.mxu0
        %v2119 = vadd.f32 0.0, %v2118
        %2120 = vmatmul.bf16.gmra.mxu0 %v1133
        %v2121 = vpop.f32.mrf.mxu0
        %v2122 = vadd.f32 0.0, %v2121
        %v2123 = vpop.f32.mrf.mxu0
        %v2124 = vadd.f32 0.0, %v2123
        %2125 = vmatmul.bf16.gmra.mxu0 %v1134
        %v2126 = vpop.f32.mrf.mxu0
        %v2127 = vadd.f32 0.0, %v2126
        %v2128 = vpop.f32.mrf.mxu0
        %v2129 = vadd.f32 0.0, %v2128
        %2130 = vmatmul.bf16.gmra.mxu0 %v1135
        %v2131 = vpop.f32.mrf.mxu0
        %v2132 = vadd.f32 0.0, %v2131
        %v2133 = vpop.f32.mrf.mxu0
        %v2134 = vadd.f32 0.0, %v2133
        %2135 = vmatmul.bf16.gmra.mxu0 %v1136
        %v2136 = vpop.f32.mrf.mxu0
        %v2137 = vadd.f32 0.0, %v2136
        %v2138 = vpop.f32.mrf.mxu0
        %v2139 = vadd.f32 0.0, %v2138
        %2140 = vmatmul.bf16.gmra.mxu0 %v1137
        %v2141 = vpop.f32.mrf.mxu0
        %v2142 = vadd.f32 0.0, %v2141
        %v2143 = vpop.f32.mrf.mxu0
        %v2144 = vadd.f32 0.0, %v2143
        %2145 = vmatmul.bf16.gmra.mxu0 %v1138
        %v2146 = vpop.f32.mrf.mxu0
        %v2147 = vadd.f32 0.0, %v2146
        %v2148 = vpop.f32.mrf.mxu0
        %v2149 = vadd.f32 0.0, %v2148
        %2150 = vmatmul.bf16.gmra.mxu0 %v1139
        %v2151 = vpop.f32.mrf.mxu0
        %v2152 = vadd.f32 0.0, %v2151
        %v2153 = vpop.f32.mrf.mxu0
        %v2154 = vadd.f32 0.0, %v2153
        %2155 = vmatmul.bf16.gmra.mxu0 %v1140
        %v2156 = vpop.f32.mrf.mxu0
        %v2157 = vadd.f32 0.0, %v2156
        %v2158 = vpop.f32.mrf.mxu0
        %v2159 = vadd.f32 0.0, %v2158
        %2160 = vmatmul.bf16.gmra.mxu0 %v1141
        %v2161 = vpop.f32.mrf.mxu0
        %v2162 = vadd.f32 0.0, %v2161
        %v2163 = vpop.f32.mrf.mxu0
        %v2164 = vadd.f32 0.0, %v2163
        %2165 = vmatmul.bf16.gmra.mxu0 %v1142
        %v2166 = vpop.f32.mrf.mxu0
        %v2167 = vadd.f32 0.0, %v2166
        %v2168 = vpop.f32.mrf.mxu0
        %v2169 = vadd.f32 0.0, %v2168
        %2170 = vmatmul.bf16.gmra.mxu0 %v1143
        %v2171 = vpop.f32.mrf.mxu0
        %v2172 = vadd.f32 0.0, %v2171
        %v2173 = vpop.f32.mrf.mxu0
        %v2174 = vadd.f32 0.0, %v2173
        %2175 = vdwg.mxu0
        %v2176 = vadd.f32 %v1991, %v2097
        %v2177 = vadd.f32 %v1992, %v2099
        %v2178 = vadd.f32 %v1993, %v2102
        %v2179 = vadd.f32 %v1994, %v2104
        %v2180 = vadd.f32 %v1995, %v2107
        %v2181 = vadd.f32 %v1996, %v2109
        %v2182 = vadd.f32 %v1997, %v2112
        %v2183 = vadd.f32 %v1998, %v2114
        %v2184 = vadd.f32 %v1999, %v2117
        %v2185 = vadd.f32 %v2000, %v2119
        %v2186 = vadd.f32 %v2001, %v2122
        %v2187 = vadd.f32 %v2002, %v2124
        %v2188 = vadd.f32 %v2003, %v2127
        %v2189 = vadd.f32 %v2004, %v2129
        %v2190 = vadd.f32 %v2005, %v2132
        %v2191 = vadd.f32 %v2006, %v2134
        %v2192 = vadd.f32 %v2007, %v2137
        %v2193 = vadd.f32 %v2008, %v2139
        %v2194 = vadd.f32 %v2009, %v2142
        %v2195 = vadd.f32 %v2010, %v2144
        %v2196 = vadd.f32 %v2011, %v2147
        %v2197 = vadd.f32 %v2012, %v2149
        %v2198 = vadd.f32 %v2013, %v2152
        %v2199 = vadd.f32 %v2014, %v2154
        %v2200 = vadd.f32 %v2015, %v2157
        %v2201 = vadd.f32 %v2016, %v2159
        %v2202 = vadd.f32 %v2017, %v2162
        %v2203 = vadd.f32 %v2018, %v2164
        %v2204 = vadd.f32 %v2019, %v2167
        %v2205 = vadd.f32 %v2020, %v2169
        %v2206 = vadd.f32 %v2021, %v2172
        %v2207 = vadd.f32 %v2022, %v2174
        %v2208 = vld [vmem:[#allocation10 + $0x180] sm:$0xf]
        %v2209 = vld [vmem:[#allocation10 + $0x184] sm:$0xf]
        %v2210 = vld [vmem:[#allocation10 + $0x188] sm:$0xf]
        %v2211 = vld [vmem:[#allocation10 + $0x18c] sm:$0xf]
        %v2212 = vld [vmem:[#allocation10 + $0x190] sm:$0xf]
        %v2213 = vld [vmem:[#allocation10 + $0x194] sm:$0xf]
        %v2214 = vld [vmem:[#allocation10 + $0x198] sm:$0xf]
        %v2215 = vld [vmem:[#allocation10 + $0x19c] sm:$0xf]
        %v2216 = vld [vmem:[#allocation10 + $0x1a0] sm:$0xf]
        %v2217 = vld [vmem:[#allocation10 + $0x1a4] sm:$0xf]
        %v2218 = vld [vmem:[#allocation10 + $0x1a8] sm:$0xf]
        %v2219 = vld [vmem:[#allocation10 + $0x1ac] sm:$0xf]
        %v2220 = vld [vmem:[#allocation10 + $0x1b0] sm:$0xf]
        %v2221 = vld [vmem:[#allocation10 + $0x1b4] sm:$0xf]
        %v2222 = vld [vmem:[#allocation10 + $0x1b8] sm:$0xf]
        %v2223 = vld [vmem:[#allocation10 + $0x1bc] sm:$0xf]
        %v2240 = vunpack.c.l.b16 %v2208
        %v2241 = vunpack.c.l.b16 %v2209
        %v2242 = vunpack.c.l.b16 %v2210
        %v2243 = vunpack.c.l.b16 %v2211
        %v2244 = vunpack.c.l.b16 %v2212
        %v2245 = vunpack.c.l.b16 %v2213
        %v2246 = vunpack.c.l.b16 %v2214
        %v2247 = vunpack.c.l.b16 %v2215
        %v2248 = vunpack.c.l.b16 %v2216
        %v2249 = vunpack.c.l.b16 %v2217
        %v2250 = vunpack.c.l.b16 %v2218
        %v2251 = vunpack.c.l.b16 %v2219
        %v2252 = vunpack.c.l.b16 %v2220
        %v2253 = vunpack.c.l.b16 %v2221
        %v2254 = vunpack.c.l.b16 %v2222
        %v2255 = vunpack.c.l.b16 %v2223
        %v2256 = vpack.c.b16 %v2241, %v2240
        %v2257 = vpack.c.b16 %v2243, %v2242
        %v2258 = vpack.c.b16 %v2245, %v2244
        %v2259 = vpack.c.b16 %v2247, %v2246
        %v2260 = vpack.c.b16 %v2249, %v2248
        %v2261 = vpack.c.b16 %v2251, %v2250
        %v2262 = vpack.c.b16 %v2253, %v2252
        %v2263 = vpack.c.b16 %v2255, %v2254
        %2272 = vmatpush.bf16.msra.mxu0 %v2263
        %2273 = vmatpush.bf16.msra.mxu0 %v2262
        %2274 = vmatpush.bf16.msra.mxu0 %v2261
        %2275 = vmatpush.bf16.msra.mxu0 %v2260
        %2276 = vmatpush.bf16.msra.mxu0 %v2259
        %2277 = vmatpush.bf16.msra.mxu0 %v2258
        %2278 = vmatpush.bf16.msra.mxu0 %v2257
        %2279 = vmatpush.bf16.msra.mxu0 %v2256
        %2280 = vmatmul.bf16.gmra.mxu0 %v1054
        %v2281 = vpop.f32.mrf.mxu0
        %v2282 = vadd.f32 0.0, %v2281
        %v2283 = vpop.f32.mrf.mxu0
        %v2284 = vadd.f32 0.0, %v2283
        %2285 = vmatmul.bf16.gmra.mxu0 %v1055
        %v2286 = vpop.f32.mrf.mxu0
        %v2287 = vadd.f32 0.0, %v2286
        %v2288 = vpop.f32.mrf.mxu0
        %v2289 = vadd.f32 0.0, %v2288
        %2290 = vmatmul.bf16.gmra.mxu0 %v1056
        %v2291 = vpop.f32.mrf.mxu0
        %v2292 = vadd.f32 0.0, %v2291
        %v2293 = vpop.f32.mrf.mxu0
        %v2294 = vadd.f32 0.0, %v2293
        %2295 = vmatmul.bf16.gmra.mxu0 %v1057
        %v2296 = vpop.f32.mrf.mxu0
        %v2297 = vadd.f32 0.0, %v2296
        %v2298 = vpop.f32.mrf.mxu0
        %v2299 = vadd.f32 0.0, %v2298
        %2300 = vmatmul.bf16.gmra.mxu0 %v1058
        %v2301 = vpop.f32.mrf.mxu0
        %v2302 = vadd.f32 0.0, %v2301
        %v2303 = vpop.f32.mrf.mxu0
        %v2304 = vadd.f32 0.0, %v2303
        %2305 = vmatmul.bf16.gmra.mxu0 %v1059
        %v2306 = vpop.f32.mrf.mxu0
        %v2307 = vadd.f32 0.0, %v2306
        %v2308 = vpop.f32.mrf.mxu0
        %v2309 = vadd.f32 0.0, %v2308
        %2310 = vmatmul.bf16.gmra.mxu0 %v1060
        %v2311 = vpop.f32.mrf.mxu0
        %v2312 = vadd.f32 0.0, %v2311
        %v2313 = vpop.f32.mrf.mxu0
        %v2314 = vadd.f32 0.0, %v2313
        %2315 = vmatmul.bf16.gmra.mxu0 %v1061
        %v2316 = vpop.f32.mrf.mxu0
        %v2317 = vadd.f32 0.0, %v2316
        %v2318 = vpop.f32.mrf.mxu0
        %v2319 = vadd.f32 0.0, %v2318
        %2320 = vmatmul.bf16.gmra.mxu0 %v1062
        %v2321 = vpop.f32.mrf.mxu0
        %v2322 = vadd.f32 0.0, %v2321
        %v2323 = vpop.f32.mrf.mxu0
        %v2324 = vadd.f32 0.0, %v2323
        %2325 = vmatmul.bf16.gmra.mxu0 %v1063
        %v2326 = vpop.f32.mrf.mxu0
        %v2327 = vadd.f32 0.0, %v2326
        %v2328 = vpop.f32.mrf.mxu0
        %v2329 = vadd.f32 0.0, %v2328
        %2330 = vmatmul.bf16.gmra.mxu0 %v1064
        %v2331 = vpop.f32.mrf.mxu0
        %v2332 = vadd.f32 0.0, %v2331
        %v2333 = vpop.f32.mrf.mxu0
        %v2334 = vadd.f32 0.0, %v2333
        %2335 = vmatmul.bf16.gmra.mxu0 %v1065
        %v2336 = vpop.f32.mrf.mxu0
        %v2337 = vadd.f32 0.0, %v2336
        %v2338 = vpop.f32.mrf.mxu0
        %v2339 = vadd.f32 0.0, %v2338
        %2340 = vmatmul.bf16.gmra.mxu0 %v1066
        %v2341 = vpop.f32.mrf.mxu0
        %v2342 = vadd.f32 0.0, %v2341
        %v2343 = vpop.f32.mrf.mxu0
        %v2344 = vadd.f32 0.0, %v2343
        %2345 = vmatmul.bf16.gmra.mxu0 %v1067
        %v2346 = vpop.f32.mrf.mxu0
        %v2347 = vadd.f32 0.0, %v2346
        %v2348 = vpop.f32.mrf.mxu0
        %v2349 = vadd.f32 0.0, %v2348
        %2350 = vmatmul.bf16.gmra.mxu0 %v1068
        %v2351 = vpop.f32.mrf.mxu0
        %v2352 = vadd.f32 0.0, %v2351
        %v2353 = vpop.f32.mrf.mxu0
        %v2354 = vadd.f32 0.0, %v2353
        %2355 = vmatmul.bf16.gmra.mxu0 %v1069
        %v2356 = vpop.f32.mrf.mxu0
        %v2357 = vadd.f32 0.0, %v2356
        %v2358 = vpop.f32.mrf.mxu0
        %v2359 = vadd.f32 0.0, %v2358
        %2360 = vdwg.mxu0
        %v2361 = vadd.f32 %v2176, %v2282
        %v2362 = vadd.f32 %v2177, %v2284
        %v2363 = vadd.f32 %v2178, %v2287
        %v2364 = vadd.f32 %v2179, %v2289
        %v2365 = vadd.f32 %v2180, %v2292
        %v2366 = vadd.f32 %v2181, %v2294
        %v2367 = vadd.f32 %v2182, %v2297
        %v2368 = vadd.f32 %v2183, %v2299
        %v2369 = vadd.f32 %v2184, %v2302
        %v2370 = vadd.f32 %v2185, %v2304
        %v2371 = vadd.f32 %v2186, %v2307
        %v2372 = vadd.f32 %v2187, %v2309
        %v2373 = vadd.f32 %v2188, %v2312
        %v2374 = vadd.f32 %v2189, %v2314
        %v2375 = vadd.f32 %v2190, %v2317
        %v2376 = vadd.f32 %v2191, %v2319
        %v2377 = vadd.f32 %v2192, %v2322
        %v2378 = vadd.f32 %v2193, %v2324
        %v2379 = vadd.f32 %v2194, %v2327
        %v2380 = vadd.f32 %v2195, %v2329
        %v2381 = vadd.f32 %v2196, %v2332
        %v2382 = vadd.f32 %v2197, %v2334
        %v2383 = vadd.f32 %v2198, %v2337
        %v2384 = vadd.f32 %v2199, %v2339
        %v2385 = vadd.f32 %v2200, %v2342
        %v2386 = vadd.f32 %v2201, %v2344
        %v2387 = vadd.f32 %v2202, %v2347
        %v2388 = vadd.f32 %v2203, %v2349
        %v2389 = vadd.f32 %v2204, %v2352
        %v2390 = vadd.f32 %v2205, %v2354
        %v2391 = vadd.f32 %v2206, %v2357
        %v2392 = vadd.f32 %v2207, %v2359
        %v2393 = vld [vmem:[#allocation10 + $0x1c0] sm:$0xf]
        %v2394 = vld [vmem:[#allocation10 + $0x1c4] sm:$0xf]
        %v2395 = vld [vmem:[#allocation10 + $0x1c8] sm:$0xf]
        %v2396 = vld [vmem:[#allocation10 + $0x1cc] sm:$0xf]
        %v2397 = vld [vmem:[#allocation10 + $0x1d0] sm:$0xf]
        %v2398 = vld [vmem:[#allocation10 + $0x1d4] sm:$0xf]
        %v2399 = vld [vmem:[#allocation10 + $0x1d8] sm:$0xf]
        %v2400 = vld [vmem:[#allocation10 + $0x1dc] sm:$0xf]
        %v2401 = vld [vmem:[#allocation10 + $0x1e0] sm:$0xf]
        %v2402 = vld [vmem:[#allocation10 + $0x1e4] sm:$0xf]
        %v2403 = vld [vmem:[#allocation10 + $0x1e8] sm:$0xf]
        %v2404 = vld [vmem:[#allocation10 + $0x1ec] sm:$0xf]
        %v2405 = vld [vmem:[#allocation10 + $0x1f0] sm:$0xf]
        %v2406 = vld [vmem:[#allocation10 + $0x1f4] sm:$0xf]
        %v2407 = vld [vmem:[#allocation10 + $0x1f8] sm:$0xf]
        %v2408 = vld [vmem:[#allocation10 + $0x1fc] sm:$0xf]
        %v2426 = vunpack.c.l.b16 %v2393
        %v2427 = vunpack.c.l.b16 %v2394
        %v2428 = vunpack.c.l.b16 %v2395
        %v2429 = vunpack.c.l.b16 %v2396
        %v2430 = vunpack.c.l.b16 %v2397
        %v2431 = vunpack.c.l.b16 %v2398
        %v2432 = vunpack.c.l.b16 %v2399
        %v2433 = vunpack.c.l.b16 %v2400
        %v2434 = vunpack.c.l.b16 %v2401
        %v2435 = vunpack.c.l.b16 %v2402
        %v2436 = vunpack.c.l.b16 %v2403
        %v2437 = vunpack.c.l.b16 %v2404
        %v2438 = vunpack.c.l.b16 %v2405
        %v2439 = vunpack.c.l.b16 %v2406
        %v2440 = vunpack.c.l.b16 %v2407
        %v2441 = vunpack.c.l.b16 %v2408
        %v2442 = vpack.c.b16 %v2427, %v2426
        %v2443 = vpack.c.b16 %v2429, %v2428
        %v2444 = vpack.c.b16 %v2431, %v2430
        %v2445 = vpack.c.b16 %v2433, %v2432
        %v2446 = vpack.c.b16 %v2435, %v2434
        %v2447 = vpack.c.b16 %v2437, %v2436
        %v2448 = vpack.c.b16 %v2439, %v2438
        %v2449 = vpack.c.b16 %v2441, %v2440
        %2458 = vmatpush.bf16.msra.mxu0 %v2449
        %2459 = vmatpush.bf16.msra.mxu0 %v2448
        %2460 = vmatpush.bf16.msra.mxu0 %v2447
        %2461 = vmatpush.bf16.msra.mxu0 %v2446
        %2462 = vmatpush.bf16.msra.mxu0 %v2445
        %2463 = vmatpush.bf16.msra.mxu0 %v2444
        %2464 = vmatpush.bf16.msra.mxu0 %v2443
        %2465 = vmatpush.bf16.msra.mxu0 %v2442
        %2466 = vmatmul.bf16.gmra.mxu0 %v889
        %v2467 = vpop.f32.mrf.mxu0
        %v2468 = vadd.f32 0.0, %v2467
        %v2469 = vpop.f32.mrf.mxu0
        %v2470 = vadd.f32 0.0, %v2469
        %2471 = vmatmul.bf16.gmra.mxu0 %v890
        %v2472 = vpop.f32.mrf.mxu0
        %v2473 = vadd.f32 0.0, %v2472
        %v2474 = vpop.f32.mrf.mxu0
        %v2475 = vadd.f32 0.0, %v2474
        %2476 = vmatmul.bf16.gmra.mxu0 %v891
        %v2477 = vpop.f32.mrf.mxu0
        %v2478 = vadd.f32 0.0, %v2477
        %v2479 = vpop.f32.mrf.mxu0
        %v2480 = vadd.f32 0.0, %v2479
        %2481 = vmatmul.bf16.gmra.mxu0 %v892
        %v2482 = vpop.f32.mrf.mxu0
        %v2483 = vadd.f32 0.0, %v2482
        %v2484 = vpop.f32.mrf.mxu0
        %v2485 = vadd.f32 0.0, %v2484
        %2486 = vmatmul.bf16.gmra.mxu0 %v893
        %v2487 = vpop.f32.mrf.mxu0
        %v2488 = vadd.f32 0.0, %v2487
        %v2489 = vpop.f32.mrf.mxu0
        %v2490 = vadd.f32 0.0, %v2489
        %2491 = vmatmul.bf16.gmra.mxu0 %v894
        %v2492 = vpop.f32.mrf.mxu0
        %v2493 = vadd.f32 0.0, %v2492
        %v2494 = vpop.f32.mrf.mxu0
        %v2495 = vadd.f32 0.0, %v2494
        %2496 = vmatmul.bf16.gmra.mxu0 %v895
        %v2497 = vpop.f32.mrf.mxu0
        %v2498 = vadd.f32 0.0, %v2497
        %v2499 = vpop.f32.mrf.mxu0
        %v2500 = vadd.f32 0.0, %v2499
        %2501 = vmatmul.bf16.gmra.mxu0 %v896
        %v2502 = vpop.f32.mrf.mxu0
        %v2503 = vadd.f32 0.0, %v2502
        %v2504 = vpop.f32.mrf.mxu0
        %v2505 = vadd.f32 0.0, %v2504
        %2506 = vmatmul.bf16.gmra.mxu0 %v897
        %v2507 = vpop.f32.mrf.mxu0
        %v2508 = vadd.f32 0.0, %v2507
        %v2509 = vpop.f32.mrf.mxu0
        %v2510 = vadd.f32 0.0, %v2509
        %2511 = vmatmul.bf16.gmra.mxu0 %v898
        %v2512 = vpop.f32.mrf.mxu0
        %v2513 = vadd.f32 0.0, %v2512
        %v2514 = vpop.f32.mrf.mxu0
        %v2515 = vadd.f32 0.0, %v2514
        %2516 = vmatmul.bf16.gmra.mxu0 %v899
        %v2517 = vpop.f32.mrf.mxu0
        %v2518 = vadd.f32 0.0, %v2517
        %v2519 = vpop.f32.mrf.mxu0
        %v2520 = vadd.f32 0.0, %v2519
        %2521 = vmatmul.bf16.gmra.mxu0 %v900
        %v2522 = vpop.f32.mrf.mxu0
        %v2523 = vadd.f32 0.0, %v2522
        %v2524 = vpop.f32.mrf.mxu0
        %v2525 = vadd.f32 0.0, %v2524
        %2526 = vmatmul.bf16.gmra.mxu0 %v901
        %v2527 = vpop.f32.mrf.mxu0
        %v2528 = vadd.f32 0.0, %v2527
        %v2529 = vpop.f32.mrf.mxu0
        %v2530 = vadd.f32 0.0, %v2529
        %2531 = vmatmul.bf16.gmra.mxu0 %v902
        %v2532 = vpop.f32.mrf.mxu0
        %v2533 = vadd.f32 0.0, %v2532
        %v2534 = vpop.f32.mrf.mxu0
        %v2535 = vadd.f32 0.0, %v2534
        %2536 = vmatmul.bf16.gmra.mxu0 %v903
        %v2537 = vpop.f32.mrf.mxu0
        %v2538 = vadd.f32 0.0, %v2537
        %v2539 = vpop.f32.mrf.mxu0
        %v2540 = vadd.f32 0.0, %v2539
        %2541 = vmatmul.bf16.gmra.mxu0 %v904
        %v2542 = vpop.f32.mrf.mxu0
        %v2543 = vadd.f32 0.0, %v2542
        %v2544 = vpop.f32.mrf.mxu0
        %v2545 = vadd.f32 0.0, %v2544
        %2546 = vdwg.mxu0
        %v2547 = vadd.f32 %v2361, %v2468
        %v2548 = vadd.f32 %v2362, %v2470
        %v2549 = vadd.f32 %v2363, %v2473
        %v2550 = vadd.f32 %v2364, %v2475
        %v2551 = vadd.f32 %v2365, %v2478
        %v2552 = vadd.f32 %v2366, %v2480
        %v2553 = vadd.f32 %v2367, %v2483
        %v2554 = vadd.f32 %v2368, %v2485
        %v2555 = vadd.f32 %v2369, %v2488
        %v2556 = vadd.f32 %v2370, %v2490
        %v2557 = vadd.f32 %v2371, %v2493
        %v2558 = vadd.f32 %v2372, %v2495
        %v2559 = vadd.f32 %v2373, %v2498
        %v2560 = vadd.f32 %v2374, %v2500
        %v2561 = vadd.f32 %v2375, %v2503
        %v2562 = vadd.f32 %v2376, %v2505
        %v2563 = vadd.f32 %v2377, %v2508
        %v2564 = vadd.f32 %v2378, %v2510
        %v2565 = vadd.f32 %v2379, %v2513
        %v2566 = vadd.f32 %v2380, %v2515
        %v2567 = vadd.f32 %v2381, %v2518
        %v2568 = vadd.f32 %v2382, %v2520
        %v2569 = vadd.f32 %v2383, %v2523
        %v2570 = vadd.f32 %v2384, %v2525
        %v2571 = vadd.f32 %v2385, %v2528
        %v2572 = vadd.f32 %v2386, %v2530
        %v2573 = vadd.f32 %v2387, %v2533
        %v2574 = vadd.f32 %v2388, %v2535
        %v2575 = vadd.f32 %v2389, %v2538
        %v2576 = vadd.f32 %v2390, %v2540
        %v2577 = vadd.f32 %v2391, %v2543
        %v2578 = vadd.f32 %v2392, %v2545
        %v2579 = vld [vmem:[#allocation10 + $0x200] sm:$0xf]
        %v2580 = vld [vmem:[#allocation10 + $0x204] sm:$0xf]
        %v2581 = vld [vmem:[#allocation10 + $0x208] sm:$0xf]
        %v2582 = vld [vmem:[#allocation10 + $0x20c] sm:$0xf]
        %v2583 = vld [vmem:[#allocation10 + $0x210] sm:$0xf]
        %v2584 = vld [vmem:[#allocation10 + $0x214] sm:$0xf]
        %v2585 = vld [vmem:[#allocation10 + $0x218] sm:$0xf]
        %v2586 = vld [vmem:[#allocation10 + $0x21c] sm:$0xf]
        %v2587 = vld [vmem:[#allocation10 + $0x220] sm:$0xf]
        %v2588 = vld [vmem:[#allocation10 + $0x224] sm:$0xf]
        %v2589 = vld [vmem:[#allocation10 + $0x228] sm:$0xf]
        %v2590 = vld [vmem:[#allocation10 + $0x22c] sm:$0xf]
        %v2591 = vld [vmem:[#allocation10 + $0x230] sm:$0xf]
        %v2592 = vld [vmem:[#allocation10 + $0x234] sm:$0xf]
        %v2593 = vld [vmem:[#allocation10 + $0x238] sm:$0xf]
        %v2594 = vld [vmem:[#allocation10 + $0x23c] sm:$0xf]
        %v2611 = vunpack.c.l.b16 %v2579
        %v2612 = vunpack.c.l.b16 %v2580
        %v2613 = vunpack.c.l.b16 %v2581
        %v2614 = vunpack.c.l.b16 %v2582
        %v2615 = vunpack.c.l.b16 %v2583
        %v2616 = vunpack.c.l.b16 %v2584
        %v2617 = vunpack.c.l.b16 %v2585
        %v2618 = vunpack.c.l.b16 %v2586
        %v2619 = vunpack.c.l.b16 %v2587
        %v2620 = vunpack.c.l.b16 %v2588
        %v2621 = vunpack.c.l.b16 %v2589
        %v2622 = vunpack.c.l.b16 %v2590
        %v2623 = vunpack.c.l.b16 %v2591
        %v2624 = vunpack.c.l.b16 %v2592
        %v2625 = vunpack.c.l.b16 %v2593
        %v2626 = vunpack.c.l.b16 %v2594
        %v2627 = vpack.c.b16 %v2612, %v2611
        %v2628 = vpack.c.b16 %v2614, %v2613
        %v2629 = vpack.c.b16 %v2616, %v2615
        %v2630 = vpack.c.b16 %v2618, %v2617
        %v2631 = vpack.c.b16 %v2620, %v2619
        %v2632 = vpack.c.b16 %v2622, %v2621
        %v2633 = vpack.c.b16 %v2624, %v2623
        %v2634 = vpack.c.b16 %v2626, %v2625
        %2643 = vmatpush.bf16.msra.mxu0 %v2634
        %2644 = vmatpush.bf16.msra.mxu0 %v2633
        %2645 = vmatpush.bf16.msra.mxu0 %v2632
        %2646 = vmatpush.bf16.msra.mxu0 %v2631
        %2647 = vmatpush.bf16.msra.mxu0 %v2630
        %2648 = vmatpush.bf16.msra.mxu0 %v2629
        %2649 = vmatpush.bf16.msra.mxu0 %v2628
        %2650 = vmatpush.bf16.msra.mxu0 %v2627
        %2651 = vmatmul.bf16.gmra.mxu0 %v1129
        %v2652 = vpop.f32.mrf.mxu0
        %v2653 = vadd.f32 0.0, %v2652
        %v2654 = vpop.f32.mrf.mxu0
        %v2655 = vadd.f32 0.0, %v2654
        %2656 = vmatmul.bf16.gmra.mxu0 %v1130
        %v2657 = vpop.f32.mrf.mxu0
        %v2658 = vadd.f32 0.0, %v2657
        %v2659 = vpop.f32.mrf.mxu0
        %v2660 = vadd.f32 0.0, %v2659
        %2661 = vmatmul.bf16.gmra.mxu0 %v1131
        %v2662 = vpop.f32.mrf.mxu0
        %v2663 = vadd.f32 0.0, %v2662
        %v2664 = vpop.f32.mrf.mxu0
        %v2665 = vadd.f32 0.0, %v2664
        %2666 = vmatmul.bf16.gmra.mxu0 %v1132
        %v2667 = vpop.f32.mrf.mxu0
        %v2668 = vadd.f32 0.0, %v2667
        %v2669 = vpop.f32.mrf.mxu0
        %v2670 = vadd.f32 0.0, %v2669
        %2671 = vmatmul.bf16.gmra.mxu0 %v1133
        %v2672 = vpop.f32.mrf.mxu0
        %v2673 = vadd.f32 0.0, %v2672
        %v2674 = vpop.f32.mrf.mxu0
        %v2675 = vadd.f32 0.0, %v2674
        %2676 = vmatmul.bf16.gmra.mxu0 %v1134
        %v2677 = vpop.f32.mrf.mxu0
        %v2678 = vadd.f32 0.0, %v2677
        %v2679 = vpop.f32.mrf.mxu0
        %v2680 = vadd.f32 0.0, %v2679
        %2681 = vmatmul.bf16.gmra.mxu0 %v1135
        %v2682 = vpop.f32.mrf.mxu0
        %v2683 = vadd.f32 0.0, %v2682
        %v2684 = vpop.f32.mrf.mxu0
        %v2685 = vadd.f32 0.0, %v2684
        %2686 = vmatmul.bf16.gmra.mxu0 %v1136
        %v2687 = vpop.f32.mrf.mxu0
        %v2688 = vadd.f32 0.0, %v2687
        %v2689 = vpop.f32.mrf.mxu0
        %v2690 = vadd.f32 0.0, %v2689
        %2691 = vmatmul.bf16.gmra.mxu0 %v1137
        %v2692 = vpop.f32.mrf.mxu0
        %v2693 = vadd.f32 0.0, %v2692
        %v2694 = vpop.f32.mrf.mxu0
        %v2695 = vadd.f32 0.0, %v2694
        %2696 = vmatmul.bf16.gmra.mxu0 %v1138
        %v2697 = vpop.f32.mrf.mxu0
        %v2698 = vadd.f32 0.0, %v2697
        %v2699 = vpop.f32.mrf.mxu0
        %v2700 = vadd.f32 0.0, %v2699
        %2701 = vmatmul.bf16.gmra.mxu0 %v1139
        %v2702 = vpop.f32.mrf.mxu0
        %v2703 = vadd.f32 0.0, %v2702
        %v2704 = vpop.f32.mrf.mxu0
        %v2705 = vadd.f32 0.0, %v2704
        %2706 = vmatmul.bf16.gmra.mxu0 %v1140
        %v2707 = vpop.f32.mrf.mxu0
        %v2708 = vadd.f32 0.0, %v2707
        %v2709 = vpop.f32.mrf.mxu0
        %v2710 = vadd.f32 0.0, %v2709
        %2711 = vmatmul.bf16.gmra.mxu0 %v1141
        %v2712 = vpop.f32.mrf.mxu0
        %v2713 = vadd.f32 0.0, %v2712
        %v2714 = vpop.f32.mrf.mxu0
        %v2715 = vadd.f32 0.0, %v2714
        %2716 = vmatmul.bf16.gmra.mxu0 %v1142
        %v2717 = vpop.f32.mrf.mxu0
        %v2718 = vadd.f32 0.0, %v2717
        %v2719 = vpop.f32.mrf.mxu0
        %v2720 = vadd.f32 0.0, %v2719
        %2721 = vmatmul.bf16.gmra.mxu0 %v1143
        %v2722 = vpop.f32.mrf.mxu0
        %v2723 = vadd.f32 0.0, %v2722
        %v2724 = vpop.f32.mrf.mxu0
        %v2725 = vadd.f32 0.0, %v2724
        %2726 = vmatmul.bf16.gmra.mxu0 %v1144
        %v2727 = vpop.f32.mrf.mxu0
        %v2728 = vadd.f32 0.0, %v2727
        %v2729 = vpop.f32.mrf.mxu0
        %v2730 = vadd.f32 0.0, %v2729
        %2731 = vdwg.mxu0
        %v2732 = vadd.f32 %v2547, %v2653
        %v2733 = vadd.f32 %v2548, %v2655
        %v2734 = vadd.f32 %v2549, %v2658
        %v2735 = vadd.f32 %v2550, %v2660
        %v2736 = vadd.f32 %v2551, %v2663
        %v2737 = vadd.f32 %v2552, %v2665
        %v2738 = vadd.f32 %v2553, %v2668
        %v2739 = vadd.f32 %v2554, %v2670
        %v2740 = vadd.f32 %v2555, %v2673
        %v2741 = vadd.f32 %v2556, %v2675
        %v2742 = vadd.f32 %v2557, %v2678
        %v2743 = vadd.f32 %v2558, %v2680
        %v2744 = vadd.f32 %v2559, %v2683
        %v2745 = vadd.f32 %v2560, %v2685
        %v2746 = vadd.f32 %v2561, %v2688
        %v2747 = vadd.f32 %v2562, %v2690
        %v2748 = vadd.f32 %v2563, %v2693
        %v2749 = vadd.f32 %v2564, %v2695
        %v2750 = vadd.f32 %v2565, %v2698
        %v2751 = vadd.f32 %v2566, %v2700
        %v2752 = vadd.f32 %v2567, %v2703
        %v2753 = vadd.f32 %v2568, %v2705
        %v2754 = vadd.f32 %v2569, %v2708
        %v2755 = vadd.f32 %v2570, %v2710
        %v2756 = vadd.f32 %v2571, %v2713
        %v2757 = vadd.f32 %v2572, %v2715
        %v2758 = vadd.f32 %v2573, %v2718
        %v2759 = vadd.f32 %v2574, %v2720
        %v2760 = vadd.f32 %v2575, %v2723
        %v2761 = vadd.f32 %v2576, %v2725
        %v2762 = vadd.f32 %v2577, %v2728
        %v2763 = vadd.f32 %v2578, %v2730
        %v2764 = vperm.slane %v493, 0
        %v2765 = vadd.f32 %v2732, %v2764
        %v2766 = vadd.f32 %v2733, %v2764
        %v2767 = vadd.f32 %v2734, %v2764
        %v2768 = vadd.f32 %v2735, %v2764
        %v2769 = vadd.f32 %v2736, %v2764
        %v2770 = vadd.f32 %v2737, %v2764
        %v2771 = vadd.f32 %v2738, %v2764
        %v2772 = vadd.f32 %v2739, %v2764
        %v2773 = vadd.f32 %v2740, %v2764
        %v2774 = vadd.f32 %v2741, %v2764
        %v2775 = vadd.f32 %v2742, %v2764
        %v2776 = vadd.f32 %v2743, %v2764
        %v2777 = vadd.f32 %v2744, %v2764
        %v2778 = vadd.f32 %v2745, %v2764
        %v2779 = vadd.f32 %v2746, %v2764
        %v2780 = vadd.f32 %v2747, %v2764
        %v2781 = vadd.f32 %v2748, %v2764
        %v2782 = vadd.f32 %v2749, %v2764
        %v2783 = vadd.f32 %v2750, %v2764
        %v2784 = vadd.f32 %v2751, %v2764
        %v2785 = vadd.f32 %v2752, %v2764
        %v2786 = vadd.f32 %v2753, %v2764
        %v2787 = vadd.f32 %v2754, %v2764
        %v2788 = vadd.f32 %v2755, %v2764
        %v2789 = vadd.f32 %v2756, %v2764
        %v2790 = vadd.f32 %v2757, %v2764
        %v2791 = vadd.f32 %v2758, %v2764
        %v2792 = vadd.f32 %v2759, %v2764
        %v2793 = vadd.f32 %v2760, %v2764
        %v2794 = vadd.f32 %v2761, %v2764
        %v2795 = vadd.f32 %v2762, %v2764
        %v2796 = vadd.f32 %v2763, %v2764
        %v2797 = vmax.f32 %v2765, 0.0
        %v2798 = vmax.f32 %v2766, 0.0
        %v2799 = vmax.f32 %v2767, 0.0
        %v2800 = vmax.f32 %v2768, 0.0
        %v2801 = vmax.f32 %v2769, 0.0
        %v2802 = vmax.f32 %v2770, 0.0
        %v2803 = vmax.f32 %v2771, 0.0
        %v2804 = vmax.f32 %v2772, 0.0
        %v2805 = vmax.f32 %v2773, 0.0
        %v2806 = vmax.f32 %v2774, 0.0
        %v2807 = vmax.f32 %v2775, 0.0
        %v2808 = vmax.f32 %v2776, 0.0
        %v2809 = vmax.f32 %v2777, 0.0
        %v2810 = vmax.f32 %v2778, 0.0
        %v2811 = vmax.f32 %v2779, 0.0
        %v2812 = vmax.f32 %v2780, 0.0
        %v2813 = vmax.f32 %v2781, 0.0
        %v2814 = vmax.f32 %v2782, 0.0
        %v2815 = vmax.f32 %v2783, 0.0
        %v2816 = vmax.f32 %v2784, 0.0
        %v2817 = vmax.f32 %v2785, 0.0
        %v2818 = vmax.f32 %v2786, 0.0
        %v2819 = vmax.f32 %v2787, 0.0
        %v2820 = vmax.f32 %v2788, 0.0
        %v2821 = vmax.f32 %v2789, 0.0
        %v2822 = vmax.f32 %v2790, 0.0
        %v2823 = vmax.f32 %v2791, 0.0
        %v2824 = vmax.f32 %v2792, 0.0
        %v2825 = vmax.f32 %v2793, 0.0
        %v2826 = vmax.f32 %v2794, 0.0
        %v2827 = vmax.f32 %v2795, 0.0
        %v2828 = vmax.f32 %v2796, 0.0
        %v2829 = vpack.c.bf16 %v2798, %v2797
        %v2830 = vpack.c.bf16 %v2800, %v2799
        %v2831 = vpack.c.bf16 %v2802, %v2801
        %v2832 = vpack.c.bf16 %v2804, %v2803
        %v2833 = vpack.c.bf16 %v2806, %v2805
        %v2834 = vpack.c.bf16 %v2808, %v2807
        %v2835 = vpack.c.bf16 %v2810, %v2809
        %v2836 = vpack.c.bf16 %v2812, %v2811
        %v2837 = vpack.c.bf16 %v2814, %v2813
        %v2838 = vpack.c.bf16 %v2816, %v2815
        %v2839 = vpack.c.bf16 %v2818, %v2817
        %v2840 = vpack.c.bf16 %v2820, %v2819
        %v2841 = vpack.c.bf16 %v2822, %v2821
        %v2842 = vpack.c.bf16 %v2824, %v2823
        %v2843 = vpack.c.bf16 %v2826, %v2825
        %v2844 = vpack.c.bf16 %v2828, %v2827
        %v2845 = vld [vmem:[#allocation11] sm:$0xf]
        %v2846 = vld [vmem:[#allocation11 + $0x4] sm:$0xf]
        %v2847 = vld [vmem:[#allocation11 + $0x8] sm:$0xf]
        %v2848 = vld [vmem:[#allocation11 + $0xc] sm:$0xf]
        %v2849 = vld [vmem:[#allocation11 + $0x10] sm:$0xf]
        %v2850 = vld [vmem:[#allocation11 + $0x14] sm:$0xf]
        %v2851 = vld [vmem:[#allocation11 + $0x18] sm:$0xf]
        %v2852 = vld [vmem:[#allocation11 + $0x1c] sm:$0xf]
        %v2853 = vld [vmem:[#allocation11 + $0x20] sm:$0xf]
        %v2854 = vld [vmem:[#allocation11 + $0x24] sm:$0xf]
        %v2855 = vld [vmem:[#allocation11 + $0x28] sm:$0xf]
        %v2856 = vld [vmem:[#allocation11 + $0x2c] sm:$0xf]
        %v2857 = vld [vmem:[#allocation11 + $0x30] sm:$0xf]
        %v2858 = vld [vmem:[#allocation11 + $0x34] sm:$0xf]
        %v2859 = vld [vmem:[#allocation11 + $0x38] sm:$0xf]
        %v2860 = vld [vmem:[#allocation11 + $0x3c] sm:$0xf]
        %v2861 = vperm.slane %v494, 0
        %v2878 = vunpack.c.l.b16 %v2845
        %v2879 = vunpack.c.l.b16 %v2846
        %v2880 = vunpack.c.l.b16 %v2847
        %v2881 = vunpack.c.l.b16 %v2848
        %v2882 = vunpack.c.l.b16 %v2849
        %v2883 = vunpack.c.l.b16 %v2850
        %v2884 = vunpack.c.l.b16 %v2851
        %v2885 = vunpack.c.l.b16 %v2852
        %v2886 = vunpack.c.l.b16 %v2853
        %v2887 = vunpack.c.l.b16 %v2854
        %v2888 = vunpack.c.l.b16 %v2855
        %v2889 = vunpack.c.l.b16 %v2856
        %v2890 = vunpack.c.l.b16 %v2857
        %v2891 = vunpack.c.l.b16 %v2858
        %v2892 = vunpack.c.l.b16 %v2859
        %v2893 = vunpack.c.l.b16 %v2860
        %v2894 = vpack.c.b16 %v2879, %v2878
        %v2895 = vpack.c.b16 %v2881, %v2880
        %v2896 = vpack.c.b16 %v2883, %v2882
        %v2897 = vpack.c.b16 %v2885, %v2884
        %v2898 = vpack.c.b16 %v2887, %v2886
        %v2899 = vpack.c.b16 %v2889, %v2888
        %v2900 = vpack.c.b16 %v2891, %v2890
        %v2901 = vpack.c.b16 %v2893, %v2892
        %2910 = vmatpush.bf16.msra.mxu0 %v2901
        %2911 = vmatpush.bf16.msra.mxu0 %v2900
        %2912 = vmatpush.bf16.msra.mxu0 %v2899
        %2913 = vmatpush.bf16.msra.mxu0 %v2898
        %2914 = vmatpush.bf16.msra.mxu0 %v2897
        %2915 = vmatpush.bf16.msra.mxu0 %v2896
        %2916 = vmatpush.bf16.msra.mxu0 %v2895
        %2917 = vmatpush.bf16.msra.mxu0 %v2894
        %2918 = vmatmul.bf16.gmra.mxu0 %v2829
        %v2919 = vpop.f32.mrf.mxu0
        %v2920 = vadd.f32 %v2861, %v2919
        %v2921 = vpop.f32.mrf.mxu0
        %v2922 = vadd.f32 %v2861, %v2921
        %2923 = vmatmul.bf16.gmra.mxu0 %v2830
        %v2924 = vpop.f32.mrf.mxu0
        %v2925 = vadd.f32 %v2861, %v2924
        %v2926 = vpop.f32.mrf.mxu0
        %v2927 = vadd.f32 %v2861, %v2926
        %2928 = vmatmul.bf16.gmra.mxu0 %v2831
        %v2929 = vpop.f32.mrf.mxu0
        %v2930 = vadd.f32 %v2861, %v2929
        %v2931 = vpop.f32.mrf.mxu0
        %v2932 = vadd.f32 %v2861, %v2931
        %2933 = vmatmul.bf16.gmra.mxu0 %v2832
        %v2934 = vpop.f32.mrf.mxu0
        %v2935 = vadd.f32 %v2861, %v2934
        %v2936 = vpop.f32.mrf.mxu0
        %v2937 = vadd.f32 %v2861, %v2936
        %2938 = vmatmul.bf16.gmra.mxu0 %v2833
        %v2939 = vpop.f32.mrf.mxu0
        %v2940 = vadd.f32 %v2861, %v2939
        %v2941 = vpop.f32.mrf.mxu0
        %v2942 = vadd.f32 %v2861, %v2941
        %2943 = vmatmul.bf16.gmra.mxu0 %v2834
        %v2944 = vpop.f32.mrf.mxu0
        %v2945 = vadd.f32 %v2861, %v2944
        %v2946 = vpop.f32.mrf.mxu0
        %v2947 = vadd.f32 %v2861, %v2946
        %2948 = vmatmul.bf16.gmra.mxu0 %v2835
        %v2949 = vpop.f32.mrf.mxu0
        %v2950 = vadd.f32 %v2861, %v2949
        %v2951 = vpop.f32.mrf.mxu0
        %v2952 = vadd.f32 %v2861, %v2951
        %2953 = vmatmul.bf16.gmra.mxu0 %v2836
        %v2954 = vpop.f32.mrf.mxu0
        %v2955 = vadd.f32 %v2861, %v2954
        %v2956 = vpop.f32.mrf.mxu0
        %v2957 = vadd.f32 %v2861, %v2956
        %2958 = vmatmul.bf16.gmra.mxu0 %v2837
        %v2959 = vpop.f32.mrf.mxu0
        %v2960 = vadd.f32 %v2861, %v2959
        %v2961 = vpop.f32.mrf.mxu0
        %v2962 = vadd.f32 %v2861, %v2961
        %2963 = vmatmul.bf16.gmra.mxu0 %v2838
        %v2964 = vpop.f32.mrf.mxu0
        %v2965 = vadd.f32 %v2861, %v2964
        %v2966 = vpop.f32.mrf.mxu0
        %v2967 = vadd.f32 %v2861, %v2966
        %2968 = vmatmul.bf16.gmra.mxu0 %v2839
        %v2969 = vpop.f32.mrf.mxu0
        %v2970 = vadd.f32 %v2861, %v2969
        %v2971 = vpop.f32.mrf.mxu0
        %v2972 = vadd.f32 %v2861, %v2971
        %2973 = vmatmul.bf16.gmra.mxu0 %v2840
        %v2974 = vpop.f32.mrf.mxu0
        %v2975 = vadd.f32 %v2861, %v2974
        %v2976 = vpop.f32.mrf.mxu0
        %v2977 = vadd.f32 %v2861, %v2976
        %2978 = vmatmul.bf16.gmra.mxu0 %v2841
        %v2979 = vpop.f32.mrf.mxu0
        %v2980 = vadd.f32 %v2861, %v2979
        %v2981 = vpop.f32.mrf.mxu0
        %v2982 = vadd.f32 %v2861, %v2981
        %2983 = vmatmul.bf16.gmra.mxu0 %v2842
        %v2984 = vpop.f32.mrf.mxu0
        %v2985 = vadd.f32 %v2861, %v2984
        %v2986 = vpop.f32.mrf.mxu0
        %v2987 = vadd.f32 %v2861, %v2986
        %2988 = vmatmul.bf16.gmra.mxu0 %v2843
        %v2989 = vpop.f32.mrf.mxu0
        %v2990 = vadd.f32 %v2861, %v2989
        %v2991 = vpop.f32.mrf.mxu0
        %v2992 = vadd.f32 %v2861, %v2991
        %2993 = vmatmul.bf16.gmra.mxu0 %v2844
        %v2994 = vpop.f32.mrf.mxu0
        %v2995 = vadd.f32 %v2861, %v2994
        %v2996 = vpop.f32.mrf.mxu0
        %v2997 = vadd.f32 %v2861, %v2996
        %2998 = vdwg.mxu0
        %v2999 = vadd.f32 %v2920, %v511
        %v3000 = vadd.f32 %v2922, %v512
        %v3001 = vadd.f32 %v2925, %v513
        %v3002 = vadd.f32 %v2927, %v514
        %v3003 = vadd.f32 %v2930, %v515
        %v3004 = vadd.f32 %v2932, %v516
        %v3005 = vadd.f32 %v2935, %v517
        %v3006 = vadd.f32 %v2937, %v518
        %v3007 = vadd.f32 %v2940, %v519
        %v3008 = vadd.f32 %v2942, %v520
        %v3009 = vadd.f32 %v2945, %v521
        %v3010 = vadd.f32 %v2947, %v522
        %v3011 = vadd.f32 %v2950, %v523
        %v3012 = vadd.f32 %v2952, %v524
        %v3013 = vadd.f32 %v2955, %v525
        %v3014 = vadd.f32 %v2957, %v526
        %v3015 = vadd.f32 %v2960, %v527
        %v3016 = vadd.f32 %v2962, %v528
        %v3017 = vadd.f32 %v2965, %v529
        %v3018 = vadd.f32 %v2967, %v530
        %v3019 = vadd.f32 %v2970, %v531
        %v3020 = vadd.f32 %v2972, %v532
        %v3021 = vadd.f32 %v2975, %v533
        %v3022 = vadd.f32 %v2977, %v534
        %v3023 = vadd.f32 %v2980, %v535
        %v3024 = vadd.f32 %v2982, %v536
        %v3025 = vadd.f32 %v2985, %v537
        %v3026 = vadd.f32 %v2987, %v538
        %v3027 = vadd.f32 %v2990, %v539
        %v3028 = vadd.f32 %v2992, %v540
        %v3029 = vadd.f32 %v2995, %v541
        %v3030 = vadd.f32 %v2997, %v542
        %v3031 = vmax.f32 %v2999, 0.0
        %v3032 = vmax.f32 %v3000, 0.0
        %v3033 = vmax.f32 %v3001, 0.0
        %v3034 = vmax.f32 %v3002, 0.0
        %v3035 = vmax.f32 %v3003, 0.0
        %v3036 = vmax.f32 %v3004, 0.0
        %v3037 = vmax.f32 %v3005, 0.0
        %v3038 = vmax.f32 %v3006, 0.0
        %v3039 = vmax.f32 %v3007, 0.0
        %v3040 = vmax.f32 %v3008, 0.0
        %v3041 = vmax.f32 %v3009, 0.0
        %v3042 = vmax.f32 %v3010, 0.0
        %v3043 = vmax.f32 %v3011, 0.0
        %v3044 = vmax.f32 %v3012, 0.0
        %v3045 = vmax.f32 %v3013, 0.0
        %v3046 = vmax.f32 %v3014, 0.0
        %v3047 = vmax.f32 %v3015, 0.0
        %v3048 = vmax.f32 %v3016, 0.0
        %v3049 = vmax.f32 %v3017, 0.0
        %v3050 = vmax.f32 %v3018, 0.0
        %v3051 = vmax.f32 %v3019, 0.0
        %v3052 = vmax.f32 %v3020, 0.0
        %v3053 = vmax.f32 %v3021, 0.0
        %v3054 = vmax.f32 %v3022, 0.0
        %v3055 = vmax.f32 %v3023, 0.0
        %v3056 = vmax.f32 %v3024, 0.0
        %v3057 = vmax.f32 %v3025, 0.0
        %v3058 = vmax.f32 %v3026, 0.0
        %v3059 = vmax.f32 %v3027, 0.0
        %v3060 = vmax.f32 %v3028, 0.0
        %v3061 = vmax.f32 %v3029, 0.0
        %v3062 = vmax.f32 %v3030, 0.0
        %3063 = vst [vmem:[%s480] sm:$0xff] %v3031
        %3064 = vst [vmem:[%s480 + $0x8] sm:$0xff] %v3032
        %3065 = vst [vmem:[%s480 + $0x10] sm:$0xff] %v3033
        %3066 = vst [vmem:[%s480 + $0x18] sm:$0xff] %v3034
        %3067 = vst [vmem:[%s480 + $0x20] sm:$0xff] %v3035
        %3068 = vst [vmem:[%s480 + $0x28] sm:$0xff] %v3036
        %3069 = vst [vmem:[%s480 + $0x30] sm:$0xff] %v3037
        %3070 = vst [vmem:[%s480 + $0x38] sm:$0xff] %v3038
        %3071 = vst [vmem:[%s480 + $0x40] sm:$0xff] %v3039
        %3072 = vst [vmem:[%s480 + $0x48] sm:$0xff] %v3040
        %3073 = vst [vmem:[%s480 + $0x50] sm:$0xff] %v3041
        %3074 = vst [vmem:[%s480 + $0x58] sm:$0xff] %v3042
        %3075 = vst [vmem:[%s480 + $0x60] sm:$0xff] %v3043
        %3076 = vst [vmem:[%s480 + $0x68] sm:$0xff] %v3044
        %3077 = vst [vmem:[%s480 + $0x70] sm:$0xff] %v3045
        %3078 = vst [vmem:[%s480 + $0x78] sm:$0xff] %v3046
        %3079 = vst [vmem:[%s480 + $0x80] sm:$0xff] %v3047
        %3080 = vst [vmem:[%s480 + $0x88] sm:$0xff] %v3048
        %3081 = vst [vmem:[%s480 + $0x90] sm:$0xff] %v3049
        %3082 = vst [vmem:[%s480 + $0x98] sm:$0xff] %v3050
        %3083 = vst [vmem:[%s480 + $0xa0] sm:$0xff] %v3051
        %3084 = vst [vmem:[%s480 + $0xa8] sm:$0xff] %v3052
        %3085 = vst [vmem:[%s480 + $0xb0] sm:$0xff] %v3053
        %3086 = vst [vmem:[%s480 + $0xb8] sm:$0xff] %v3054
        %3087 = vst [vmem:[%s480 + $0xc0] sm:$0xff] %v3055
        %3088 = vst [vmem:[%s480 + $0xc8] sm:$0xff] %v3056
        %3089 = vst [vmem:[%s480 + $0xd0] sm:$0xff] %v3057
        %3090 = vst [vmem:[%s480 + $0xd8] sm:$0xff] %v3058
        %3091 = vst [vmem:[%s480 + $0xe0] sm:$0xff] %v3059
        %3092 = vst [vmem:[%s480 + $0xe8] sm:$0xff] %v3060
        %3093 = vst [vmem:[%s480 + $0xf0] sm:$0xff] %v3061
        %3094 = vst [vmem:[%s480 + $0xf8] sm:$0xff] %v3062
        %s3095 = sand.u32 %s235, 1
        %s3096 = scalar_lea.sflag [#allocation4], %s3095
        %s3097 = sand.u32 %s235, 1
        %s3098 = smul.addr %s3097, 256
        %s3099 = scalar_lea.vmem [#allocation13], %s3098
        // Predicated region
        $region73: #{tpu_custom_call.1} parent=47 // pred_check
          %p3100 = pneg %p245
        $region74: #{tpu_custom_call.1} parent=47 // pred_check_branch
          %3102 = sbr.rel (%p3100) target = $region76
        $region75: #{tpu_custom_call.1} parent=47 // pred_region
          %s3103 = smul.u32 16, %s34
          %3105 = vsyncadd %s3096, 0
          %s3106 = smul.addr %s3103, 2
          %s3107 = smul.addr %s33, 32
          %s3108 = sadd.s32 %s3106, %s3107
          %s3109 = smul.addr %s3108, 8
          %s3110 = scalar_lea.hbm %s7, %s3109
          %s3111 = sshll.u32 %s3099, 4
          %s3112 = int_to_ptr.vmem [resolvable:$true] %s3111
          %s3113 = sshll.u32 %s3110, 4
          %s3114 = int_to_ptr.hbm [resolvable:$true] %s3113
          %3119 = dma.vmem_to_hbm [thread:$0]  %s3112, 4096, %s3114, %s3096, 128, 128, 8
        $region76: #{tpu_custom_call.1} parent=47 // pred_fallthru
          _
      $region48: #{tpu_custom_call.1} parent=5 // pred_fallthru
        _
      %p3120 = scmp.le.s32.totalorder 2, %s24
      // Predicated region
      $region77: #{tpu_custom_call.1} parent=5 // pred_check
        %p3121 = pneg %p3120
      $region78: #{tpu_custom_call.1} parent=5 // pred_check_branch
        %3123 = sbr.rel (%p3121) target = $region80
      $region79: #{tpu_custom_call.1} parent=5 // pred_region
        %s3124 = ssub.s32 %s24, 2
        // Predicated region
        $region81: #{tpu_custom_call.1} parent=79 // pred_check
          %p3125 = pneg %p251
        $region82: #{tpu_custom_call.1} parent=79 // pred_check_branch
          %3127 = sbr.rel (%p3125) target = $region84
        $region83: #{tpu_custom_call.1} parent=79 // pred_region
          %s3128 = sand.u32 %s236, 1
          %s3129 = scalar_lea.sflag [#allocation4], %s3128
          %s3130 = sand.u32 %s236, 1
          %s3131 = smul.addr %s3130, 256
          %s3132 = scalar_lea.vmem [#allocation13], %s3131
          %3134 = dma.done %s3129, 4096
        $region84: #{tpu_custom_call.1} parent=79 // pred_fallthru
          _
      $region80: #{tpu_custom_call.1} parent=5 // pred_fallthru
        _
    $region6: #{tpu_custom_call.1} parent=1 // loop_footer
      %s28 = sadd.s32 1, %s24
    $region7: #{tpu_custom_call.1} parent=1 // loop_footer_branch
      %23 = sbr.rel target = $region3
    $region8: #{tpu_custom_call.1} parent=1 // loop_exit
      _
    %3135 = vsyncpa [#allocation3], 1
    %s3136 = scalar_lea.sflag [#allocation3], 1
    %3137 = vsyncpa %s3136, 1
    %3138 = vsyncpa [#allocation6], 1
    %s3139 = scalar_lea.sflag [#allocation6], 1
    %3140 = vsyncpa %s3139, 1
    %3141 = vsyncpa [#allocation9], 1
    %3142 = vsyncpa [#allocation12], 1
    %3143 = vsyncpa [#allocation4], 1
    %s3144 = scalar_lea.sflag [#allocation4], 1
    %3145 = vsyncpa %s3144, 1

</llo_original>
